<compile_context>
chip_gen: v5e
topology: v5e:2x2
jax: 0.10.0
libtpu: 0.0.40
codegen_flags: <defaults>
</compile_context>

<pallas_src>
import jax
import jax.numpy as jnp
from jax.experimental import pallas as pl
from jax.experimental.pallas import tpu as pltpu


_MAX_ROW_TILE = 2048  # rows per grid step; bf16 double-buffered tiles stay << 32 MiB


def _row_tile(n_rows):
    """Row tile: multiple of 8, capped, and (for v7x megacore) grid >= 2 when possible."""
    if n_rows <= 8:
        return n_rows                      # block dims == full array dims
    half = (n_rows + 1) // 2               # split across the two TensorCores
    return min(_MAX_ROW_TILE, ((half + 7) // 8) * 8)


def _compiler_params():
    return pltpu.CompilerParams(
        dimension_semantics=("parallel",),     # independent row tiles / megacore
        vmem_limit_bytes=32 * 1024 * 1024,     # explicit budget (v7x has 64 MiB phys)
    )


# ---------------------------------------------------------------------------
# Fused conv + bias + ReLU + 2x2 maxpool kernel
# ---------------------------------------------------------------------------
def _conv_relu_pool_kernel(p_ref, w_ref, b_ref, o_ref):
    # p_ref: (4, TILE_G, K) bf16 -- 4 = the 2x2 pooling-window corners
    # w_ref: (K, OC) bf16, b_ref: (1, OC) f32, o_ref: (TILE_G, OC) bf16
    w = w_ref[...]
    d0 = jnp.dot(p_ref[0], w, preferred_element_type=jnp.float32)
    d1 = jnp.dot(p_ref[1], w, preferred_element_type=jnp.float32)
    d2 = jnp.dot(p_ref[2], w, preferred_element_type=jnp.float32)
    d3 = jnp.dot(p_ref[3], w, preferred_element_type=jnp.float32)
    # max/relu/+bias commute, so pool(relu(conv+b)) == relu(max(conv)+b).
    pooled = jnp.maximum(jnp.maximum(d0, d1), jnp.maximum(d2, d3))
    o_ref[...] = jnp.maximum(pooled + b_ref[...], 0.0).astype(o_ref.dtype)


def _pool_grouped_patches(x_nhwc, kh, kw):
    """im2col with rows grouped by 2x2 pooling window: returns (4, G, K)."""
    N, H, W, C = x_nhwc.shape
    OH, OW = H - kh + 1, W - kw + 1
    assert OH % 2 == 0 and OW % 2 == 0, "conv output must be 2x2-poolable"
    OHp, OWp = OH // 2, OW // 2
    K = kh * kw * C
    cols = [x_nhwc[:, i:i + OH, j:j + OW, :] for i in range(kh) for j in range(kw)]
    p = jnp.stack(cols, axis=3)                       # (N, OH, OW, kh*kw, C)
    p = p.reshape(N, OHp, 2, OWp, 2, K)               # split pooled rows/cols
    p = p.transpose(2, 4, 0, 1, 3, 5)                 # (2, 2, N, OHp, OWp, K)
    return p.reshape(4, N * OHp * OWp, K), OHp, OWp


def conv_relu_pool_pallas(x_nhwc, w2d, b2d, *, kh=5, kw=5):
    """'valid' 5x5 conv (stride 1) + ReLU + 2x2 maxpool; NHWC bf16 in / NHWC bf16 out."""
    N = x_nhwc.shape[0]
    K, OC = w2d.shape
    p4, OHp, OWp = _pool_grouped_patches(x_nhwc, kh, kw)
    G = p4.shape[1]                                   # number of pooling windows
    tile_g = _row_tile(G)
    out = pl.pallas_call(
        _conv_relu_pool_kernel,
        out_shape=jax.ShapeDtypeStruct((G, OC), jnp.bfloat16),
        grid=(pl.cdiv(G, tile_g),),
        in_specs=[
            pl.BlockSpec((4, tile_g, K), lambda g: (0, g, 0)),
            pl.BlockSpec((K, OC), lambda g: (0, 0)),
            pl.BlockSpec((1, OC), lambda g: (0, 0)),
        ],
        out_specs=pl.BlockSpec((tile_g, OC), lambda g: (g, 0)),
        compiler_params=_compiler_params(),
    )(p4, w2d, b2d)
    return out.reshape(N, OHp, OWp, OC)               # free row-major reshape (NHWC)


# ---------------------------------------------------------------------------
# Fused fc1+ReLU -> fc2+ReLU -> fc3 kernel (intermediates never leave VMEM,
# hidden dims padded to 128 lanes at weight-pack time)
# ---------------------------------------------------------------------------
def _fc_stack_kernel(x_ref, w1_ref, b1_ref, w2_ref, b2_ref, w3_ref, b3_ref, o_ref):
    h = jnp.dot(x_ref[...], w1_ref[...], preferred_element_type=jnp.float32) + b1_ref[...]
    h = jnp.maximum(h, 0.0).astype(jnp.bfloat16)
    h = jnp.dot(h, w2_ref[...], preferred_element_type=jnp.float32) + b2_ref[...]
    h = jnp.maximum(h, 0.0).astype(jnp.bfloat16)
    o = jnp.dot(h, w3_ref[...], preferred_element_type=jnp.float32) + b3_ref[...]
    o_ref[...] = o.astype(o_ref.dtype)


def fc_stack_pallas(x, w1, b1, w2, b2, w3, b3):
    N, K1 = x.shape
    H1, H2, NO = w1.shape[1], w2.shape[1], w3.shape[1]
    tile_b = _row_tile(N)
    return pl.pallas_call(
        _fc_stack_kernel,
        out_shape=jax.ShapeDtypeStruct((N, NO), jnp.float32),
        grid=(pl.cdiv(N, tile_b),),
        in_specs=[
            pl.BlockSpec((tile_b, K1), lambda i: (i, 0)),
            pl.BlockSpec((K1, H1), lambda i: (0, 0)),
            pl.BlockSpec((1, H1), lambda i: (0, 0)),
            pl.BlockSpec((H1, H2), lambda i: (0, 0)),
            pl.BlockSpec((1, H2), lambda i: (0, 0)),
            pl.BlockSpec((H2, NO), lambda i: (0, 0)),
            pl.BlockSpec((1, NO), lambda i: (0, 0)),
        ],
        out_specs=pl.BlockSpec((tile_b, NO), lambda i: (i, 0)),
        compiler_params=_compiler_params(),
    )(x, w1, b1, w2, b2, w3, b3)


# ---------------------------------------------------------------------------
# Parameter init (deterministic, PyTorch layouts + PyTorch-style uniform init)
# ---------------------------------------------------------------------------
def _uniform(key, shape, fan_in):
    bound = 1.0 / jnp.sqrt(float(fan_in))
    return jax.random.uniform(key, shape, jnp.float32, -bound, bound)


def init_params(key):
    ks = jax.random.split(key, 10)
    p = {}
    p["conv1_w"] = _uniform(ks[0], (6, 3, 5, 5), 3 * 5 * 5)     # (OC, C, KH, KW)
    p["conv1_b"] = _uniform(ks[1], (6,), 3 * 5 * 5)
    p["conv2_w"] = _uniform(ks[2], (16, 6, 5, 5), 6 * 5 * 5)
    p["conv2_b"] = _uniform(ks[3], (16,), 6 * 5 * 5)
    p["fc1_w"] = _uniform(ks[4], (120, 400), 400)               # PyTorch (out, in)
    p["fc1_b"] = _uniform(ks[5], (120,), 400)
    p["fc2_w"] = _uniform(ks[6], (84, 120), 120)
    p["fc2_b"] = _uniform(ks[7], (84,), 120)
    p["fc3_w"] = _uniform(ks[8], (10, 84), 84)
    p["fc3_b"] = _uniform(ks[9], (10,), 84)
    return p


def _pack_conv_w(w):
    # (OC, C, KH, KW) -> (KH*KW*C, OC) matching patch feature order (i, j, c).
    oc = w.shape[0]
    return w.transpose(2, 3, 1, 0).reshape(-1, oc)


def _pack_fc1_w(w):
    # PyTorch fc1 consumes an NCHW flatten (c, h, w); our activations are
    # flattened NHWC (h, w, c).  Permute the 400 input rows once to match.
    return w.reshape(120, 16, 5, 5).transpose(0, 2, 3, 1).reshape(120, 400).T


def _pad2d(w, rows, cols):
    r, c = w.shape
    return jnp.pad(w, ((0, rows - r), (0, cols - c)))


def _pad_bias(b, n):
    return jnp.pad(b, (0, n - b.shape[0])).reshape(1, n).astype(jnp.float32)


def prepare_params(params):
    """One-time packing: layouts, zero-padding to lane width, bf16 weight casts."""
    fp = {}
    fp["c1_w"] = _pack_conv_w(params["conv1_w"]).astype(jnp.bfloat16)   # (75, 6)
    fp["c1_b"] = params["conv1_b"].reshape(1, -1).astype(jnp.float32)
    fp["c2_w"] = _pack_conv_w(params["conv2_w"]).astype(jnp.bfloat16)   # (150, 16)
    fp["c2_b"] = params["conv2_b"].reshape(1, -1).astype(jnp.float32)
    # fc stack: pad hidden dims 120/84 -> 128 (zero padding is exact through ReLU).
    fp["fc1_w"] = _pad2d(_pack_fc1_w(params["fc1_w"]), 400, 128).astype(jnp.bfloat16)
    fp["fc1_b"] = _pad_bias(params["fc1_b"], 128)
    fp["fc2_w"] = _pad2d(params["fc2_w"].T, 128, 128).astype(jnp.bfloat16)
    fp["fc2_b"] = _pad_bias(params["fc2_b"], 128)
    fp["fc3_w"] = _pad2d(params["fc3_w"].T, 128, 10).astype(jnp.bfloat16)
    fp["fc3_b"] = params["fc3_b"].reshape(1, -1).astype(jnp.float32)
    return fp


# ---------------------------------------------------------------------------
# Forward pass (mirrors Net.forward; input is NCHW like PyTorch)
# ---------------------------------------------------------------------------
def net_forward(fp, x_nchw):
    # NCHW -> NHWC once, cast to bf16 once (f32 accumulation inside kernels).
    x = jnp.transpose(x_nchw, (0, 2, 3, 1)).astype(jnp.bfloat16)

    x = conv_relu_pool_pallas(x, fp["c1_w"], fp["c1_b"])          # (N, 14, 14, 6)
    x = conv_relu_pool_pallas(x, fp["c2_w"], fp["c2_b"])          # (N, 5, 5, 16)

    x = x.reshape(x.shape[0], 5 * 5 * 16)   # NHWC flatten; fc1 rows permuted to match
    return fc_stack_pallas(
        x,
        fp["fc1_w"], fp["fc1_b"],
        fp["fc2_w"], fp["fc2_b"],
        fp["fc3_w"], fp["fc3_b"],
    )                                                             # (N, 10) f32


if __name__ == "__main__":
    key = jax.random.PRNGKey(0)
    k_param, k_x = jax.random.split(key)
    params = init_params(k_param)
    packed = prepare_params(params)          # one-time pack/pad/bf16-cast
    # Spatial size must be 32 so that the 16*5*5 flatten is exact (LeNet/CIFAR).
    x = jax.random.normal(k_x, (2, 3, 32, 32), jnp.float32)

    out = jax.jit(net_forward)(packed, x)
    out = jax.block_until_ready(out)
    assert out.shape == (2, 10) and out.dtype == jnp.float32
    print("KERNEL_OK")
</pallas_src>

<mosaic_0001>
module attributes {stable_mosaic.version = 11 : i64} {
  func.func @_conv_relu_pool_kernel(%arg0: i32, %arg1: memref<4x200x75xbf16, #tpu.memory_space<vmem>>, %arg2: memref<75x6xbf16, #tpu.memory_space<vmem>>, %arg3: memref<1x6xf32, #tpu.memory_space<vmem>>, %arg4: memref<200x6xbf16, #tpu.memory_space<vmem>>) attributes {dimension_semantics = [#tpu.dimension_semantics<parallel>], iteration_bounds = array<i64: 2>, scalar_prefetch = 0 : i64, scratch_operands = 0 : i64, tpu.core_type = #tpu.core_type<tc>, window_params = [{transform_indices = @transform_0, window_bounds = array<i64: 4, 200, 75>}, {pipeline_mode = #tpu.pipeline_mode<synchronous>, transform_indices = @transform_1, window_bounds = array<i64: 75, 6>}, {pipeline_mode = #tpu.pipeline_mode<synchronous>, transform_indices = @transform_2, window_bounds = array<i64: 1, 6>}, {transform_indices = @transform_3, window_bounds = array<i64: 200, 6>}]} {
    %c0 = arith.constant 0 : index
    %c0_0 = arith.constant 0 : index
    %0 = vector.load %arg2[%c0, %c0_0] : memref<75x6xbf16, #tpu.memory_space<vmem>>, vector<75x6xbf16>
    %c0_1 = arith.constant 0 : index
    %c0_2 = arith.constant 0 : index
    %c0_3 = arith.constant 0 : index
    %1 = vector.load %arg1[%c0_1, %c0_2, %c0_3] : memref<4x200x75xbf16, #tpu.memory_space<vmem>>, vector<1x200x75xbf16>
    %2 = vector.shape_cast %1 : vector<1x200x75xbf16> to vector<200x75xbf16>
    %cst = arith.constant dense<0.000000e+00> : vector<200x6xf32>
    %3 = tpu.matmul %2, %0, %cst {dimension_numbers = #tpu.dot_dimension_numbers<[1], [0], [0], [1], [0, 0, 1, 1], [], []>} : vector<200x75xbf16>, vector<75x6xbf16>, vector<200x6xf32> -> vector<200x6xf32>
    %c1 = arith.constant 1 : index
    %c0_4 = arith.constant 0 : index
    %c0_5 = arith.constant 0 : index
    %4 = vector.load %arg1[%c1, %c0_4, %c0_5] : memref<4x200x75xbf16, #tpu.memory_space<vmem>>, vector<1x200x75xbf16>
    %5 = vector.shape_cast %4 : vector<1x200x75xbf16> to vector<200x75xbf16>
    %cst_6 = arith.constant dense<0.000000e+00> : vector<200x6xf32>
    %6 = tpu.matmul %5, %0, %cst_6 {dimension_numbers = #tpu.dot_dimension_numbers<[1], [0], [0], [1], [0, 0, 1, 1], [], []>} : vector<200x75xbf16>, vector<75x6xbf16>, vector<200x6xf32> -> vector<200x6xf32>
    %c2 = arith.constant 2 : index
    %c0_7 = arith.constant 0 : index
    %c0_8 = arith.constant 0 : index
    %7 = vector.load %arg1[%c2, %c0_7, %c0_8] : memref<4x200x75xbf16, #tpu.memory_space<vmem>>, vector<1x200x75xbf16>
    %8 = vector.shape_cast %7 : vector<1x200x75xbf16> to vector<200x75xbf16>
    %cst_9 = arith.constant dense<0.000000e+00> : vector<200x6xf32>
    %9 = tpu.matmul %8, %0, %cst_9 {dimension_numbers = #tpu.dot_dimension_numbers<[1], [0], [0], [1], [0, 0, 1, 1], [], []>} : vector<200x75xbf16>, vector<75x6xbf16>, vector<200x6xf32> -> vector<200x6xf32>
    %c3 = arith.constant 3 : index
    %c0_10 = arith.constant 0 : index
    %c0_11 = arith.constant 0 : index
    %10 = vector.load %arg1[%c3, %c0_10, %c0_11] : memref<4x200x75xbf16, #tpu.memory_space<vmem>>, vector<1x200x75xbf16>
    %11 = vector.shape_cast %10 : vector<1x200x75xbf16> to vector<200x75xbf16>
    %cst_12 = arith.constant dense<0.000000e+00> : vector<200x6xf32>
    %12 = tpu.matmul %11, %0, %cst_12 {dimension_numbers = #tpu.dot_dimension_numbers<[1], [0], [0], [1], [0, 0, 1, 1], [], []>} : vector<200x75xbf16>, vector<75x6xbf16>, vector<200x6xf32> -> vector<200x6xf32>
    %13 = arith.maximumf %3, %6 : vector<200x6xf32>
    %14 = arith.maximumf %9, %12 : vector<200x6xf32>
    %15 = arith.maximumf %13, %14 : vector<200x6xf32>
    %c0_13 = arith.constant 0 : index
    %c0_14 = arith.constant 0 : index
    %16 = vector.load %arg3[%c0_13, %c0_14] : memref<1x6xf32, #tpu.memory_space<vmem>>, vector<1x6xf32>
    %17 = vector.broadcast %16 : vector<1x6xf32> to vector<200x6xf32>
    %18 = arith.addf %15, %17 : vector<200x6xf32>
    %cst_15 = arith.constant 0.000000e+00 : f32
    %19 = vector.broadcast %cst_15 : f32 to vector<200x6xf32>
    %20 = arith.maximumf %18, %19 : vector<200x6xf32>
    %21 = arith.truncf %20 : vector<200x6xf32> to vector<200x6xbf16>
    %c0_16 = arith.constant 0 : index
    %c0_17 = arith.constant 0 : index
    %22 = vector.load %arg4[%c0_16, %c0_17] : memref<200x6xbf16, #tpu.memory_space<vmem>>, vector<200x6xbf16>
    tpu.vector_store %arg4[%c0_16, %c0_17], %21 {strides = array<i32>} : memref<200x6xbf16, #tpu.memory_space<vmem>>, vector<200x6xbf16>,
    return
  }
  func.func @transform_0(%arg0: i32) -> (i32, i32, i32) {
    %c0_i32 = arith.constant 0 : i32
    %c0_i32_0 = arith.constant 0 : i32
    %c0_i32_1 = arith.constant 0 : i32
    return %c0_i32, %arg0, %c0_i32_0 : i32, i32, i32
  }
  func.func @transform_1(%arg0: i32) -> (i32, i32) {
    %c0_i32 = arith.constant 0 : i32
    %c0_i32_0 = arith.constant 0 : i32
    %c0_i32_1 = arith.constant 0 : i32
    return %c0_i32, %c0_i32_0 : i32, i32
  }
  func.func @transform_2(%arg0: i32) -> (i32, i32) {
    %c0_i32 = arith.constant 0 : i32
    %c0_i32_0 = arith.constant 0 : i32
    %c0_i32_1 = arith.constant 0 : i32
    return %c0_i32, %c0_i32_0 : i32, i32
  }
  func.func @transform_3(%arg0: i32) -> (i32, i32) {
    %c0_i32 = arith.constant 0 : i32
    %c0_i32_0 = arith.constant 0 : i32
    return %arg0, %c0_i32 : i32, i32
  }
}

module attributes {stable_mosaic.version = 11 : i64} {
  func.func @_conv_relu_pool_kernel(%arg0: i32, %arg1: memref<4x32x150xbf16, #tpu.memory_space<vmem>>, %arg2: memref<150x16xbf16, #tpu.memory_space<vmem>>, %arg3: memref<1x16xf32, #tpu.memory_space<vmem>>, %arg4: memref<32x16xbf16, #tpu.memory_space<vmem>>) attributes {dimension_semantics = [#tpu.dimension_semantics<parallel>], iteration_bounds = array<i64: 2>, scalar_prefetch = 0 : i64, scratch_operands = 0 : i64, tpu.core_type = #tpu.core_type<tc>, window_params = [{transform_indices = @transform_0, window_bounds = array<i64: 4, 32, 150>}, {pipeline_mode = #tpu.pipeline_mode<synchronous>, transform_indices = @transform_1, window_bounds = array<i64: 150, 16>}, {pipeline_mode = #tpu.pipeline_mode<synchronous>, transform_indices = @transform_2, window_bounds = array<i64: 1, 16>}, {transform_indices = @transform_3, window_bounds = array<i64: 32, 16>}]} {
    %c0 = arith.constant 0 : index
    %c0_0 = arith.constant 0 : index
    %0 = vector.load %arg2[%c0, %c0_0] : memref<150x16xbf16, #tpu.memory_space<vmem>>, vector<150x16xbf16>
    %c0_1 = arith.constant 0 : index
    %c0_2 = arith.constant 0 : index
    %c0_3 = arith.constant 0 : index
    %1 = vector.load %arg1[%c0_1, %c0_2, %c0_3] : memref<4x32x150xbf16, #tpu.memory_space<vmem>>, vector<1x32x150xbf16>
    %2 = vector.shape_cast %1 : vector<1x32x150xbf16> to vector<32x150xbf16>
    %cst = arith.constant dense<0.000000e+00> : vector<32x16xf32>
    %3 = tpu.matmul %2, %0, %cst {dimension_numbers = #tpu.dot_dimension_numbers<[1], [0], [0], [1], [0, 0, 1, 1], [], []>} : vector<32x150xbf16>, vector<150x16xbf16>, vector<32x16xf32> -> vector<32x16xf32>
    %c1 = arith.constant 1 : index
    %c0_4 = arith.constant 0 : index
    %c0_5 = arith.constant 0 : index
    %4 = vector.load %arg1[%c1, %c0_4, %c0_5] : memref<4x32x150xbf16, #tpu.memory_space<vmem>>, vector<1x32x150xbf16>
    %5 = vector.shape_cast %4 : vector<1x32x150xbf16> to vector<32x150xbf16>
    %cst_6 = arith.constant dense<0.000000e+00> : vector<32x16xf32>
    %6 = tpu.matmul %5, %0, %cst_6 {dimension_numbers = #tpu.dot_dimension_numbers<[1], [0], [0], [1], [0, 0, 1, 1], [], []>} : vector<32x150xbf16>, vector<150x16xbf16>, vector<32x16xf32> -> vector<32x16xf32>
    %c2 = arith.constant 2 : index
    %c0_7 = arith.constant 0 : index
    %c0_8 = arith.constant 0 : index
    %7 = vector.load %arg1[%c2, %c0_7, %c0_8] : memref<4x32x150xbf16, #tpu.memory_space<vmem>>, vector<1x32x150xbf16>
    %8 = vector.shape_cast %7 : vector<1x32x150xbf16> to vector<32x150xbf16>
    %cst_9 = arith.constant dense<0.000000e+00> : vector<32x16xf32>
    %9 = tpu.matmul %8, %0, %cst_9 {dimension_numbers = #tpu.dot_dimension_numbers<[1], [0], [0], [1], [0, 0, 1, 1], [], []>} : vector<32x150xbf16>, vector<150x16xbf16>, vector<32x16xf32> -> vector<32x16xf32>
    %c3 = arith.constant 3 : index
    %c0_10 = arith.constant 0 : index
    %c0_11 = arith.constant 0 : index
    %10 = vector.load %arg1[%c3, %c0_10, %c0_11] : memref<4x32x150xbf16, #tpu.memory_space<vmem>>, vector<1x32x150xbf16>
    %11 = vector.shape_cast %10 : vector<1x32x150xbf16> to vector<32x150xbf16>
    %cst_12 = arith.constant dense<0.000000e+00> : vector<32x16xf32>
    %12 = tpu.matmul %11, %0, %cst_12 {dimension_numbers = #tpu.dot_dimension_numbers<[1], [0], [0], [1], [0, 0, 1, 1], [], []>} : vector<32x150xbf16>, vector<150x16xbf16>, vector<32x16xf32> -> vector<32x16xf32>
    %13 = arith.maximumf %3, %6 : vector<32x16xf32>
    %14 = arith.maximumf %9, %12 : vector<32x16xf32>
    %15 = arith.maximumf %13, %14 : vector<32x16xf32>
    %c0_13 = arith.constant 0 : index
    %c0_14 = arith.constant 0 : index
    %16 = vector.load %arg3[%c0_13, %c0_14] : memref<1x16xf32, #tpu.memory_space<vmem>>, vector<1x16xf32>
    %17 = vector.broadcast %16 : vector<1x16xf32> to vector<32x16xf32>
    %18 = arith.addf %15, %17 : vector<32x16xf32>
    %cst_15 = arith.constant 0.000000e+00 : f32
    %19 = vector.broadcast %cst_15 : f32 to vector<32x16xf32>
    %20 = arith.maximumf %18, %19 : vector<32x16xf32>
    %21 = arith.truncf %20 : vector<32x16xf32> to vector<32x16xbf16>
    %c0_16 = arith.constant 0 : index
    %c0_17 = arith.constant 0 : index
    %22 = vector.load %arg4[%c0_16, %c0_17] : memref<32x16xbf16, #tpu.memory_space<vmem>>, vector<32x16xbf16>
    tpu.vector_store %arg4[%c0_16, %c0_17], %21 {strides = array<i32>} : memref<32x16xbf16, #tpu.memory_space<vmem>>, vector<32x16xbf16>,
    return
  }
  func.func @transform_0(%arg0: i32) -> (i32, i32, i32) {
    %c0_i32 = arith.constant 0 : i32
    %c0_i32_0 = arith.constant 0 : i32
    %c0_i32_1 = arith.constant 0 : i32
    return %c0_i32, %arg0, %c0_i32_0 : i32, i32, i32
  }
  func.func @transform_1(%arg0: i32) -> (i32, i32) {
    %c0_i32 = arith.constant 0 : i32
    %c0_i32_0 = arith.constant 0 : i32
    %c0_i32_1 = arith.constant 0 : i32
    return %c0_i32, %c0_i32_0 : i32, i32
  }
  func.func @transform_2(%arg0: i32) -> (i32, i32) {
    %c0_i32 = arith.constant 0 : i32
    %c0_i32_0 = arith.constant 0 : i32
    %c0_i32_1 = arith.constant 0 : i32
    return %c0_i32, %c0_i32_0 : i32, i32
  }
  func.func @transform_3(%arg0: i32) -> (i32, i32) {
    %c0_i32 = arith.constant 0 : i32
    %c0_i32_0 = arith.constant 0 : i32
    return %arg0, %c0_i32 : i32, i32
  }
}

module attributes {stable_mosaic.version = 11 : i64} {
  func.func @_fc_stack_kernel(%arg0: i32, %arg1: memref<2x400xbf16, #tpu.memory_space<vmem>>, %arg2: memref<400x128xbf16, #tpu.memory_space<vmem>>, %arg3: memref<1x128xf32, #tpu.memory_space<vmem>>, %arg4: memref<128x128xbf16, #tpu.memory_space<vmem>>, %arg5: memref<1x128xf32, #tpu.memory_space<vmem>>, %arg6: memref<128x10xbf16, #tpu.memory_space<vmem>>, %arg7: memref<1x10xf32, #tpu.memory_space<vmem>>, %arg8: memref<2x10xf32, #tpu.memory_space<vmem>>) attributes {dimension_semantics = [#tpu.dimension_semantics<parallel>], iteration_bounds = array<i64: 1>, scalar_prefetch = 0 : i64, scratch_operands = 0 : i64, tpu.core_type = #tpu.core_type<tc>, window_params = [{transform_indices = @transform_0, window_bounds = array<i64: 2, 400>}, {pipeline_mode = #tpu.pipeline_mode<synchronous>, transform_indices = @transform_1, window_bounds = array<i64: 400, 128>}, {pipeline_mode = #tpu.pipeline_mode<synchronous>, transform_indices = @transform_2, window_bounds = array<i64: 1, 128>}, {pipeline_mode = #tpu.pipeline_mode<synchronous>, transform_indices = @transform_3, window_bounds = array<i64: 128, 128>}, {pipeline_mode = #tpu.pipeline_mode<synchronous>, transform_indices = @transform_4, window_bounds = array<i64: 1, 128>}, {pipeline_mode = #tpu.pipeline_mode<synchronous>, transform_indices = @transform_5, window_bounds = array<i64: 128, 10>}, {pipeline_mode = #tpu.pipeline_mode<synchronous>, transform_indices = @transform_6, window_bounds = array<i64: 1, 10>}, {transform_indices = @transform_7, window_bounds = array<i64: 2, 10>}]} {
    %c0 = arith.constant 0 : index
    %c0_0 = arith.constant 0 : index
    %0 = vector.load %arg1[%c0, %c0_0] : memref<2x400xbf16, #tpu.memory_space<vmem>>, vector<2x400xbf16>
    %c0_1 = arith.constant 0 : index
    %c0_2 = arith.constant 0 : index
    %1 = vector.load %arg2[%c0_1, %c0_2] : memref<400x128xbf16, #tpu.memory_space<vmem>>, vector<400x128xbf16>
    %cst = arith.constant dense<0.000000e+00> : vector<2x128xf32>
    %2 = tpu.matmul %0, %1, %cst {dimension_numbers = #tpu.dot_dimension_numbers<[1], [0], [0], [1], [0, 0, 1, 1], [], []>} : vector<2x400xbf16>, vector<400x128xbf16>, vector<2x128xf32> -> vector<2x128xf32>
    %c0_3 = arith.constant 0 : index
    %c0_4 = arith.constant 0 : index
    %3 = vector.load %arg3[%c0_3, %c0_4] : memref<1x128xf32, #tpu.memory_space<vmem>>, vector<1x128xf32>
    %4 = vector.broadcast %3 : vector<1x128xf32> to vector<2x128xf32>
    %5 = arith.addf %2, %4 : vector<2x128xf32>
    %cst_5 = arith.constant 0.000000e+00 : f32
    %6 = vector.broadcast %cst_5 : f32 to vector<2x128xf32>
    %7 = arith.maximumf %5, %6 : vector<2x128xf32>
    %8 = arith.truncf %7 : vector<2x128xf32> to vector<2x128xbf16>
    %c0_6 = arith.constant 0 : index
    %c0_7 = arith.constant 0 : index
    %9 = vector.load %arg4[%c0_6, %c0_7] : memref<128x128xbf16, #tpu.memory_space<vmem>>, vector<128x128xbf16>
    %cst_8 = arith.constant dense<0.000000e+00> : vector<2x128xf32>
    %10 = tpu.matmul %8, %9, %cst_8 {dimension_numbers = #tpu.dot_dimension_numbers<[1], [0], [0], [1], [0, 0, 1, 1], [], []>} : vector<2x128xbf16>, vector<128x128xbf16>, vector<2x128xf32> -> vector<2x128xf32>
    %c0_9 = arith.constant 0 : index
    %c0_10 = arith.constant 0 : index
    %11 = vector.load %arg5[%c0_9, %c0_10] : memref<1x128xf32, #tpu.memory_space<vmem>>, vector<1x128xf32>
    %12 = vector.broadcast %11 : vector<1x128xf32> to vector<2x128xf32>
    %13 = arith.addf %10, %12 : vector<2x128xf32>
    %cst_11 = arith.constant 0.000000e+00 : f32
    %14 = vector.broadcast %cst_11 : f32 to vector<2x128xf32>
    %15 = arith.maximumf %13, %14 : vector<2x128xf32>
    %16 = arith.truncf %15 : vector<2x128xf32> to vector<2x128xbf16>
    %c0_12 = arith.constant 0 : index
    %c0_13 = arith.constant 0 : index
    %17 = vector.load %arg6[%c0_12, %c0_13] : memref<128x10xbf16, #tpu.memory_space<vmem>>, vector<128x10xbf16>
    %cst_14 = arith.constant dense<0.000000e+00> : vector<2x10xf32>
    %18 = tpu.matmul %16, %17, %cst_14 {dimension_numbers = #tpu.dot_dimension_numbers<[1], [0], [0], [1], [0, 0, 1, 1], [], []>} : vector<2x128xbf16>, vector<128x10xbf16>, vector<2x10xf32> -> vector<2x10xf32>
    %c0_15 = arith.constant 0 : index
    %c0_16 = arith.constant 0 : index
    %19 = vector.load %arg7[%c0_15, %c0_16] : memref<1x10xf32, #tpu.memory_space<vmem>>, vector<1x10xf32>
    %20 = vector.broadcast %19 : vector<1x10xf32> to vector<2x10xf32>
    %21 = arith.addf %18, %20 : vector<2x10xf32>
    %c0_17 = arith.constant 0 : index
    %c0_18 = arith.constant 0 : index
    %22 = vector.load %arg8[%c0_17, %c0_18] : memref<2x10xf32, #tpu.memory_space<vmem>>, vector<2x10xf32>
    tpu.vector_store %arg8[%c0_17, %c0_18], %21 {strides = array<i32>} : memref<2x10xf32, #tpu.memory_space<vmem>>, vector<2x10xf32>,
    return
  }
  func.func @transform_0(%arg0: i32) -> (i32, i32) {
    %c0_i32 = arith.constant 0 : i32
    %c0_i32_0 = arith.constant 0 : i32
    return %arg0, %c0_i32 : i32, i32
  }
  func.func @transform_1(%arg0: i32) -> (i32, i32) {
    %c0_i32 = arith.constant 0 : i32
    %c0_i32_0 = arith.constant 0 : i32
    %c0_i32_1 = arith.constant 0 : i32
    return %c0_i32, %c0_i32_0 : i32, i32
  }
  func.func @transform_2(%arg0: i32) -> (i32, i32) {
    %c0_i32 = arith.constant 0 : i32
    %c0_i32_0 = arith.constant 0 : i32
    %c0_i32_1 = arith.constant 0 : i32
    return %c0_i32, %c0_i32_0 : i32, i32
  }
  func.func @transform_3(%arg0: i32) -> (i32, i32) {
    %c0_i32 = arith.constant 0 : i32
    %c0_i32_0 = arith.constant 0 : i32
    %c0_i32_1 = arith.constant 0 : i32
    return %c0_i32, %c0_i32_0 : i32, i32
  }
  func.func @transform_4(%arg0: i32) -> (i32, i32) {
    %c0_i32 = arith.constant 0 : i32
    %c0_i32_0 = arith.constant 0 : i32
    %c0_i32_1 = arith.constant 0 : i32
    return %c0_i32, %c0_i32_0 : i32, i32
  }
  func.func @transform_5(%arg0: i32) -> (i32, i32) {
    %c0_i32 = arith.constant 0 : i32
    %c0_i32_0 = arith.constant 0 : i32
    %c0_i32_1 = arith.constant 0 : i32
    return %c0_i32, %c0_i32_0 : i32, i32
  }
  func.func @transform_6(%arg0: i32) -> (i32, i32) {
    %c0_i32 = arith.constant 0 : i32
    %c0_i32_0 = arith.constant 0 : i32
    %c0_i32_1 = arith.constant 0 : i32
    return %c0_i32, %c0_i32_0 : i32, i32
  }
  func.func @transform_7(%arg0: i32) -> (i32, i32) {
    %c0_i32 = arith.constant 0 : i32
    %c0_i32_0 = arith.constant 0 : i32
    return %arg0, %c0_i32 : i32, i32
  }
}

</mosaic_0001>

<llo_original>
// kernel: net_forward.3
$region0: #{net_forward.3}
  #allocation0 [shape = 'u32[]', space=smem, size = 0x4, offset = 0x4, fixed_abs, tag = 'smem constant byte address 0x4 - core index']
  #allocation1 [shape = 'u32[72,128]{1,0:T(1,128)}', space=vmem, size = 0x9000, scoped, tag = 'internal scratch']
  %s0 = inlined_call_operand.vmem [shape: bf16[4,392,75], index: 0, kind: input, shape index: {}]
  %s1 = inlined_call_operand.vmem [shape: bf16[75,6], index: 1, kind: input, shape index: {}]
  %s2 = inlined_call_operand.vmem [shape: f32[1,6], index: 2, kind: input, shape index: {}]
  %s3 = inlined_call_operand.vmem [shape: bf16[392,6], index: 3, kind: output, shape index: {}]
  %s4 = sld [smem:[#allocation0]]
  $region151: #{net_forward.3} parent=0
    _
  %s6 = ssub.s32 1, %s4
  %s7 = scalar_select 0, %s6, %s4
  $region1: #{net_forward.3} parent=0
    #allocation2 [shape = 'u8[409600]{0}', space=vmem, size = 0x64000, scoped, tag = 'input window, operand 0']
    #allocation3 [shape = 'u8[102400]{0}', space=vmem, size = 0x19000, scoped, tag = 'output window, operand 0']
    loop: start=0, step=1, limit=4
    $region2: #{net_forward.3} parent=1 // loop_pre_header
      _
    $region3: #{net_forward.3} parent=1 // loop_header
      %s9 = sphi 0, %s13
      %p10 = scmp.ge.s32.totalorder %s9, 4
      %s19 = sphi 0, %s21
      %s22 = sphi 0, %s19
      %s23 = sphi 0, %s22
      %s39 = sphi 0, %s23
      %s43 = sphi 0, %s43
      %s45 = sphi 0, %s43
      %s46 = sphi 0, %s45
      %s60 = sphi 0, %s46
      %s64 = sphi 0, %s64
      %s66 = sphi 0, %s64
      %s67 = sphi 0, %s66
      %s81 = sphi 0, %s67
      %s87 = sphi 0, %s89
      %s90 = sphi 0, %s87
      %s91 = sphi 0, %s90
      %s107 = sphi 0, %s91
    $region4: #{net_forward.3} parent=1 // loop_header_branch
      %12 = sbr.rel (%p10) target = $region8
    $region5: #{net_forward.3} parent=1 // loop_body
      %s14 = ssub.s32 %s9, 1
      %s15 = ssub.s32 %s9, 2
      %s16 = sadd.s32 %s9, 1
      %s17 = ssub.s32 %s9, %s16
      %p18 = scmp.eq.s32.totalorder %s17, 0
      %s20 = sadd.s32 %s19, 1
      %s21 = scalar_select %p18, %s19, %s20
      %p24 = pneg %p18
      %p25 = scmp.eq.s32.totalorder %s9, 1
      %p26 = por %p24, %p25
      %p27 = scmp.ne.s32.totalorder %s19, %s22
      %p28 = scmp.eq.s32.totalorder %s9, 0
      %p29 = por %p27, %p28
      %p30 = scmp.ne.s32.totalorder %s19, %s22
      %p31 = scmp.eq.s32.totalorder %s14, 1
      %p32 = por %p30, %p31
      %p33 = scmp.ne.s32.totalorder %s22, %s23
      %p34 = scmp.eq.s32.totalorder %s14, 0
      %p35 = por %p33, %p34
      %p36 = scmp.ne.s32.totalorder %s22, %s23
      %p37 = scmp.eq.s32.totalorder %s15, 1
      %p38 = por %p36, %p37
      %p40 = scmp.ne.s32.totalorder %s23, %s39
      %p41 = scmp.eq.s32.totalorder %s15, 0
      %p42 = por %p40, %p41
      %s44 = sadd.s32 %s43, 1
      %p47 = scmp.eq.s32.totalorder %s9, 1
      %p48 = scmp.ne.s32.totalorder %s43, %s45
      %p49 = scmp.eq.s32.totalorder %s9, 0
      %p50 = por %p48, %p49
      %p51 = scmp.ne.s32.totalorder %s43, %s45
      %p52 = scmp.eq.s32.totalorder %s14, 1
      %p53 = por %p51, %p52
      %p54 = scmp.ne.s32.totalorder %s45, %s46
      %p55 = scmp.eq.s32.totalorder %s14, 0
      %p56 = por %p54, %p55
      %p57 = scmp.ne.s32.totalorder %s45, %s46
      %p58 = scmp.eq.s32.totalorder %s15, 1
      %p59 = por %p57, %p58
      %p61 = scmp.ne.s32.totalorder %s46, %s60
      %p62 = scmp.eq.s32.totalorder %s15, 0
      %p63 = por %p61, %p62
      %s65 = sadd.s32 %s64, 1
      %p68 = scmp.eq.s32.totalorder %s9, 1
      %p69 = scmp.ne.s32.totalorder %s64, %s66
      %p70 = scmp.eq.s32.totalorder %s9, 0
      %p71 = por %p69, %p70
      %p72 = scmp.ne.s32.totalorder %s64, %s66
      %p73 = scmp.eq.s32.totalorder %s14, 1
      %p74 = por %p72, %p73
      %p75 = scmp.ne.s32.totalorder %s66, %s67
      %p76 = scmp.eq.s32.totalorder %s14, 0
      %p77 = por %p75, %p76
      %p78 = scmp.ne.s32.totalorder %s66, %s67
      %p79 = scmp.eq.s32.totalorder %s15, 1
      %p80 = por %p78, %p79
      %p82 = scmp.ne.s32.totalorder %s67, %s81
      %p83 = scmp.eq.s32.totalorder %s15, 0
      %p84 = por %p82, %p83
      %s85 = ssub.s32 %s9, %s16
      %p86 = scmp.eq.s32.totalorder %s85, 0
      %s88 = sadd.s32 %s87, 1
      %s89 = scalar_select %p86, %s87, %s88
      %p92 = pneg %p86
      %p93 = scmp.eq.s32.totalorder %s9, 1
      %p94 = por %p92, %p93
      %p95 = scmp.ne.s32.totalorder %s87, %s90
      %p96 = scmp.eq.s32.totalorder %s9, 0
      %p97 = por %p95, %p96
      %p98 = scmp.ne.s32.totalorder %s87, %s90
      %p99 = scmp.eq.s32.totalorder %s14, 1
      %p100 = por %p98, %p99
      %p101 = scmp.ne.s32.totalorder %s90, %s91
      %p102 = scmp.eq.s32.totalorder %s14, 0
      %p103 = por %p101, %p102
      %p104 = scmp.ne.s32.totalorder %s90, %s91
      %p105 = scmp.eq.s32.totalorder %s15, 1
      %p106 = por %p104, %p105
      %p108 = scmp.ne.s32.totalorder %s91, %s107
      %p109 = scmp.eq.s32.totalorder %s15, 0
      %p110 = por %p108, %p109
      %p111 = scmp.le.s32.totalorder 1, %s9
      %p112 = scmp.lt.s32.totalorder %s9, 3
      %p113 = pnand %p111, %p112
      %p114 = pneg %p113
      // Predicated region
      $region9: #{net_forward.3} parent=5 // pred_check
        _
      $region10: #{net_forward.3} parent=5 // pred_check_branch
        %116 = sbr.rel (%p113) target = $region12
      $region11: #{net_forward.3} parent=5 // pred_region
        %s117 = ssub.s32 %s9, 1
        // Predicated region
        $region13: #{net_forward.3} parent=11 // pred_check
          %p118 = pneg %p56
        $region14: #{net_forward.3} parent=11 // pred_check_branch
          %120 = sbr.rel (%p118) target = $region16
        $region15: #{net_forward.3} parent=11 // pred_region
          _
        $region16: #{net_forward.3} parent=11 // pred_fallthru
          _
        // Predicated region
        $region17: #{net_forward.3} parent=11 // pred_check
          %p121 = pneg %p77
        $region18: #{net_forward.3} parent=11 // pred_check_branch
          %123 = sbr.rel (%p121) target = $region20
        $region19: #{net_forward.3} parent=11 // pred_region
          _
        $region20: #{net_forward.3} parent=11 // pred_fallthru
          _
      $region12: #{net_forward.3} parent=5 // pred_fallthru
        _
      %p124 = scmp.lt.s32.totalorder %s9, 2
      // Predicated region
      $region21: #{net_forward.3} parent=5 // pred_check
        %p125 = pneg %p124
      $region22: #{net_forward.3} parent=5 // pred_check_branch
        %127 = sbr.rel (%p125) target = $region24
      $region23: #{net_forward.3} parent=5 // pred_region
        // Predicated region
        $region25: #{net_forward.3} parent=23 // pred_check
          %p128 = pneg %p29
        $region26: #{net_forward.3} parent=23 // pred_check_branch
          %130 = sbr.rel (%p128) target = $region28
        $region27: #{net_forward.3} parent=23 // pred_region
          %s131 = sand.u32 %s19, 1
          %s132 = sand.u32 %s19, 1
          %s133 = smul.addr %s132, 400
          %s134 = scalar_lea.vmem [#allocation2], %s133
          %s135 = smul.u32 25, %s9
          %s136 = ssub.s32 49, %s135
          %p137 = scmp.lt.s32.totalorder %s136, 25
          %s138 = scalar_select %p137, %s136, 25
          %s139 = smul.u32 16, %s138
          %p140 = scmp.ne.s32.totalorder 0, %s139
          %s141 = smul.addr %s135, 4
          %s142 = scalar_lea.vmem %s0, %s141
          // Predicated region
          $region29: #{net_forward.3} parent=27 // pred_check
            %p143 = pneg %p140
          $region30: #{net_forward.3} parent=27 // pred_check_branch
            %145 = sbr.rel (%p143) target = $region32
          $region31: #{net_forward.3} parent=27 // pred_region
            // Predicated region
            $region33: #{net_forward.3} parent=31 // pred_check
              _
            $region34: #{net_forward.3} parent=31 // pred_check_branch
              %147 = sbr.rel target = $region36
            $region35: #{net_forward.3} parent=31 // pred_region
              // Predicated region
              $region55: #{net_forward.3} parent=35 // pred_check
                _
              $region56: #{net_forward.3} parent=35 // pred_check_branch
                %265 = sbr.rel (0) target = $region58
              $region57: #{net_forward.3} parent=35 // pred_region
                %s266 = sshrl.u32 %s138, 4
                // While loop
                $region59: #{net_forward.3} parent=57 // loop_pre_header
                  _
                $region60: #{net_forward.3} parent=57 // loop_header
                  %s268 = sphi 0, %s270
                  %p269 = scmp.ge.s32.totalorder %s268, %s266
                  %s273 = sphi 0, %s278
                  %s274 = sphi %s142, %s281
                  %s275 = sphi %s134, %s282
                $region61: #{net_forward.3} parent=57 // loop_header_branch
                  %272 = sbr.rel (%p269) target = $region65
                $region62: #{net_forward.3} parent=57 // loop_body
                  %s276 = sadd.s32 1, %s273
                  %p277 = scmp.ge.s32.totalorder %s276, %s266
                  %s278 = scalar_select %p277, 0, %s276
                  %s279 = smul.u32 %s278, 64
                  %s280 = smul.u32 %s278, 64
                  %s281 = scalar_lea.vmem %s142, %s279
                  %s282 = scalar_lea.vmem %s134, %s280 [#allocation2]
                $region63: #{net_forward.3} parent=57 // loop_footer
                  %s270 = sadd.s32 %s268, 1
                $region64: #{net_forward.3} parent=57 // loop_footer_branch
                  %267 = sbr.rel target = $region60
                $region65: #{net_forward.3} parent=57 // loop_exit
                  _
                %s283 = sshrl.u32 %s138, 4
                %s284 = sand.u32 %s138, 15
                %s285 = smul.u32 %s283, 16
                %s286 = smul.u32 4, %s285
                %s287 = scalar_lea.vmem %s142, %s286
                %s288 = smul.u32 4, %s285
                %s289 = scalar_lea.vmem %s134, %s288 [#allocation2]
                // While loop
                $region66: #{net_forward.3} parent=57 // loop_pre_header
                  _
                $region67: #{net_forward.3} parent=57 // loop_header
                  %s291 = sphi 0, %s293
                  %p292 = scmp.ge.s32.totalorder %s291, %s284
                  %s296 = sphi 0, %s301
                  %s297 = sphi %s287, %s304
                  %s298 = sphi %s289, %s305
                $region68: #{net_forward.3} parent=57 // loop_header_branch
                  %295 = sbr.rel (%p292) target = $region72
                $region69: #{net_forward.3} parent=57 // loop_body
                  %s299 = sadd.s32 1, %s296
                  %p300 = scmp.ge.s32.totalorder %s299, %s284
                  %s301 = scalar_select %p300, 0, %s299
                  %s302 = smul.u32 %s301, 4
                  %s303 = smul.u32 %s301, 4
                  %s304 = scalar_lea.vmem %s287, %s302
                  %s305 = scalar_lea.vmem %s289, %s303 [#allocation2]
                $region70: #{net_forward.3} parent=57 // loop_footer
                  %s293 = sadd.s32 %s291, 1
                $region71: #{net_forward.3} parent=57 // loop_footer_branch
                  %290 = sbr.rel target = $region67
                $region72: #{net_forward.3} parent=57 // loop_exit
                  _
                %s307 = ssub.s32 16, 1
                %s308 = sshrl.u32 %s138, 3
                // While loop
                $region73: #{net_forward.3} parent=57 // loop_pre_header
                  _
                $region74: #{net_forward.3} parent=57 // loop_header
                  %s310 = sphi 0, %s312
                  %p311 = scmp.ge.s32.totalorder %s310, %s308
                  %s315 = sphi 0, %s384
                  %s316 = sphi %s142, %s387
                  %s317 = sphi %s134, %s388
                $region75: #{net_forward.3} parent=57 // loop_header_branch
                  %314 = sbr.rel (%p311) target = $region79
                $region76: #{net_forward.3} parent=57 // loop_body
                  %v318 = vld [vmem:[%s316] sm:%s307]
                  %319 = vst [vmem:[%s317] sm:%s307] %v318
                  %v320 = vld [vmem:[%s316 + $0x4] sm:%s307]
                  %321 = vst [vmem:[%s317 + $0x4] sm:%s307] %v320
                  %v322 = vld [vmem:[%s316 + $0x8] sm:%s307]
                  %323 = vst [vmem:[%s317 + $0x8] sm:%s307] %v322
                  %v324 = vld [vmem:[%s316 + $0xc] sm:%s307]
                  %325 = vst [vmem:[%s317 + $0xc] sm:%s307] %v324
                  %v326 = vld [vmem:[%s316 + $0x10] sm:%s307]
                  %327 = vst [vmem:[%s317 + $0x10] sm:%s307] %v326
                  %v328 = vld [vmem:[%s316 + $0x14] sm:%s307]
                  %329 = vst [vmem:[%s317 + $0x14] sm:%s307] %v328
                  %v330 = vld [vmem:[%s316 + $0x18] sm:%s307]
                  %331 = vst [vmem:[%s317 + $0x18] sm:%s307] %v330
                  %v332 = vld [vmem:[%s316 + $0x1c] sm:%s307]
                  %333 = vst [vmem:[%s317 + $0x1c] sm:%s307] %v332
                  %v334 = vld [vmem:[%s316 + $0xc4] sm:%s307]
                  %335 = vst [vmem:[%s317 + $0x64] sm:%s307] %v334
                  %v336 = vld [vmem:[%s316 + $0xc8] sm:%s307]
                  %337 = vst [vmem:[%s317 + $0x68] sm:%s307] %v336
                  %v338 = vld [vmem:[%s316 + $0xcc] sm:%s307]
                  %339 = vst [vmem:[%s317 + $0x6c] sm:%s307] %v338
                  %v340 = vld [vmem:[%s316 + $0xd0] sm:%s307]
                  %341 = vst [vmem:[%s317 + $0x70] sm:%s307] %v340
                  %v342 = vld [vmem:[%s316 + $0xd4] sm:%s307]
                  %343 = vst [vmem:[%s317 + $0x74] sm:%s307] %v342
                  %v344 = vld [vmem:[%s316 + $0xd8] sm:%s307]
                  %345 = vst [vmem:[%s317 + $0x78] sm:%s307] %v344
                  %v346 = vld [vmem:[%s316 + $0xdc] sm:%s307]
                  %347 = vst [vmem:[%s317 + $0x7c] sm:%s307] %v346
                  %v348 = vld [vmem:[%s316 + $0xe0] sm:%s307]
                  %349 = vst [vmem:[%s317 + $0x80] sm:%s307] %v348
                  %v350 = vld [vmem:[%s316 + $0x188] sm:%s307]
                  %351 = vst [vmem:[%s317 + $0xc8] sm:%s307] %v350
                  %v352 = vld [vmem:[%s316 + $0x18c] sm:%s307]
                  %353 = vst [vmem:[%s317 + $0xcc] sm:%s307] %v352
                  %v354 = vld [vmem:[%s316 + $0x190] sm:%s307]
                  %355 = vst [vmem:[%s317 + $0xd0] sm:%s307] %v354
                  %v356 = vld [vmem:[%s316 + $0x194] sm:%s307]
                  %357 = vst [vmem:[%s317 + $0xd4] sm:%s307] %v356
                  %v358 = vld [vmem:[%s316 + $0x198] sm:%s307]
                  %359 = vst [vmem:[%s317 + $0xd8] sm:%s307] %v358
                  %v360 = vld [vmem:[%s316 + $0x19c] sm:%s307]
                  %361 = vst [vmem:[%s317 + $0xdc] sm:%s307] %v360
                  %v362 = vld [vmem:[%s316 + $0x1a0] sm:%s307]
                  %363 = vst [vmem:[%s317 + $0xe0] sm:%s307] %v362
                  %v364 = vld [vmem:[%s316 + $0x1a4] sm:%s307]
                  %365 = vst [vmem:[%s317 + $0xe4] sm:%s307] %v364
                  %v366 = vld [vmem:[%s316 + $0x24c] sm:%s307]
                  %367 = vst [vmem:[%s317 + $0x12c] sm:%s307] %v366
                  %v368 = vld [vmem:[%s316 + $0x250] sm:%s307]
                  %369 = vst [vmem:[%s317 + $0x130] sm:%s307] %v368
                  %v370 = vld [vmem:[%s316 + $0x254] sm:%s307]
                  %371 = vst [vmem:[%s317 + $0x134] sm:%s307] %v370
                  %v372 = vld [vmem:[%s316 + $0x258] sm:%s307]
                  %373 = vst [vmem:[%s317 + $0x138] sm:%s307] %v372
                  %v374 = vld [vmem:[%s316 + $0x25c] sm:%s307]
                  %375 = vst [vmem:[%s317 + $0x13c] sm:%s307] %v374
                  %v376 = vld [vmem:[%s316 + $0x260] sm:%s307]
                  %377 = vst [vmem:[%s317 + $0x140] sm:%s307] %v376
                  %v378 = vld [vmem:[%s316 + $0x264] sm:%s307]
                  %379 = vst [vmem:[%s317 + $0x144] sm:%s307] %v378
                  %v380 = vld [vmem:[%s316 + $0x268] sm:%s307]
                  %381 = vst [vmem:[%s317 + $0x148] sm:%s307] %v380
                  %s382 = sadd.s32 1, %s315
                  %p383 = scmp.ge.s32.totalorder %s382, %s308
                  %s384 = scalar_select %p383, 0, %s382
                  %s385 = smul.u32 %s384, 32
                  %s386 = smul.u32 %s384, 32
                  %s387 = scalar_lea.vmem %s142, %s385
                  %s388 = scalar_lea.vmem %s134, %s386 [#allocation2]
                $region77: #{net_forward.3} parent=57 // loop_footer
                  %s312 = sadd.s32 %s310, 1
                $region78: #{net_forward.3} parent=57 // loop_footer_branch
                  %309 = sbr.rel target = $region74
                $region79: #{net_forward.3} parent=57 // loop_exit
                  _
                %s389 = sshrl.u32 %s138, 3
                %s390 = sand.u32 %s138, 7
                %s391 = smul.u32 %s389, 8
                %s392 = smul.u32 4, %s391
                %s393 = scalar_lea.vmem %s142, %s392
                %s394 = smul.u32 4, %s391
                %s395 = scalar_lea.vmem %s134, %s394 [#allocation2]
                // While loop
                $region80: #{net_forward.3} parent=57 // loop_pre_header
                  _
                $region81: #{net_forward.3} parent=57 // loop_header
                  %s397 = sphi 0, %s399
                  %p398 = scmp.ge.s32.totalorder %s397, %s390
                  %s402 = sphi 0, %s415
                  %s403 = sphi %s393, %s418
                  %s404 = sphi %s395, %s419
                $region82: #{net_forward.3} parent=57 // loop_header_branch
                  %401 = sbr.rel (%p398) target = $region86
                $region83: #{net_forward.3} parent=57 // loop_body
                  %v405 = vld [vmem:[%s403] sm:%s307]
                  %406 = vst [vmem:[%s404] sm:%s307] %v405
                  %v407 = vld [vmem:[%s403 + $0xc4] sm:%s307]
                  %408 = vst [vmem:[%s404 + $0x64] sm:%s307] %v407
                  %v409 = vld [vmem:[%s403 + $0x188] sm:%s307]
                  %410 = vst [vmem:[%s404 + $0xc8] sm:%s307] %v409
                  %v411 = vld [vmem:[%s403 + $0x24c] sm:%s307]
                  %412 = vst [vmem:[%s404 + $0x12c] sm:%s307] %v411
                  %s413 = sadd.s32 1, %s402
                  %p414 = scmp.ge.s32.totalorder %s413, %s390
                  %s415 = scalar_select %p414, 0, %s413
                  %s416 = smul.u32 %s415, 4
                  %s417 = smul.u32 %s415, 4
                  %s418 = scalar_lea.vmem %s393, %s416
                  %s419 = scalar_lea.vmem %s395, %s417 [#allocation2]
                $region84: #{net_forward.3} parent=57 // loop_footer
                  %s399 = sadd.s32 %s397, 1
                $region85: #{net_forward.3} parent=57 // loop_footer_branch
                  %396 = sbr.rel target = $region81
                $region86: #{net_forward.3} parent=57 // loop_exit
                  _
              $region58: #{net_forward.3} parent=35 // pred_fallthru
                _
            $region36: #{net_forward.3} parent=31 // pred_fallthru
              _
            // Predicated region
            $region37: #{net_forward.3} parent=31 // pred_check
              _
            $region38: #{net_forward.3} parent=31 // pred_check_branch
              %149 = sbr.rel (0) target = $region40
            $region39: #{net_forward.3} parent=31 // pred_region
              %s151 = ssub.s32 16, 1
              %s152 = sshrl.u32 %s138, 3
              // While loop
              $region41: #{net_forward.3} parent=39 // loop_pre_header
                _
              $region42: #{net_forward.3} parent=39 // loop_header
                %s154 = sphi 0, %s156
                %p155 = scmp.ge.s32.totalorder %s154, %s152
                %s159 = sphi 0, %s228
                %s160 = sphi %s142, %s231
                %s161 = sphi %s134, %s232
              $region43: #{net_forward.3} parent=39 // loop_header_branch
                %158 = sbr.rel (%p155) target = $region47
              $region44: #{net_forward.3} parent=39 // loop_body
                %v162 = vld [vmem:[%s160] sm:%s151]
                %163 = vst [vmem:[%s161] sm:%s151] %v162
                %v164 = vld [vmem:[%s160 + $0x4] sm:%s151]
                %165 = vst [vmem:[%s161 + $0x4] sm:%s151] %v164
                %v166 = vld [vmem:[%s160 + $0x8] sm:%s151]
                %167 = vst [vmem:[%s161 + $0x8] sm:%s151] %v166
                %v168 = vld [vmem:[%s160 + $0xc] sm:%s151]
                %169 = vst [vmem:[%s161 + $0xc] sm:%s151] %v168
                %v170 = vld [vmem:[%s160 + $0x10] sm:%s151]
                %171 = vst [vmem:[%s161 + $0x10] sm:%s151] %v170
                %v172 = vld [vmem:[%s160 + $0x14] sm:%s151]
                %173 = vst [vmem:[%s161 + $0x14] sm:%s151] %v172
                %v174 = vld [vmem:[%s160 + $0x18] sm:%s151]
                %175 = vst [vmem:[%s161 + $0x18] sm:%s151] %v174
                %v176 = vld [vmem:[%s160 + $0x1c] sm:%s151]
                %177 = vst [vmem:[%s161 + $0x1c] sm:%s151] %v176
                %v178 = vld [vmem:[%s160 + $0xc4] sm:%s151]
                %179 = vst [vmem:[%s161 + $0x64] sm:%s151] %v178
                %v180 = vld [vmem:[%s160 + $0xc8] sm:%s151]
                %181 = vst [vmem:[%s161 + $0x68] sm:%s151] %v180
                %v182 = vld [vmem:[%s160 + $0xcc] sm:%s151]
                %183 = vst [vmem:[%s161 + $0x6c] sm:%s151] %v182
                %v184 = vld [vmem:[%s160 + $0xd0] sm:%s151]
                %185 = vst [vmem:[%s161 + $0x70] sm:%s151] %v184
                %v186 = vld [vmem:[%s160 + $0xd4] sm:%s151]
                %187 = vst [vmem:[%s161 + $0x74] sm:%s151] %v186
                %v188 = vld [vmem:[%s160 + $0xd8] sm:%s151]
                %189 = vst [vmem:[%s161 + $0x78] sm:%s151] %v188
                %v190 = vld [vmem:[%s160 + $0xdc] sm:%s151]
                %191 = vst [vmem:[%s161 + $0x7c] sm:%s151] %v190
                %v192 = vld [vmem:[%s160 + $0xe0] sm:%s151]
                %193 = vst [vmem:[%s161 + $0x80] sm:%s151] %v192
                %v194 = vld [vmem:[%s160 + $0x188] sm:%s151]
                %195 = vst [vmem:[%s161 + $0xc8] sm:%s151] %v194
                %v196 = vld [vmem:[%s160 + $0x18c] sm:%s151]
                %197 = vst [vmem:[%s161 + $0xcc] sm:%s151] %v196
                %v198 = vld [vmem:[%s160 + $0x190] sm:%s151]
                %199 = vst [vmem:[%s161 + $0xd0] sm:%s151] %v198
                %v200 = vld [vmem:[%s160 + $0x194] sm:%s151]
                %201 = vst [vmem:[%s161 + $0xd4] sm:%s151] %v200
                %v202 = vld [vmem:[%s160 + $0x198] sm:%s151]
                %203 = vst [vmem:[%s161 + $0xd8] sm:%s151] %v202
                %v204 = vld [vmem:[%s160 + $0x19c] sm:%s151]
                %205 = vst [vmem:[%s161 + $0xdc] sm:%s151] %v204
                %v206 = vld [vmem:[%s160 + $0x1a0] sm:%s151]
                %207 = vst [vmem:[%s161 + $0xe0] sm:%s151] %v206
                %v208 = vld [vmem:[%s160 + $0x1a4] sm:%s151]
                %209 = vst [vmem:[%s161 + $0xe4] sm:%s151] %v208
                %v210 = vld [vmem:[%s160 + $0x24c] sm:%s151]
                %211 = vst [vmem:[%s161 + $0x12c] sm:%s151] %v210
                %v212 = vld [vmem:[%s160 + $0x250] sm:%s151]
                %213 = vst [vmem:[%s161 + $0x130] sm:%s151] %v212
                %v214 = vld [vmem:[%s160 + $0x254] sm:%s151]
                %215 = vst [vmem:[%s161 + $0x134] sm:%s151] %v214
                %v216 = vld [vmem:[%s160 + $0x258] sm:%s151]
                %217 = vst [vmem:[%s161 + $0x138] sm:%s151] %v216
                %v218 = vld [vmem:[%s160 + $0x25c] sm:%s151]
                %219 = vst [vmem:[%s161 + $0x13c] sm:%s151] %v218
                %v220 = vld [vmem:[%s160 + $0x260] sm:%s151]
                %221 = vst [vmem:[%s161 + $0x140] sm:%s151] %v220
                %v222 = vld [vmem:[%s160 + $0x264] sm:%s151]
                %223 = vst [vmem:[%s161 + $0x144] sm:%s151] %v222
                %v224 = vld [vmem:[%s160 + $0x268] sm:%s151]
                %225 = vst [vmem:[%s161 + $0x148] sm:%s151] %v224
                %s226 = sadd.s32 1, %s159
                %p227 = scmp.ge.s32.totalorder %s226, %s152
                %s228 = scalar_select %p227, 0, %s226
                %s229 = smul.u32 %s228, 32
                %s230 = smul.u32 %s228, 32
                %s231 = scalar_lea.vmem %s142, %s229
                %s232 = scalar_lea.vmem %s134, %s230 [#allocation2]
              $region45: #{net_forward.3} parent=39 // loop_footer
                %s156 = sadd.s32 %s154, 1
              $region46: #{net_forward.3} parent=39 // loop_footer_branch
                %153 = sbr.rel target = $region42
              $region47: #{net_forward.3} parent=39 // loop_exit
                _
              %s233 = sshrl.u32 %s138, 3
              %s234 = sand.u32 %s138, 7
              %s235 = smul.u32 %s233, 8
              %s236 = smul.u32 4, %s235
              %s237 = scalar_lea.vmem %s142, %s236
              %s238 = smul.u32 4, %s235
              %s239 = scalar_lea.vmem %s134, %s238 [#allocation2]
              // While loop
              $region48: #{net_forward.3} parent=39 // loop_pre_header
                _
              $region49: #{net_forward.3} parent=39 // loop_header
                %s241 = sphi 0, %s243
                %p242 = scmp.ge.s32.totalorder %s241, %s234
                %s246 = sphi 0, %s259
                %s247 = sphi %s237, %s262
                %s248 = sphi %s239, %s263
              $region50: #{net_forward.3} parent=39 // loop_header_branch
                %245 = sbr.rel (%p242) target = $region54
              $region51: #{net_forward.3} parent=39 // loop_body
                %v249 = vld [vmem:[%s247] sm:%s151]
                %250 = vst [vmem:[%s248] sm:%s151] %v249
                %v251 = vld [vmem:[%s247 + $0xc4] sm:%s151]
                %252 = vst [vmem:[%s248 + $0x64] sm:%s151] %v251
                %v253 = vld [vmem:[%s247 + $0x188] sm:%s151]
                %254 = vst [vmem:[%s248 + $0xc8] sm:%s151] %v253
                %v255 = vld [vmem:[%s247 + $0x24c] sm:%s151]
                %256 = vst [vmem:[%s248 + $0x12c] sm:%s151] %v255
                %s257 = sadd.s32 1, %s246
                %p258 = scmp.ge.s32.totalorder %s257, %s234
                %s259 = scalar_select %p258, 0, %s257
                %s260 = smul.u32 %s259, 4
                %s261 = smul.u32 %s259, 4
                %s262 = scalar_lea.vmem %s237, %s260
                %s263 = scalar_lea.vmem %s239, %s261 [#allocation2]
              $region52: #{net_forward.3} parent=39 // loop_footer
                %s243 = sadd.s32 %s241, 1
              $region53: #{net_forward.3} parent=39 // loop_footer_branch
                %240 = sbr.rel target = $region49
              $region54: #{net_forward.3} parent=39 // loop_exit
                _
            $region40: #{net_forward.3} parent=31 // pred_fallthru
              _
          $region32: #{net_forward.3} parent=27 // pred_fallthru
            _
          %420 = vnop
        $region28: #{net_forward.3} parent=23 // pred_fallthru
          _
      $region24: #{net_forward.3} parent=5 // pred_fallthru
        _
      %p421 = scmp.le.s32.totalorder 1, %s9
      %p422 = scmp.lt.s32.totalorder %s9, 3
      %p423 = pnand %p421, %p422
      %p424 = pneg %p423
      // Predicated region
      $region87: #{net_forward.3} parent=5 // pred_check
        _
      $region88: #{net_forward.3} parent=5 // pred_check_branch
        %426 = sbr.rel (%p423) target = $region90
      $region89: #{net_forward.3} parent=5 // pred_region
        %s427 = ssub.s32 %s9, 1
        %s428 = sand.u32 %s22, 1
        %s429 = sand.u32 %s22, 1
        %s430 = smul.addr %s429, 400
        %s431 = scalar_lea.vmem [#allocation2], %s430
        // Predicated region
        $region91: #{net_forward.3} parent=89 // pred_check
          %p432 = pneg %p35
        $region92: #{net_forward.3} parent=89 // pred_check_branch
          %434 = sbr.rel (%p432) target = $region94
        $region93: #{net_forward.3} parent=89 // pred_region
          _
        $region94: #{net_forward.3} parent=89 // pred_fallthru
          _
        %s435 = sand.u32 %s22, 1
        %s436 = sand.u32 %s22, 1
        %s437 = smul.addr %s436, 400
        %s438 = scalar_lea.vmem [#allocation2], %s437
        %p439 = pneg %p35
        %p440 = pneg %p32
        %p441 = pneg %p56
        %p442 = pneg %p53
        %p443 = pneg %p77
        %p444 = pneg %p74
        %p445 = pneg %p103
        %p446 = pneg %p100
        %s447 = sand.u32 %s90, 1
        %s448 = sand.u32 %s90, 1
        %s449 = smul.addr %s448, 100
        %s450 = scalar_lea.vmem [#allocation3], %s449
        %s451 = smul.u32 25, %s14
        %s452 = ssub.s32 49, %s451
        %p453 = scmp.lt.s32.totalorder %s452, 25
        %s454 = scalar_select %p453, %s452, 25
        %s455 = smul.u32 16, %s454
        %s456 = smul.u32 25, %s14
        %s457 = ssub.s32 49, %s456
        %p458 = scmp.lt.s32.totalorder %s457, 25
        %s459 = scalar_select %p458, %s457, 25
        %s460 = smul.u32 4, %s459
        %v462 = vld [vmem:[%s1] sm:$0xf]
        %v463 = vld [vmem:[%s1 + $0x4] sm:$0xf]
        %v464 = vld [vmem:[%s1 + $0x8] sm:$0xf]
        %v465 = vld [vmem:[%s1 + $0xc] sm:$0xf]
        %v466 = vld [vmem:[%s1 + $0x10] sm:$0xf]
        %v467 = vld [vmem:[%s1 + $0x14] sm:$0xf]
        %v468 = vld [vmem:[%s1 + $0x18] sm:$0xf]
        %v469 = vld [vmem:[%s1 + $0x1c] sm:$0xf]
        %v470 = vld [vmem:[%s1 + $0x20] sm:$0xf]
        %v471 = vld [vmem:[%s1 + $0x24] sm:$0x3]
        %v472 = vld [vmem:[%s431] sm:$0xf]
        %v473 = vld [vmem:[%s431 + $0x4] sm:$0xf]
        %v474 = vld [vmem:[%s431 + $0x8] sm:$0xf]
        %v475 = vld [vmem:[%s431 + $0xc] sm:$0xf]
        %v476 = vld [vmem:[%s431 + $0x10] sm:$0xf]
        %v477 = vld [vmem:[%s431 + $0x14] sm:$0xf]
        %v478 = vld [vmem:[%s431 + $0x18] sm:$0xf]
        %v479 = vld [vmem:[%s431 + $0x1c] sm:$0xf]
        %v480 = vld [vmem:[%s431 + $0x20] sm:$0xf]
        %v481 = vld [vmem:[%s431 + $0x24] sm:$0xf]
        %v482 = vld [vmem:[%s431 + $0x28] sm:$0xf]
        %v483 = vld [vmem:[%s431 + $0x2c] sm:$0xf]
        %v484 = vld [vmem:[%s431 + $0x30] sm:$0xf]
        %v485 = vld [vmem:[%s431 + $0x34] sm:$0xf]
        %v486 = vld [vmem:[%s431 + $0x38] sm:$0xf]
        %v487 = vld [vmem:[%s431 + $0x3c] sm:$0xf]
        %v488 = vld [vmem:[%s431 + $0x40] sm:$0xf]
        %v489 = vld [vmem:[%s431 + $0x44] sm:$0xf]
        %v490 = vld [vmem:[%s431 + $0x48] sm:$0xf]
        %v491 = vld [vmem:[%s431 + $0x4c] sm:$0xf]
        %v492 = vld [vmem:[%s431 + $0x50] sm:$0xf]
        %v493 = vld [vmem:[%s431 + $0x54] sm:$0xf]
        %v494 = vld [vmem:[%s431 + $0x58] sm:$0xf]
        %v495 = vld [vmem:[%s431 + $0x5c] sm:$0xf]
        %v496 = vld [vmem:[%s431 + $0x60] sm:$0xf]
        %v522 = vunpack.c.l.b16 %v472
        %v523 = vunpack.c.l.b16 %v473
        %v524 = vunpack.c.l.b16 %v474
        %v525 = vunpack.c.l.b16 %v475
        %v526 = vunpack.c.l.b16 %v476
        %v527 = vunpack.c.l.b16 %v477
        %v528 = vunpack.c.l.b16 %v478
        %v529 = vunpack.c.l.b16 %v479
        %v530 = vunpack.c.l.b16 %v480
        %v531 = vunpack.c.l.b16 %v481
        %v532 = vunpack.c.l.b16 %v482
        %v533 = vunpack.c.l.b16 %v483
        %v534 = vunpack.c.l.b16 %v484
        %v535 = vunpack.c.l.b16 %v485
        %v536 = vunpack.c.l.b16 %v486
        %v537 = vunpack.c.l.b16 %v487
        %v538 = vunpack.c.l.b16 %v488
        %v539 = vunpack.c.l.b16 %v489
        %v540 = vunpack.c.l.b16 %v490
        %v541 = vunpack.c.l.b16 %v491
        %v542 = vunpack.c.l.b16 %v492
        %v543 = vunpack.c.l.b16 %v493
        %v544 = vunpack.c.l.b16 %v494
        %v545 = vunpack.c.l.b16 %v495
        %v546 = vunpack.c.l.b16 %v496
        %v547 = vpack.c.b16 %v523, %v522
        %v548 = vpack.c.b16 %v525, %v524
        %v549 = vpack.c.b16 %v527, %v526
        %v550 = vpack.c.b16 %v529, %v528
        %v551 = vpack.c.b16 %v531, %v530
        %v552 = vpack.c.b16 %v533, %v532
        %v553 = vpack.c.b16 %v535, %v534
        %v554 = vpack.c.b16 %v537, %v536
        %v555 = vpack.c.b16 %v539, %v538
        %v556 = vpack.c.b16 %v541, %v540
        %v557 = vpack.c.b16 %v543, %v542
        %v558 = vpack.c.b16 %v545, %v544
        %v559 = vpack.c.b16 %v546, %v546
        %v570 = vunpack.c.l.b16 %v462
        %v571 = vunpack.c.l.b16 %v463
        %v572 = vunpack.c.l.b16 %v464
        %v573 = vunpack.c.l.b16 %v465
        %v574 = vunpack.c.l.b16 %v466
        %v575 = vunpack.c.l.b16 %v467
        %v576 = vunpack.c.l.b16 %v468
        %v577 = vunpack.c.l.b16 %v469
        %v578 = vunpack.c.l.b16 %v470
        %v579 = vunpack.c.l.b16 %v471
        %v580 = vpack.c.b16 %v571, %v570
        %v581 = vpack.c.b16 %v573, %v572
        %v582 = vpack.c.b16 %v575, %v574
        %v583 = vpack.c.b16 %v577, %v576
        %v584 = vpack.c.b16 %v579, %v578
        %vm589 = vcmask 613376
        %v591 = vsel %vm589, %v547, 0
        %v594 = vsel %vm589, %v548, 0
        %v597 = vsel %vm589, %v549, 0
        %v600 = vsel %vm589, %v550, 0
        %v603 = vsel %vm589, %v551, 0
        %v606 = vsel %vm589, %v552, 0
        %v609 = vsel %vm589, %v553, 0
        %v612 = vsel %vm589, %v554, 0
        %v615 = vsel %vm589, %v555, 0
        %v618 = vsel %vm589, %v556, 0
        %v621 = vsel %vm589, %v557, 0
        %v624 = vsel %vm589, %v558, 0
        %v627 = vsel %vm589, %v559, 0
        %vm629 = vcmask 1044480
        %vm630 = vcmask 1045504
        %v631 = vsel %vm629, 4294967295, 65535
        %v632 = vsel %vm630, %v631, 0
        %v634 = vand.u32 %v584, %v632
        %636 = vmatpush.bf16.msra.mxu0 0
        %637 = vmatpush.bf16.msra.mxu0 0
        %638 = vmatpush.bf16.msra.mxu0 0
        %639 = vmatpush.bf16.msra.mxu0 %v634
        %640 = vmatpush.bf16.msra.mxu0 %v583
        %641 = vmatpush.bf16.msra.mxu0 %v582
        %642 = vmatpush.bf16.msra.mxu0 %v581
        %643 = vmatpush.bf16.msra.mxu0 %v580
        %644 = vmatmul.bf16.gmra.mxu0 %v591
        %v645 = vpop.f32.mrf.mxu0
        %v646 = vadd.f32 0.0, %v645
        %v647 = vpop.f32.mrf.mxu0
        %v648 = vadd.f32 0.0, %v647
        %649 = vmatmul.bf16.gmra.mxu0 %v594
        %v650 = vpop.f32.mrf.mxu0
        %v651 = vadd.f32 0.0, %v650
        %v652 = vpop.f32.mrf.mxu0
        %v653 = vadd.f32 0.0, %v652
        %654 = vmatmul.bf16.gmra.mxu0 %v597
        %v655 = vpop.f32.mrf.mxu0
        %v656 = vadd.f32 0.0, %v655
        %v657 = vpop.f32.mrf.mxu0
        %v658 = vadd.f32 0.0, %v657
        %659 = vmatmul.bf16.gmra.mxu0 %v600
        %v660 = vpop.f32.mrf.mxu0
        %v661 = vadd.f32 0.0, %v660
        %v662 = vpop.f32.mrf.mxu0
        %v663 = vadd.f32 0.0, %v662
        %664 = vmatmul.bf16.gmra.mxu0 %v603
        %v665 = vpop.f32.mrf.mxu0
        %v666 = vadd.f32 0.0, %v665
        %v667 = vpop.f32.mrf.mxu0
        %v668 = vadd.f32 0.0, %v667
        %669 = vmatmul.bf16.gmra.mxu0 %v606
        %v670 = vpop.f32.mrf.mxu0
        %v671 = vadd.f32 0.0, %v670
        %v672 = vpop.f32.mrf.mxu0
        %v673 = vadd.f32 0.0, %v672
        %674 = vmatmul.bf16.gmra.mxu0 %v609
        %v675 = vpop.f32.mrf.mxu0
        %v676 = vadd.f32 0.0, %v675
        %v677 = vpop.f32.mrf.mxu0
        %v678 = vadd.f32 0.0, %v677
        %679 = vmatmul.bf16.gmra.mxu0 %v612
        %v680 = vpop.f32.mrf.mxu0
        %v681 = vadd.f32 0.0, %v680
        %v682 = vpop.f32.mrf.mxu0
        %v683 = vadd.f32 0.0, %v682
        %684 = vmatmul.bf16.gmra.mxu0 %v615
        %v685 = vpop.f32.mrf.mxu0
        %v686 = vadd.f32 0.0, %v685
        %v687 = vpop.f32.mrf.mxu0
        %v688 = vadd.f32 0.0, %v687
        %689 = vmatmul.bf16.gmra.mxu0 %v618
        %v690 = vpop.f32.mrf.mxu0
        %v691 = vadd.f32 0.0, %v690
        %v692 = vpop.f32.mrf.mxu0
        %v693 = vadd.f32 0.0, %v692
        %694 = vmatmul.bf16.gmra.mxu0 %v621
        %v695 = vpop.f32.mrf.mxu0
        %v696 = vadd.f32 0.0, %v695
        %v697 = vpop.f32.mrf.mxu0
        %v698 = vadd.f32 0.0, %v697
        %699 = vmatmul.bf16.gmra.mxu0 %v624
        %v700 = vpop.f32.mrf.mxu0
        %v701 = vadd.f32 0.0, %v700
        %v702 = vpop.f32.mrf.mxu0
        %v703 = vadd.f32 0.0, %v702
        %704 = vmatmul.bf16.gmra.mxu0 %v627
        %v705 = vpop.f32.mrf.mxu0
        %v706 = vadd.f32 0.0, %v705
        %v707 = vpop.f32.mrf.mxu0
        %708 = vdwg.mxu0
        %s709 = scalar_lea.vmem %s431, 100 [#allocation2]
        %v710 = vld [vmem:[%s709] sm:$0xf]
        %v711 = vld [vmem:[%s709 + $0x4] sm:$0xf]
        %v712 = vld [vmem:[%s709 + $0x8] sm:$0xf]
        %v713 = vld [vmem:[%s709 + $0xc] sm:$0xf]
        %v714 = vld [vmem:[%s709 + $0x10] sm:$0xf]
        %v715 = vld [vmem:[%s709 + $0x14] sm:$0xf]
        %v716 = vld [vmem:[%s709 + $0x18] sm:$0xf]
        %v717 = vld [vmem:[%s709 + $0x1c] sm:$0xf]
        %v718 = vld [vmem:[%s709 + $0x20] sm:$0xf]
        %v719 = vld [vmem:[%s709 + $0x24] sm:$0xf]
        %v720 = vld [vmem:[%s709 + $0x28] sm:$0xf]
        %v721 = vld [vmem:[%s709 + $0x2c] sm:$0xf]
        %v722 = vld [vmem:[%s709 + $0x30] sm:$0xf]
        %v723 = vld [vmem:[%s709 + $0x34] sm:$0xf]
        %v724 = vld [vmem:[%s709 + $0x38] sm:$0xf]
        %v725 = vld [vmem:[%s709 + $0x3c] sm:$0xf]
        %v726 = vld [vmem:[%s709 + $0x40] sm:$0xf]
        %v727 = vld [vmem:[%s709 + $0x44] sm:$0xf]
        %v728 = vld [vmem:[%s709 + $0x48] sm:$0xf]
        %v729 = vld [vmem:[%s709 + $0x4c] sm:$0xf]
        %v730 = vld [vmem:[%s709 + $0x50] sm:$0xf]
        %v731 = vld [vmem:[%s709 + $0x54] sm:$0xf]
        %v732 = vld [vmem:[%s709 + $0x58] sm:$0xf]
        %v733 = vld [vmem:[%s709 + $0x5c] sm:$0xf]
        %v734 = vld [vmem:[%s709 + $0x60] sm:$0xf]
        %v760 = vunpack.c.l.b16 %v710
        %v761 = vunpack.c.l.b16 %v711
        %v762 = vunpack.c.l.b16 %v712
        %v763 = vunpack.c.l.b16 %v713
        %v764 = vunpack.c.l.b16 %v714
        %v765 = vunpack.c.l.b16 %v715
        %v766 = vunpack.c.l.b16 %v716
        %v767 = vunpack.c.l.b16 %v717
        %v768 = vunpack.c.l.b16 %v718
        %v769 = vunpack.c.l.b16 %v719
        %v770 = vunpack.c.l.b16 %v720
        %v771 = vunpack.c.l.b16 %v721
        %v772 = vunpack.c.l.b16 %v722
        %v773 = vunpack.c.l.b16 %v723
        %v774 = vunpack.c.l.b16 %v724
        %v775 = vunpack.c.l.b16 %v725
        %v776 = vunpack.c.l.b16 %v726
        %v777 = vunpack.c.l.b16 %v727
        %v778 = vunpack.c.l.b16 %v728
        %v779 = vunpack.c.l.b16 %v729
        %v780 = vunpack.c.l.b16 %v730
        %v781 = vunpack.c.l.b16 %v731
        %v782 = vunpack.c.l.b16 %v732
        %v783 = vunpack.c.l.b16 %v733
        %v784 = vunpack.c.l.b16 %v734
        %v785 = vpack.c.b16 %v761, %v760
        %v786 = vpack.c.b16 %v763, %v762
        %v787 = vpack.c.b16 %v765, %v764
        %v788 = vpack.c.b16 %v767, %v766
        %v789 = vpack.c.b16 %v769, %v768
        %v790 = vpack.c.b16 %v771, %v770
        %v791 = vpack.c.b16 %v773, %v772
        %v792 = vpack.c.b16 %v775, %v774
        %v793 = vpack.c.b16 %v777, %v776
        %v794 = vpack.c.b16 %v779, %v778
        %v795 = vpack.c.b16 %v781, %v780
        %v796 = vpack.c.b16 %v783, %v782
        %v797 = vpack.c.b16 %v784, %v784
        %v799 = vsel %vm589, %v785, 0
        %v802 = vsel %vm589, %v786, 0
        %v805 = vsel %vm589, %v787, 0
        %v808 = vsel %vm589, %v788, 0
        %v811 = vsel %vm589, %v789, 0
        %v814 = vsel %vm589, %v790, 0
        %v817 = vsel %vm589, %v791, 0
        %v820 = vsel %vm589, %v792, 0
        %v823 = vsel %vm589, %v793, 0
        %v826 = vsel %vm589, %v794, 0
        %v829 = vsel %vm589, %v795, 0
        %v832 = vsel %vm589, %v796, 0
        %v835 = vsel %vm589, %v797, 0
        %837 = vmatpush.bf16.msra.mxu0 0
        %838 = vmatpush.bf16.msra.mxu0 0
        %839 = vmatpush.bf16.msra.mxu0 0
        %840 = vmatpush.bf16.msra.mxu0 %v634
        %841 = vmatpush.bf16.msra.mxu0 %v583
        %842 = vmatpush.bf16.msra.mxu0 %v582
        %843 = vmatpush.bf16.msra.mxu0 %v581
        %844 = vmatpush.bf16.msra.mxu0 %v580
        %845 = vmatmul.bf16.gmra.mxu0 %v799
        %v846 = vpop.f32.mrf.mxu0
        %v847 = vadd.f32 0.0, %v846
        %v848 = vpop.f32.mrf.mxu0
        %v849 = vadd.f32 0.0, %v848
        %850 = vmatmul.bf16.gmra.mxu0 %v802
        %v851 = vpop.f32.mrf.mxu0
        %v852 = vadd.f32 0.0, %v851
        %v853 = vpop.f32.mrf.mxu0
        %v854 = vadd.f32 0.0, %v853
        %855 = vmatmul.bf16.gmra.mxu0 %v805
        %v856 = vpop.f32.mrf.mxu0
        %v857 = vadd.f32 0.0, %v856
        %v858 = vpop.f32.mrf.mxu0
        %v859 = vadd.f32 0.0, %v858
        %860 = vmatmul.bf16.gmra.mxu0 %v808
        %v861 = vpop.f32.mrf.mxu0
        %v862 = vadd.f32 0.0, %v861
        %v863 = vpop.f32.mrf.mxu0
        %v864 = vadd.f32 0.0, %v863
        %865 = vmatmul.bf16.gmra.mxu0 %v811
        %v866 = vpop.f32.mrf.mxu0
        %v867 = vadd.f32 0.0, %v866
        %v868 = vpop.f32.mrf.mxu0
        %v869 = vadd.f32 0.0, %v868
        %870 = vmatmul.bf16.gmra.mxu0 %v814
        %v871 = vpop.f32.mrf.mxu0
        %v872 = vadd.f32 0.0, %v871
        %v873 = vpop.f32.mrf.mxu0
        %v874 = vadd.f32 0.0, %v873
        %875 = vmatmul.bf16.gmra.mxu0 %v817
        %v876 = vpop.f32.mrf.mxu0
        %v877 = vadd.f32 0.0, %v876
        %v878 = vpop.f32.mrf.mxu0
        %v879 = vadd.f32 0.0, %v878
        %880 = vmatmul.bf16.gmra.mxu0 %v820
        %v881 = vpop.f32.mrf.mxu0
        %v882 = vadd.f32 0.0, %v881
        %v883 = vpop.f32.mrf.mxu0
        %v884 = vadd.f32 0.0, %v883
        %885 = vmatmul.bf16.gmra.mxu0 %v823
        %v886 = vpop.f32.mrf.mxu0
        %v887 = vadd.f32 0.0, %v886
        %v888 = vpop.f32.mrf.mxu0
        %v889 = vadd.f32 0.0, %v888
        %890 = vmatmul.bf16.gmra.mxu0 %v826
        %v891 = vpop.f32.mrf.mxu0
        %v892 = vadd.f32 0.0, %v891
        %v893 = vpop.f32.mrf.mxu0
        %v894 = vadd.f32 0.0, %v893
        %895 = vmatmul.bf16.gmra.mxu0 %v829
        %v896 = vpop.f32.mrf.mxu0
        %v897 = vadd.f32 0.0, %v896
        %v898 = vpop.f32.mrf.mxu0
        %v899 = vadd.f32 0.0, %v898
        %900 = vmatmul.bf16.gmra.mxu0 %v832
        %v901 = vpop.f32.mrf.mxu0
        %v902 = vadd.f32 0.0, %v901
        %v903 = vpop.f32.mrf.mxu0
        %v904 = vadd.f32 0.0, %v903
        %905 = vmatmul.bf16.gmra.mxu0 %v835
        %v906 = vpop.f32.mrf.mxu0
        %v907 = vadd.f32 0.0, %v906
        %v908 = vpop.f32.mrf.mxu0
        %909 = vdwg.mxu0
        %s910 = scalar_lea.vmem %s431, 200 [#allocation2]
        %v911 = vld [vmem:[%s910] sm:$0xf]
        %v912 = vld [vmem:[%s910 + $0x4] sm:$0xf]
        %v913 = vld [vmem:[%s910 + $0x8] sm:$0xf]
        %v914 = vld [vmem:[%s910 + $0xc] sm:$0xf]
        %v915 = vld [vmem:[%s910 + $0x10] sm:$0xf]
        %v916 = vld [vmem:[%s910 + $0x14] sm:$0xf]
        %v917 = vld [vmem:[%s910 + $0x18] sm:$0xf]
        %v918 = vld [vmem:[%s910 + $0x1c] sm:$0xf]
        %v919 = vld [vmem:[%s910 + $0x20] sm:$0xf]
        %v920 = vld [vmem:[%s910 + $0x24] sm:$0xf]
        %v921 = vld [vmem:[%s910 + $0x28] sm:$0xf]
        %v922 = vld [vmem:[%s910 + $0x2c] sm:$0xf]
        %v923 = vld [vmem:[%s910 + $0x30] sm:$0xf]
        %v924 = vld [vmem:[%s910 + $0x34] sm:$0xf]
        %v925 = vld [vmem:[%s910 + $0x38] sm:$0xf]
        %v926 = vld [vmem:[%s910 + $0x3c] sm:$0xf]
        %v927 = vld [vmem:[%s910 + $0x40] sm:$0xf]
        %v928 = vld [vmem:[%s910 + $0x44] sm:$0xf]
        %v929 = vld [vmem:[%s910 + $0x48] sm:$0xf]
        %v930 = vld [vmem:[%s910 + $0x4c] sm:$0xf]
        %v931 = vld [vmem:[%s910 + $0x50] sm:$0xf]
        %v932 = vld [vmem:[%s910 + $0x54] sm:$0xf]
        %v933 = vld [vmem:[%s910 + $0x58] sm:$0xf]
        %v934 = vld [vmem:[%s910 + $0x5c] sm:$0xf]
        %v935 = vld [vmem:[%s910 + $0x60] sm:$0xf]
        %v961 = vunpack.c.l.b16 %v911
        %v962 = vunpack.c.l.b16 %v912
        %v963 = vunpack.c.l.b16 %v913
        %v964 = vunpack.c.l.b16 %v914
        %v965 = vunpack.c.l.b16 %v915
        %v966 = vunpack.c.l.b16 %v916
        %v967 = vunpack.c.l.b16 %v917
        %v968 = vunpack.c.l.b16 %v918
        %v969 = vunpack.c.l.b16 %v919
        %v970 = vunpack.c.l.b16 %v920
        %v971 = vunpack.c.l.b16 %v921
        %v972 = vunpack.c.l.b16 %v922
        %v973 = vunpack.c.l.b16 %v923
        %v974 = vunpack.c.l.b16 %v924
        %v975 = vunpack.c.l.b16 %v925
        %v976 = vunpack.c.l.b16 %v926
        %v977 = vunpack.c.l.b16 %v927
        %v978 = vunpack.c.l.b16 %v928
        %v979 = vunpack.c.l.b16 %v929
        %v980 = vunpack.c.l.b16 %v930
        %v981 = vunpack.c.l.b16 %v931
        %v982 = vunpack.c.l.b16 %v932
        %v983 = vunpack.c.l.b16 %v933
        %v984 = vunpack.c.l.b16 %v934
        %v985 = vunpack.c.l.b16 %v935
        %v986 = vpack.c.b16 %v962, %v961
        %v987 = vpack.c.b16 %v964, %v963
        %v988 = vpack.c.b16 %v966, %v965
        %v989 = vpack.c.b16 %v968, %v967
        %v990 = vpack.c.b16 %v970, %v969
        %v991 = vpack.c.b16 %v972, %v971
        %v992 = vpack.c.b16 %v974, %v973
        %v993 = vpack.c.b16 %v976, %v975
        %v994 = vpack.c.b16 %v978, %v977
        %v995 = vpack.c.b16 %v980, %v979
        %v996 = vpack.c.b16 %v982, %v981
        %v997 = vpack.c.b16 %v984, %v983
        %v998 = vpack.c.b16 %v985, %v985
        %v1000 = vsel %vm589, %v986, 0
        %v1003 = vsel %vm589, %v987, 0
        %v1006 = vsel %vm589, %v988, 0
        %v1009 = vsel %vm589, %v989, 0
        %v1012 = vsel %vm589, %v990, 0
        %v1015 = vsel %vm589, %v991, 0
        %v1018 = vsel %vm589, %v992, 0
        %v1021 = vsel %vm589, %v993, 0
        %v1024 = vsel %vm589, %v994, 0
        %v1027 = vsel %vm589, %v995, 0
        %v1030 = vsel %vm589, %v996, 0
        %v1033 = vsel %vm589, %v997, 0
        %v1036 = vsel %vm589, %v998, 0
        %1038 = vmatpush.bf16.msra.mxu0 0
        %1039 = vmatpush.bf16.msra.mxu0 0
        %1040 = vmatpush.bf16.msra.mxu0 0
        %1041 = vmatpush.bf16.msra.mxu0 %v634
        %1042 = vmatpush.bf16.msra.mxu0 %v583
        %1043 = vmatpush.bf16.msra.mxu0 %v582
        %1044 = vmatpush.bf16.msra.mxu0 %v581
        %1045 = vmatpush.bf16.msra.mxu0 %v580
        %1046 = vmatmul.bf16.gmra.mxu0 %v1000
        %v1047 = vpop.f32.mrf.mxu0
        %v1048 = vadd.f32 0.0, %v1047
        %v1049 = vpop.f32.mrf.mxu0
        %v1050 = vadd.f32 0.0, %v1049
        %1051 = vmatmul.bf16.gmra.mxu0 %v1003
        %v1052 = vpop.f32.mrf.mxu0
        %v1053 = vadd.f32 0.0, %v1052
        %v1054 = vpop.f32.mrf.mxu0
        %v1055 = vadd.f32 0.0, %v1054
        %1056 = vmatmul.bf16.gmra.mxu0 %v1006
        %v1057 = vpop.f32.mrf.mxu0
        %v1058 = vadd.f32 0.0, %v1057
        %v1059 = vpop.f32.mrf.mxu0
        %v1060 = vadd.f32 0.0, %v1059
        %1061 = vmatmul.bf16.gmra.mxu0 %v1009
        %v1062 = vpop.f32.mrf.mxu0
        %v1063 = vadd.f32 0.0, %v1062
        %v1064 = vpop.f32.mrf.mxu0
        %v1065 = vadd.f32 0.0, %v1064
        %1066 = vmatmul.bf16.gmra.mxu0 %v1012
        %v1067 = vpop.f32.mrf.mxu0
        %v1068 = vadd.f32 0.0, %v1067
        %v1069 = vpop.f32.mrf.mxu0
        %v1070 = vadd.f32 0.0, %v1069
        %1071 = vmatmul.bf16.gmra.mxu0 %v1015
        %v1072 = vpop.f32.mrf.mxu0
        %v1073 = vadd.f32 0.0, %v1072
        %v1074 = vpop.f32.mrf.mxu0
        %v1075 = vadd.f32 0.0, %v1074
        %1076 = vmatmul.bf16.gmra.mxu0 %v1018
        %v1077 = vpop.f32.mrf.mxu0
        %v1078 = vadd.f32 0.0, %v1077
        %v1079 = vpop.f32.mrf.mxu0
        %v1080 = vadd.f32 0.0, %v1079
        %1081 = vmatmul.bf16.gmra.mxu0 %v1021
        %v1082 = vpop.f32.mrf.mxu0
        %v1083 = vadd.f32 0.0, %v1082
        %v1084 = vpop.f32.mrf.mxu0
        %v1085 = vadd.f32 0.0, %v1084
        %1086 = vmatmul.bf16.gmra.mxu0 %v1024
        %v1087 = vpop.f32.mrf.mxu0
        %v1088 = vadd.f32 0.0, %v1087
        %v1089 = vpop.f32.mrf.mxu0
        %v1090 = vadd.f32 0.0, %v1089
        %1091 = vmatmul.bf16.gmra.mxu0 %v1027
        %v1092 = vpop.f32.mrf.mxu0
        %v1093 = vadd.f32 0.0, %v1092
        %v1094 = vpop.f32.mrf.mxu0
        %v1095 = vadd.f32 0.0, %v1094
        %1096 = vmatmul.bf16.gmra.mxu0 %v1030
        %v1097 = vpop.f32.mrf.mxu0
        %v1098 = vadd.f32 0.0, %v1097
        %v1099 = vpop.f32.mrf.mxu0
        %v1100 = vadd.f32 0.0, %v1099
        %1101 = vmatmul.bf16.gmra.mxu0 %v1033
        %v1102 = vpop.f32.mrf.mxu0
        %v1103 = vadd.f32 0.0, %v1102
        %v1104 = vpop.f32.mrf.mxu0
        %v1105 = vadd.f32 0.0, %v1104
        %1106 = vmatmul.bf16.gmra.mxu0 %v1036
        %v1107 = vpop.f32.mrf.mxu0
        %v1108 = vadd.f32 0.0, %v1107
        %v1109 = vpop.f32.mrf.mxu0
        %1110 = vdwg.mxu0
        %s1111 = scalar_lea.vmem %s431, 300 [#allocation2]
        %v1112 = vld [vmem:[%s1111] sm:$0xf]
        %v1113 = vld [vmem:[%s1111 + $0x4] sm:$0xf]
        %v1114 = vld [vmem:[%s1111 + $0x8] sm:$0xf]
        %v1115 = vld [vmem:[%s1111 + $0xc] sm:$0xf]
        %v1116 = vld [vmem:[%s1111 + $0x10] sm:$0xf]
        %v1117 = vld [vmem:[%s1111 + $0x14] sm:$0xf]
        %v1118 = vld [vmem:[%s1111 + $0x18] sm:$0xf]
        %v1119 = vld [vmem:[%s1111 + $0x1c] sm:$0xf]
        %v1120 = vld [vmem:[%s1111 + $0x20] sm:$0xf]
        %v1121 = vld [vmem:[%s1111 + $0x24] sm:$0xf]
        %v1122 = vld [vmem:[%s1111 + $0x28] sm:$0xf]
        %v1123 = vld [vmem:[%s1111 + $0x2c] sm:$0xf]
        %v1124 = vld [vmem:[%s1111 + $0x30] sm:$0xf]
        %v1125 = vld [vmem:[%s1111 + $0x34] sm:$0xf]
        %v1126 = vld [vmem:[%s1111 + $0x38] sm:$0xf]
        %v1127 = vld [vmem:[%s1111 + $0x3c] sm:$0xf]
        %v1128 = vld [vmem:[%s1111 + $0x40] sm:$0xf]
        %v1129 = vld [vmem:[%s1111 + $0x44] sm:$0xf]
        %v1130 = vld [vmem:[%s1111 + $0x48] sm:$0xf]
        %v1131 = vld [vmem:[%s1111 + $0x4c] sm:$0xf]
        %v1132 = vld [vmem:[%s1111 + $0x50] sm:$0xf]
        %v1133 = vld [vmem:[%s1111 + $0x54] sm:$0xf]
        %v1134 = vld [vmem:[%s1111 + $0x58] sm:$0xf]
        %v1135 = vld [vmem:[%s1111 + $0x5c] sm:$0xf]
        %v1136 = vld [vmem:[%s1111 + $0x60] sm:$0xf]
        %v1162 = vunpack.c.l.b16 %v1112
        %v1163 = vunpack.c.l.b16 %v1113
        %v1164 = vunpack.c.l.b16 %v1114
        %v1165 = vunpack.c.l.b16 %v1115
        %v1166 = vunpack.c.l.b16 %v1116
        %v1167 = vunpack.c.l.b16 %v1117
        %v1168 = vunpack.c.l.b16 %v1118
        %v1169 = vunpack.c.l.b16 %v1119
        %v1170 = vunpack.c.l.b16 %v1120
        %v1171 = vunpack.c.l.b16 %v1121
        %v1172 = vunpack.c.l.b16 %v1122
        %v1173 = vunpack.c.l.b16 %v1123
        %v1174 = vunpack.c.l.b16 %v1124
        %v1175 = vunpack.c.l.b16 %v1125
        %v1176 = vunpack.c.l.b16 %v1126
        %v1177 = vunpack.c.l.b16 %v1127
        %v1178 = vunpack.c.l.b16 %v1128
        %v1179 = vunpack.c.l.b16 %v1129
        %v1180 = vunpack.c.l.b16 %v1130
        %v1181 = vunpack.c.l.b16 %v1131
        %v1182 = vunpack.c.l.b16 %v1132
        %v1183 = vunpack.c.l.b16 %v1133
        %v1184 = vunpack.c.l.b16 %v1134
        %v1185 = vunpack.c.l.b16 %v1135
        %v1186 = vunpack.c.l.b16 %v1136
        %v1187 = vpack.c.b16 %v1163, %v1162
        %v1188 = vpack.c.b16 %v1165, %v1164
        %v1189 = vpack.c.b16 %v1167, %v1166
        %v1190 = vpack.c.b16 %v1169, %v1168
        %v1191 = vpack.c.b16 %v1171, %v1170
        %v1192 = vpack.c.b16 %v1173, %v1172
        %v1193 = vpack.c.b16 %v1175, %v1174
        %v1194 = vpack.c.b16 %v1177, %v1176
        %v1195 = vpack.c.b16 %v1179, %v1178
        %v1196 = vpack.c.b16 %v1181, %v1180
        %v1197 = vpack.c.b16 %v1183, %v1182
        %v1198 = vpack.c.b16 %v1185, %v1184
        %v1199 = vpack.c.b16 %v1186, %v1186
        %v1201 = vsel %vm589, %v1187, 0
        %v1204 = vsel %vm589, %v1188, 0
        %v1207 = vsel %vm589, %v1189, 0
        %v1210 = vsel %vm589, %v1190, 0
        %v1213 = vsel %vm589, %v1191, 0
        %v1216 = vsel %vm589, %v1192, 0
        %v1219 = vsel %vm589, %v1193, 0
        %v1222 = vsel %vm589, %v1194, 0
        %v1225 = vsel %vm589, %v1195, 0
        %v1228 = vsel %vm589, %v1196, 0
        %v1231 = vsel %vm589, %v1197, 0
        %v1234 = vsel %vm589, %v1198, 0
        %v1237 = vsel %vm589, %v1199, 0
        %1239 = vmatpush.bf16.msra.mxu0 0
        %1240 = vmatpush.bf16.msra.mxu0 0
        %1241 = vmatpush.bf16.msra.mxu0 0
        %1242 = vmatpush.bf16.msra.mxu0 %v634
        %1243 = vmatpush.bf16.msra.mxu0 %v583
        %1244 = vmatpush.bf16.msra.mxu0 %v582
        %1245 = vmatpush.bf16.msra.mxu0 %v581
        %1246 = vmatpush.bf16.msra.mxu0 %v580
        %1247 = vmatmul.bf16.gmra.mxu0 %v1201
        %v1248 = vpop.f32.mrf.mxu0
        %v1249 = vadd.f32 0.0, %v1248
        %v1250 = vpop.f32.mrf.mxu0
        %v1251 = vadd.f32 0.0, %v1250
        %1252 = vmatmul.bf16.gmra.mxu0 %v1204
        %v1253 = vpop.f32.mrf.mxu0
        %v1254 = vadd.f32 0.0, %v1253
        %v1255 = vpop.f32.mrf.mxu0
        %v1256 = vadd.f32 0.0, %v1255
        %1257 = vmatmul.bf16.gmra.mxu0 %v1207
        %v1258 = vpop.f32.mrf.mxu0
        %v1259 = vadd.f32 0.0, %v1258
        %v1260 = vpop.f32.mrf.mxu0
        %v1261 = vadd.f32 0.0, %v1260
        %1262 = vmatmul.bf16.gmra.mxu0 %v1210
        %v1263 = vpop.f32.mrf.mxu0
        %v1264 = vadd.f32 0.0, %v1263
        %v1265 = vpop.f32.mrf.mxu0
        %v1266 = vadd.f32 0.0, %v1265
        %1267 = vmatmul.bf16.gmra.mxu0 %v1213
        %v1268 = vpop.f32.mrf.mxu0
        %v1269 = vadd.f32 0.0, %v1268
        %v1270 = vpop.f32.mrf.mxu0
        %v1271 = vadd.f32 0.0, %v1270
        %1272 = vmatmul.bf16.gmra.mxu0 %v1216
        %v1273 = vpop.f32.mrf.mxu0
        %v1274 = vadd.f32 0.0, %v1273
        %v1275 = vpop.f32.mrf.mxu0
        %v1276 = vadd.f32 0.0, %v1275
        %1277 = vmatmul.bf16.gmra.mxu0 %v1219
        %v1278 = vpop.f32.mrf.mxu0
        %v1279 = vadd.f32 0.0, %v1278
        %v1280 = vpop.f32.mrf.mxu0
        %v1281 = vadd.f32 0.0, %v1280
        %1282 = vmatmul.bf16.gmra.mxu0 %v1222
        %v1283 = vpop.f32.mrf.mxu0
        %v1284 = vadd.f32 0.0, %v1283
        %v1285 = vpop.f32.mrf.mxu0
        %v1286 = vadd.f32 0.0, %v1285
        %1287 = vmatmul.bf16.gmra.mxu0 %v1225
        %v1288 = vpop.f32.mrf.mxu0
        %v1289 = vadd.f32 0.0, %v1288
        %v1290 = vpop.f32.mrf.mxu0
        %v1291 = vadd.f32 0.0, %v1290
        %1292 = vmatmul.bf16.gmra.mxu0 %v1228
        %v1293 = vpop.f32.mrf.mxu0
        %v1294 = vadd.f32 0.0, %v1293
        %v1295 = vpop.f32.mrf.mxu0
        %v1296 = vadd.f32 0.0, %v1295
        %1297 = vmatmul.bf16.gmra.mxu0 %v1231
        %v1298 = vpop.f32.mrf.mxu0
        %v1299 = vadd.f32 0.0, %v1298
        %v1300 = vpop.f32.mrf.mxu0
        %v1301 = vadd.f32 0.0, %v1300
        %1302 = vmatmul.bf16.gmra.mxu0 %v1234
        %v1303 = vpop.f32.mrf.mxu0
        %v1304 = vadd.f32 0.0, %v1303
        %v1305 = vpop.f32.mrf.mxu0
        %v1306 = vadd.f32 0.0, %v1305
        %1307 = vmatmul.bf16.gmra.mxu0 %v1237
        %v1308 = vpop.f32.mrf.mxu0
        %v1309 = vadd.f32 0.0, %v1308
        %v1310 = vpop.f32.mrf.mxu0
        %1311 = vdwg.mxu0
        %v1312 = vmax.f32 %v646, %v847
        %v1313 = vmax.f32 %v648, %v849
        %v1314 = vmax.f32 %v651, %v852
        %v1315 = vmax.f32 %v653, %v854
        %v1316 = vmax.f32 %v656, %v857
        %v1317 = vmax.f32 %v658, %v859
        %v1318 = vmax.f32 %v661, %v862
        %v1319 = vmax.f32 %v663, %v864
        %v1320 = vmax.f32 %v666, %v867
        %v1321 = vmax.f32 %v668, %v869
        %v1322 = vmax.f32 %v671, %v872
        %v1323 = vmax.f32 %v673, %v874
        %v1324 = vmax.f32 %v676, %v877
        %v1325 = vmax.f32 %v678, %v879
        %v1326 = vmax.f32 %v681, %v882
        %v1327 = vmax.f32 %v683, %v884
        %v1328 = vmax.f32 %v686, %v887
        %v1329 = vmax.f32 %v688, %v889
        %v1330 = vmax.f32 %v691, %v892
        %v1331 = vmax.f32 %v693, %v894
        %v1332 = vmax.f32 %v696, %v897
        %v1333 = vmax.f32 %v698, %v899
        %v1334 = vmax.f32 %v701, %v902
        %v1335 = vmax.f32 %v703, %v904
        %v1336 = vmax.f32 %v706, %v907
        %v1337 = vmax.f32 %v1048, %v1249
        %v1338 = vmax.f32 %v1050, %v1251
        %v1339 = vmax.f32 %v1053, %v1254
        %v1340 = vmax.f32 %v1055, %v1256
        %v1341 = vmax.f32 %v1058, %v1259
        %v1342 = vmax.f32 %v1060, %v1261
        %v1343 = vmax.f32 %v1063, %v1264
        %v1344 = vmax.f32 %v1065, %v1266
        %v1345 = vmax.f32 %v1068, %v1269
        %v1346 = vmax.f32 %v1070, %v1271
        %v1347 = vmax.f32 %v1073, %v1274
        %v1348 = vmax.f32 %v1075, %v1276
        %v1349 = vmax.f32 %v1078, %v1279
        %v1350 = vmax.f32 %v1080, %v1281
        %v1351 = vmax.f32 %v1083, %v1284
        %v1352 = vmax.f32 %v1085, %v1286
        %v1353 = vmax.f32 %v1088, %v1289
        %v1354 = vmax.f32 %v1090, %v1291
        %v1355 = vmax.f32 %v1093, %v1294
        %v1356 = vmax.f32 %v1095, %v1296
        %v1357 = vmax.f32 %v1098, %v1299
        %v1358 = vmax.f32 %v1100, %v1301
        %v1359 = vmax.f32 %v1103, %v1304
        %v1360 = vmax.f32 %v1105, %v1306
        %v1361 = vmax.f32 %v1108, %v1309
        %v1362 = vmax.f32 %v1312, %v1337
        %v1363 = vmax.f32 %v1313, %v1338
        %v1364 = vmax.f32 %v1314, %v1339
        %v1365 = vmax.f32 %v1315, %v1340
        %v1366 = vmax.f32 %v1316, %v1341
        %v1367 = vmax.f32 %v1317, %v1342
        %v1368 = vmax.f32 %v1318, %v1343
        %v1369 = vmax.f32 %v1319, %v1344
        %v1370 = vmax.f32 %v1320, %v1345
        %v1371 = vmax.f32 %v1321, %v1346
        %v1372 = vmax.f32 %v1322, %v1347
        %v1373 = vmax.f32 %v1323, %v1348
        %v1374 = vmax.f32 %v1324, %v1349
        %v1375 = vmax.f32 %v1325, %v1350
        %v1376 = vmax.f32 %v1326, %v1351
        %v1377 = vmax.f32 %v1327, %v1352
        %v1378 = vmax.f32 %v1328, %v1353
        %v1379 = vmax.f32 %v1329, %v1354
        %v1380 = vmax.f32 %v1330, %v1355
        %v1381 = vmax.f32 %v1331, %v1356
        %v1382 = vmax.f32 %v1332, %v1357
        %v1383 = vmax.f32 %v1333, %v1358
        %v1384 = vmax.f32 %v1334, %v1359
        %v1385 = vmax.f32 %v1335, %v1360
        %v1386 = vmax.f32 %v1336, %v1361
        %v1387 = vld [vmem:[%s2] sm:$0x1]
        %v1389 = vperm.slane %v1387, 0
        %v1391 = vadd.f32 %v1362, %v1389
        %v1392 = vadd.f32 %v1363, %v1389
        %v1393 = vadd.f32 %v1364, %v1389
        %v1394 = vadd.f32 %v1365, %v1389
        %v1395 = vadd.f32 %v1366, %v1389
        %v1396 = vadd.f32 %v1367, %v1389
        %v1397 = vadd.f32 %v1368, %v1389
        %v1398 = vadd.f32 %v1369, %v1389
        %v1399 = vadd.f32 %v1370, %v1389
        %v1400 = vadd.f32 %v1371, %v1389
        %v1401 = vadd.f32 %v1372, %v1389
        %v1402 = vadd.f32 %v1373, %v1389
        %v1403 = vadd.f32 %v1374, %v1389
        %v1404 = vadd.f32 %v1375, %v1389
        %v1405 = vadd.f32 %v1376, %v1389
        %v1406 = vadd.f32 %v1377, %v1389
        %v1407 = vadd.f32 %v1378, %v1389
        %v1408 = vadd.f32 %v1379, %v1389
        %v1409 = vadd.f32 %v1380, %v1389
        %v1410 = vadd.f32 %v1381, %v1389
        %v1411 = vadd.f32 %v1382, %v1389
        %v1412 = vadd.f32 %v1383, %v1389
        %v1413 = vadd.f32 %v1384, %v1389
        %v1414 = vadd.f32 %v1385, %v1389
        %v1415 = vadd.f32 %v1386, %v1389
        %v1416 = vmax.f32 %v1391, 0.0
        %v1417 = vmax.f32 %v1392, 0.0
        %v1418 = vmax.f32 %v1393, 0.0
        %v1419 = vmax.f32 %v1394, 0.0
        %v1420 = vmax.f32 %v1395, 0.0
        %v1421 = vmax.f32 %v1396, 0.0
        %v1422 = vmax.f32 %v1397, 0.0
        %v1423 = vmax.f32 %v1398, 0.0
        %v1424 = vmax.f32 %v1399, 0.0
        %v1425 = vmax.f32 %v1400, 0.0
        %v1426 = vmax.f32 %v1401, 0.0
        %v1427 = vmax.f32 %v1402, 0.0
        %v1428 = vmax.f32 %v1403, 0.0
        %v1429 = vmax.f32 %v1404, 0.0
        %v1430 = vmax.f32 %v1405, 0.0
        %v1431 = vmax.f32 %v1406, 0.0
        %v1432 = vmax.f32 %v1407, 0.0
        %v1433 = vmax.f32 %v1408, 0.0
        %v1434 = vmax.f32 %v1409, 0.0
        %v1435 = vmax.f32 %v1410, 0.0
        %v1436 = vmax.f32 %v1411, 0.0
        %v1437 = vmax.f32 %v1412, 0.0
        %v1438 = vmax.f32 %v1413, 0.0
        %v1439 = vmax.f32 %v1414, 0.0
        %v1440 = vmax.f32 %v1415, 0.0
        %v1441 = vpack.c.bf16 %v1416, %v1416
        %v1442 = vpack.c.bf16 %v1417, %v1417
        %v1443 = vpack.c.bf16 %v1418, %v1418
        %v1444 = vpack.c.bf16 %v1419, %v1419
        %v1445 = vpack.c.bf16 %v1420, %v1420
        %v1446 = vpack.c.bf16 %v1421, %v1421
        %v1447 = vpack.c.bf16 %v1422, %v1422
        %v1448 = vpack.c.bf16 %v1423, %v1423
        %v1449 = vpack.c.bf16 %v1424, %v1424
        %v1450 = vpack.c.bf16 %v1425, %v1425
        %v1451 = vpack.c.bf16 %v1426, %v1426
        %v1452 = vpack.c.bf16 %v1427, %v1427
        %v1453 = vpack.c.bf16 %v1428, %v1428
        %v1454 = vpack.c.bf16 %v1429, %v1429
        %v1455 = vpack.c.bf16 %v1430, %v1430
        %v1456 = vpack.c.bf16 %v1431, %v1431
        %v1457 = vpack.c.bf16 %v1432, %v1432
        %v1458 = vpack.c.bf16 %v1433, %v1433
        %v1459 = vpack.c.bf16 %v1434, %v1434
        %v1460 = vpack.c.bf16 %v1435, %v1435
        %v1461 = vpack.c.bf16 %v1436, %v1436
        %v1462 = vpack.c.bf16 %v1437, %v1437
        %v1463 = vpack.c.bf16 %v1438, %v1438
        %v1464 = vpack.c.bf16 %v1439, %v1439
        %v1465 = vpack.c.bf16 %v1440, %v1440
        %vm1466 = vcmask 44032
        %1467 = vst.msk [vmem:[%s450] sm:$0xf] %vm1466, %v1441
        %1468 = vst.msk [vmem:[%s450 + $0x4] sm:$0xf] %vm1466, %v1442
        %1469 = vst.msk [vmem:[%s450 + $0x8] sm:$0xf] %vm1466, %v1443
        %1470 = vst.msk [vmem:[%s450 + $0xc] sm:$0xf] %vm1466, %v1444
        %1471 = vst.msk [vmem:[%s450 + $0x10] sm:$0xf] %vm1466, %v1445
        %1472 = vst.msk [vmem:[%s450 + $0x14] sm:$0xf] %vm1466, %v1446
        %1473 = vst.msk [vmem:[%s450 + $0x18] sm:$0xf] %vm1466, %v1447
        %1474 = vst.msk [vmem:[%s450 + $0x1c] sm:$0xf] %vm1466, %v1448
        %1475 = vst.msk [vmem:[%s450 + $0x20] sm:$0xf] %vm1466, %v1449
        %1476 = vst.msk [vmem:[%s450 + $0x24] sm:$0xf] %vm1466, %v1450
        %1477 = vst.msk [vmem:[%s450 + $0x28] sm:$0xf] %vm1466, %v1451
        %1478 = vst.msk [vmem:[%s450 + $0x2c] sm:$0xf] %vm1466, %v1452
        %1479 = vst.msk [vmem:[%s450 + $0x30] sm:$0xf] %vm1466, %v1453
        %1480 = vst.msk [vmem:[%s450 + $0x34] sm:$0xf] %vm1466, %v1454
        %1481 = vst.msk [vmem:[%s450 + $0x38] sm:$0xf] %vm1466, %v1455
        %1482 = vst.msk [vmem:[%s450 + $0x3c] sm:$0xf] %vm1466, %v1456
        %1483 = vst.msk [vmem:[%s450 + $0x40] sm:$0xf] %vm1466, %v1457
        %1484 = vst.msk [vmem:[%s450 + $0x44] sm:$0xf] %vm1466, %v1458
        %1485 = vst.msk [vmem:[%s450 + $0x48] sm:$0xf] %vm1466, %v1459
        %1486 = vst.msk [vmem:[%s450 + $0x4c] sm:$0xf] %vm1466, %v1460
        %1487 = vst.msk [vmem:[%s450 + $0x50] sm:$0xf] %vm1466, %v1461
        %1488 = vst.msk [vmem:[%s450 + $0x54] sm:$0xf] %vm1466, %v1462
        %1489 = vst.msk [vmem:[%s450 + $0x58] sm:$0xf] %vm1466, %v1463
        %1490 = vst.msk [vmem:[%s450 + $0x5c] sm:$0xf] %vm1466, %v1464
        %1491 = vst.msk [vmem:[%s450 + $0x60] sm:$0xf] %vm1466, %v1465
        %s1492 = sand.u32 %s90, 1
        %s1493 = sand.u32 %s90, 1
        %s1494 = smul.addr %s1493, 100
        %s1495 = scalar_lea.vmem [#allocation3], %s1494
        // Predicated region
        $region95: #{net_forward.3} parent=89 // pred_check
          %p1496 = pneg %p100
        $region96: #{net_forward.3} parent=89 // pred_check_branch
          %1498 = sbr.rel (%p1496) target = $region98
        $region97: #{net_forward.3} parent=89 // pred_region
          %s1499 = smul.u32 25, %s14
          %s1500 = ssub.s32 49, %s1499
          %p1501 = scmp.lt.s32.totalorder %s1500, 25
          %s1502 = scalar_select %p1501, %s1500, 25
          %s1503 = smul.u32 4, %s1502
          %p1504 = scmp.ne.s32.totalorder 0, %s1503
          %s1505 = smul.addr %s1499, 4
          %s1506 = scalar_lea.vmem %s3, %s1505
          // Predicated region
          $region99: #{net_forward.3} parent=97 // pred_check
            %p1507 = pneg %p1504
          $region100: #{net_forward.3} parent=97 // pred_check_branch
            %1509 = sbr.rel (%p1507) target = $region102
          $region101: #{net_forward.3} parent=97 // pred_region
            // Predicated region
            $region103: #{net_forward.3} parent=101 // pred_check
              _
            $region104: #{net_forward.3} parent=101 // pred_check_branch
              %1511 = sbr.rel target = $region106
            $region105: #{net_forward.3} parent=101 // pred_region
              // Predicated region
              $region125: #{net_forward.3} parent=105 // pred_check
                _
              $region126: #{net_forward.3} parent=105 // pred_check_branch
                %1610 = sbr.rel (0) target = $region128
              $region127: #{net_forward.3} parent=105 // pred_region
                %s1612 = ssub.s32 16, 1
                %s1613 = sdiv.u32.pop %s1502, 25
                %s1614 = srem.u32.pop %s1502, 25
                // While loop
                $region129: #{net_forward.3} parent=127 // loop_pre_header
                  _
                $region130: #{net_forward.3} parent=127 // loop_header
                  %s1616 = sphi 0, %s1618
                  %p1617 = scmp.ge.s32.totalorder %s1616, %s1613
                  %s1621 = sphi 0, %s1676
                  %s1622 = sphi %s1495, %s1679
                  %s1623 = sphi %s1506, %s1680
                $region131: #{net_forward.3} parent=127 // loop_header_branch
                  %1620 = sbr.rel (%p1617) target = $region135
                $region132: #{net_forward.3} parent=127 // loop_body
                  %v1624 = vld [vmem:[%s1622] sm:%s1612]
                  %1625 = vst [vmem:[%s1623] sm:%s1612] %v1624
                  %v1626 = vld [vmem:[%s1622 + $0x4] sm:%s1612]
                  %1627 = vst [vmem:[%s1623 + $0x4] sm:%s1612] %v1626
                  %v1628 = vld [vmem:[%s1622 + $0x8] sm:%s1612]
                  %1629 = vst [vmem:[%s1623 + $0x8] sm:%s1612] %v1628
                  %v1630 = vld [vmem:[%s1622 + $0xc] sm:%s1612]
                  %1631 = vst [vmem:[%s1623 + $0xc] sm:%s1612] %v1630
                  %v1632 = vld [vmem:[%s1622 + $0x10] sm:%s1612]
                  %1633 = vst [vmem:[%s1623 + $0x10] sm:%s1612] %v1632
                  %v1634 = vld [vmem:[%s1622 + $0x14] sm:%s1612]
                  %1635 = vst [vmem:[%s1623 + $0x14] sm:%s1612] %v1634
                  %v1636 = vld [vmem:[%s1622 + $0x18] sm:%s1612]
                  %1637 = vst [vmem:[%s1623 + $0x18] sm:%s1612] %v1636
                  %v1638 = vld [vmem:[%s1622 + $0x1c] sm:%s1612]
                  %1639 = vst [vmem:[%s1623 + $0x1c] sm:%s1612] %v1638
                  %v1640 = vld [vmem:[%s1622 + $0x20] sm:%s1612]
                  %1641 = vst [vmem:[%s1623 + $0x20] sm:%s1612] %v1640
                  %v1642 = vld [vmem:[%s1622 + $0x24] sm:%s1612]
                  %1643 = vst [vmem:[%s1623 + $0x24] sm:%s1612] %v1642
                  %v1644 = vld [vmem:[%s1622 + $0x28] sm:%s1612]
                  %1645 = vst [vmem:[%s1623 + $0x28] sm:%s1612] %v1644
                  %v1646 = vld [vmem:[%s1622 + $0x2c] sm:%s1612]
                  %1647 = vst [vmem:[%s1623 + $0x2c] sm:%s1612] %v1646
                  %v1648 = vld [vmem:[%s1622 + $0x30] sm:%s1612]
                  %1649 = vst [vmem:[%s1623 + $0x30] sm:%s1612] %v1648
                  %v1650 = vld [vmem:[%s1622 + $0x34] sm:%s1612]
                  %1651 = vst [vmem:[%s1623 + $0x34] sm:%s1612] %v1650
                  %v1652 = vld [vmem:[%s1622 + $0x38] sm:%s1612]
                  %1653 = vst [vmem:[%s1623 + $0x38] sm:%s1612] %v1652
                  %v1654 = vld [vmem:[%s1622 + $0x3c] sm:%s1612]
                  %1655 = vst [vmem:[%s1623 + $0x3c] sm:%s1612] %v1654
                  %v1656 = vld [vmem:[%s1622 + $0x40] sm:%s1612]
                  %1657 = vst [vmem:[%s1623 + $0x40] sm:%s1612] %v1656
                  %v1658 = vld [vmem:[%s1622 + $0x44] sm:%s1612]
                  %1659 = vst [vmem:[%s1623 + $0x44] sm:%s1612] %v1658
                  %v1660 = vld [vmem:[%s1622 + $0x48] sm:%s1612]
                  %1661 = vst [vmem:[%s1623 + $0x48] sm:%s1612] %v1660
                  %v1662 = vld [vmem:[%s1622 + $0x4c] sm:%s1612]
                  %1663 = vst [vmem:[%s1623 + $0x4c] sm:%s1612] %v1662
                  %v1664 = vld [vmem:[%s1622 + $0x50] sm:%s1612]
                  %1665 = vst [vmem:[%s1623 + $0x50] sm:%s1612] %v1664
                  %v1666 = vld [vmem:[%s1622 + $0x54] sm:%s1612]
                  %1667 = vst [vmem:[%s1623 + $0x54] sm:%s1612] %v1666
                  %v1668 = vld [vmem:[%s1622 + $0x58] sm:%s1612]
                  %1669 = vst [vmem:[%s1623 + $0x58] sm:%s1612] %v1668
                  %v1670 = vld [vmem:[%s1622 + $0x5c] sm:%s1612]
                  %1671 = vst [vmem:[%s1623 + $0x5c] sm:%s1612] %v1670
                  %v1672 = vld [vmem:[%s1622 + $0x60] sm:%s1612]
                  %1673 = vst [vmem:[%s1623 + $0x60] sm:%s1612] %v1672
                  %s1674 = sadd.s32 1, %s1621
                  %p1675 = scmp.ge.s32.totalorder %s1674, %s1613
                  %s1676 = scalar_select %p1675, 0, %s1674
                  %s1677 = smul.u32 %s1676, 100
                  %s1678 = smul.u32 %s1676, 100
                  %s1679 = scalar_lea.vmem %s1495, %s1677 [#allocation3]
                  %s1680 = scalar_lea.vmem %s1506, %s1678
                $region133: #{net_forward.3} parent=127 // loop_footer
                  %s1618 = sadd.s32 %s1616, 1
                $region134: #{net_forward.3} parent=127 // loop_footer_branch
                  %1615 = sbr.rel target = $region130
                $region135: #{net_forward.3} parent=127 // loop_exit
                  _
                %s1681 = sdiv.u32.pop %s1502, 25
                %s1682 = srem.u32.pop %s1502, 25
                %s1683 = smul.u32 %s1681, 25
                %s1684 = smul.u32 4, %s1683
                %s1685 = scalar_lea.vmem %s1495, %s1684 [#allocation3]
                %s1686 = smul.u32 4, %s1683
                %s1687 = scalar_lea.vmem %s1506, %s1686
                // While loop
                $region136: #{net_forward.3} parent=127 // loop_pre_header
                  _
                $region137: #{net_forward.3} parent=127 // loop_header
                  %s1689 = sphi 0, %s1691
                  %p1690 = scmp.ge.s32.totalorder %s1689, %s1682
                  %s1694 = sphi 0, %s1701
                  %s1695 = sphi %s1685, %s1704
                  %s1696 = sphi %s1687, %s1705
                $region138: #{net_forward.3} parent=127 // loop_header_branch
                  %1693 = sbr.rel (%p1690) target = $region142
                $region139: #{net_forward.3} parent=127 // loop_body
                  %v1697 = vld [vmem:[%s1695] sm:%s1612]
                  %1698 = vst [vmem:[%s1696] sm:%s1612] %v1697
                  %s1699 = sadd.s32 1, %s1694
                  %p1700 = scmp.ge.s32.totalorder %s1699, %s1682
                  %s1701 = scalar_select %p1700, 0, %s1699
                  %s1702 = smul.u32 %s1701, 4
                  %s1703 = smul.u32 %s1701, 4
                  %s1704 = scalar_lea.vmem %s1685, %s1702 [#allocation3]
                  %s1705 = scalar_lea.vmem %s1687, %s1703
                $region140: #{net_forward.3} parent=127 // loop_footer
                  %s1691 = sadd.s32 %s1689, 1
                $region141: #{net_forward.3} parent=127 // loop_footer_branch
                  %1688 = sbr.rel target = $region137
                $region142: #{net_forward.3} parent=127 // loop_exit
                  _
              $region128: #{net_forward.3} parent=105 // pred_fallthru
                _
            $region106: #{net_forward.3} parent=101 // pred_fallthru
              _
            // Predicated region
            $region107: #{net_forward.3} parent=101 // pred_check
              _
            $region108: #{net_forward.3} parent=101 // pred_check_branch
              %1513 = sbr.rel (0) target = $region110
            $region109: #{net_forward.3} parent=101 // pred_region
              %s1515 = ssub.s32 16, 1
              %s1516 = sdiv.u32.pop %s1502, 25
              %s1517 = srem.u32.pop %s1502, 25
              // While loop
              $region111: #{net_forward.3} parent=109 // loop_pre_header
                _
              $region112: #{net_forward.3} parent=109 // loop_header
                %s1519 = sphi 0, %s1521
                %p1520 = scmp.ge.s32.totalorder %s1519, %s1516
                %s1524 = sphi 0, %s1579
                %s1525 = sphi %s1495, %s1582
                %s1526 = sphi %s1506, %s1583
              $region113: #{net_forward.3} parent=109 // loop_header_branch
                %1523 = sbr.rel (%p1520) target = $region117
              $region114: #{net_forward.3} parent=109 // loop_body
                %v1527 = vld [vmem:[%s1525] sm:%s1515]
                %1528 = vst [vmem:[%s1526] sm:%s1515] %v1527
                %v1529 = vld [vmem:[%s1525 + $0x4] sm:%s1515]
                %1530 = vst [vmem:[%s1526 + $0x4] sm:%s1515] %v1529
                %v1531 = vld [vmem:[%s1525 + $0x8] sm:%s1515]
                %1532 = vst [vmem:[%s1526 + $0x8] sm:%s1515] %v1531
                %v1533 = vld [vmem:[%s1525 + $0xc] sm:%s1515]
                %1534 = vst [vmem:[%s1526 + $0xc] sm:%s1515] %v1533
                %v1535 = vld [vmem:[%s1525 + $0x10] sm:%s1515]
                %1536 = vst [vmem:[%s1526 + $0x10] sm:%s1515] %v1535
                %v1537 = vld [vmem:[%s1525 + $0x14] sm:%s1515]
                %1538 = vst [vmem:[%s1526 + $0x14] sm:%s1515] %v1537
                %v1539 = vld [vmem:[%s1525 + $0x18] sm:%s1515]
                %1540 = vst [vmem:[%s1526 + $0x18] sm:%s1515] %v1539
                %v1541 = vld [vmem:[%s1525 + $0x1c] sm:%s1515]
                %1542 = vst [vmem:[%s1526 + $0x1c] sm:%s1515] %v1541
                %v1543 = vld [vmem:[%s1525 + $0x20] sm:%s1515]
                %1544 = vst [vmem:[%s1526 + $0x20] sm:%s1515] %v1543
                %v1545 = vld [vmem:[%s1525 + $0x24] sm:%s1515]
                %1546 = vst [vmem:[%s1526 + $0x24] sm:%s1515] %v1545
                %v1547 = vld [vmem:[%s1525 + $0x28] sm:%s1515]
                %1548 = vst [vmem:[%s1526 + $0x28] sm:%s1515] %v1547
                %v1549 = vld [vmem:[%s1525 + $0x2c] sm:%s1515]
                %1550 = vst [vmem:[%s1526 + $0x2c] sm:%s1515] %v1549
                %v1551 = vld [vmem:[%s1525 + $0x30] sm:%s1515]
                %1552 = vst [vmem:[%s1526 + $0x30] sm:%s1515] %v1551
                %v1553 = vld [vmem:[%s1525 + $0x34] sm:%s1515]
                %1554 = vst [vmem:[%s1526 + $0x34] sm:%s1515] %v1553
                %v1555 = vld [vmem:[%s1525 + $0x38] sm:%s1515]
                %1556 = vst [vmem:[%s1526 + $0x38] sm:%s1515] %v1555
                %v1557 = vld [vmem:[%s1525 + $0x3c] sm:%s1515]
                %1558 = vst [vmem:[%s1526 + $0x3c] sm:%s1515] %v1557
                %v1559 = vld [vmem:[%s1525 + $0x40] sm:%s1515]
                %1560 = vst [vmem:[%s1526 + $0x40] sm:%s1515] %v1559
                %v1561 = vld [vmem:[%s1525 + $0x44] sm:%s1515]
                %1562 = vst [vmem:[%s1526 + $0x44] sm:%s1515] %v1561
                %v1563 = vld [vmem:[%s1525 + $0x48] sm:%s1515]
                %1564 = vst [vmem:[%s1526 + $0x48] sm:%s1515] %v1563
                %v1565 = vld [vmem:[%s1525 + $0x4c] sm:%s1515]
                %1566 = vst [vmem:[%s1526 + $0x4c] sm:%s1515] %v1565
                %v1567 = vld [vmem:[%s1525 + $0x50] sm:%s1515]
                %1568 = vst [vmem:[%s1526 + $0x50] sm:%s1515] %v1567
                %v1569 = vld [vmem:[%s1525 + $0x54] sm:%s1515]
                %1570 = vst [vmem:[%s1526 + $0x54] sm:%s1515] %v1569
                %v1571 = vld [vmem:[%s1525 + $0x58] sm:%s1515]
                %1572 = vst [vmem:[%s1526 + $0x58] sm:%s1515] %v1571
                %v1573 = vld [vmem:[%s1525 + $0x5c] sm:%s1515]
                %1574 = vst [vmem:[%s1526 + $0x5c] sm:%s1515] %v1573
                %v1575 = vld [vmem:[%s1525 + $0x60] sm:%s1515]
                %1576 = vst [vmem:[%s1526 + $0x60] sm:%s1515] %v1575
                %s1577 = sadd.s32 1, %s1524
                %p1578 = scmp.ge.s32.totalorder %s1577, %s1516
                %s1579 = scalar_select %p1578, 0, %s1577
                %s1580 = smul.u32 %s1579, 100
                %s1581 = smul.u32 %s1579, 100
                %s1582 = scalar_lea.vmem %s1495, %s1580 [#allocation3]
                %s1583 = scalar_lea.vmem %s1506, %s1581
              $region115: #{net_forward.3} parent=109 // loop_footer
                %s1521 = sadd.s32 %s1519, 1
              $region116: #{net_forward.3} parent=109 // loop_footer_branch
                %1518 = sbr.rel target = $region112
              $region117: #{net_forward.3} parent=109 // loop_exit
                _
              %s1584 = sdiv.u32.pop %s1502, 25
              %s1585 = srem.u32.pop %s1502, 25
              %s1586 = smul.u32 %s1584, 25
              %s1587 = smul.u32 4, %s1586
              %s1588 = scalar_lea.vmem %s1495, %s1587 [#allocation3]
              %s1589 = smul.u32 4, %s1586
              %s1590 = scalar_lea.vmem %s1506, %s1589
              // While loop
              $region118: #{net_forward.3} parent=109 // loop_pre_header
                _
              $region119: #{net_forward.3} parent=109 // loop_header
                %s1592 = sphi 0, %s1594
                %p1593 = scmp.ge.s32.totalorder %s1592, %s1585
                %s1597 = sphi 0, %s1604
                %s1598 = sphi %s1588, %s1607
                %s1599 = sphi %s1590, %s1608
              $region120: #{net_forward.3} parent=109 // loop_header_branch
                %1596 = sbr.rel (%p1593) target = $region124
              $region121: #{net_forward.3} parent=109 // loop_body
                %v1600 = vld [vmem:[%s1598] sm:%s1515]
                %1601 = vst [vmem:[%s1599] sm:%s1515] %v1600
                %s1602 = sadd.s32 1, %s1597
                %p1603 = scmp.ge.s32.totalorder %s1602, %s1585
                %s1604 = scalar_select %p1603, 0, %s1602
                %s1605 = smul.u32 %s1604, 4
                %s1606 = smul.u32 %s1604, 4
                %s1607 = scalar_lea.vmem %s1588, %s1605 [#allocation3]
                %s1608 = scalar_lea.vmem %s1590, %s1606
              $region122: #{net_forward.3} parent=109 // loop_footer
                %s1594 = sadd.s32 %s1592, 1
              $region123: #{net_forward.3} parent=109 // loop_footer_branch
                %1591 = sbr.rel target = $region119
              $region124: #{net_forward.3} parent=109 // loop_exit
                _
            $region110: #{net_forward.3} parent=101 // pred_fallthru
              _
          $region102: #{net_forward.3} parent=97 // pred_fallthru
            _
          %1706 = vnop
        $region98: #{net_forward.3} parent=89 // pred_fallthru
          _
      $region90: #{net_forward.3} parent=5 // pred_fallthru
        _
      %p1707 = scmp.le.s32.totalorder 2, %s9
      // Predicated region
      $region143: #{net_forward.3} parent=5 // pred_check
        %p1708 = pneg %p1707
      $region144: #{net_forward.3} parent=5 // pred_check_branch
        %1710 = sbr.rel (%p1708) target = $region146
      $region145: #{net_forward.3} parent=5 // pred_region
        %s1711 = ssub.s32 %s9, 2
        // Predicated region
        $region147: #{net_forward.3} parent=145 // pred_check
          %p1712 = pneg %p106
        $region148: #{net_forward.3} parent=145 // pred_check_branch
          %1714 = sbr.rel (%p1712) target = $region150
        $region149: #{net_forward.3} parent=145 // pred_region
          %s1715 = sand.u32 %s91, 1
          %s1716 = sand.u32 %s91, 1
          %s1717 = smul.addr %s1716, 100
          %s1718 = scalar_lea.vmem [#allocation3], %s1717
        $region150: #{net_forward.3} parent=145 // pred_fallthru
          _
      $region146: #{net_forward.3} parent=5 // pred_fallthru
        _
    $region6: #{net_forward.3} parent=1 // loop_footer
      %s13 = sadd.s32 1, %s9
    $region7: #{net_forward.3} parent=1 // loop_footer_branch
      %8 = sbr.rel target = $region3
    $region8: #{net_forward.3} parent=1 // loop_exit
      _

// kernel: net_forward.4
$region0: #{net_forward.4}
  #allocation0 [shape = 'u32[]', space=smem, size = 0x4, offset = 0x4, fixed_abs, tag = 'smem constant byte address 0x4 - core index']
  #allocation1 [shape = 'u32[72,128]{1,0:T(1,128)}', space=vmem, size = 0x9000, scoped, tag = 'internal scratch']
  %s0 = inlined_call_operand.vmem [shape: bf16[4,50,150], index: 0, kind: input, shape index: {}]
  %s1 = inlined_call_operand.vmem [shape: bf16[150,16], index: 1, kind: input, shape index: {}]
  %s2 = inlined_call_operand.vmem [shape: f32[1,16], index: 2, kind: input, shape index: {}]
  %s3 = inlined_call_operand.vmem [shape: bf16[50,16], index: 3, kind: output, shape index: {}]
  %s4 = sld [smem:[#allocation0]]
  $region141: #{net_forward.4} parent=0
    _
  %s6 = ssub.s32 1, %s4
  %s7 = scalar_select 0, %s6, %s4
  $region1: #{net_forward.4} parent=0
    #allocation2 [shape = 'u8[131072]{0}', space=vmem, size = 0x20000, scoped, tag = 'input window, operand 0']
    #allocation3 [shape = 'u8[16384]{0}', space=vmem, size = 0x4000, scoped, tag = 'output window, operand 0']
    loop: start=0, step=1, limit=4
    $region2: #{net_forward.4} parent=1 // loop_pre_header
      _
    $region3: #{net_forward.4} parent=1 // loop_header
      %s9 = sphi 0, %s13
      %p10 = scmp.ge.s32.totalorder %s9, 4
      %s19 = sphi 0, %s21
      %s22 = sphi 0, %s19
      %s23 = sphi 0, %s22
      %s39 = sphi 0, %s23
      %s43 = sphi 0, %s43
      %s45 = sphi 0, %s43
      %s46 = sphi 0, %s45
      %s60 = sphi 0, %s46
      %s64 = sphi 0, %s64
      %s66 = sphi 0, %s64
      %s67 = sphi 0, %s66
      %s81 = sphi 0, %s67
      %s87 = sphi 0, %s89
      %s90 = sphi 0, %s87
      %s91 = sphi 0, %s90
      %s107 = sphi 0, %s91
    $region4: #{net_forward.4} parent=1 // loop_header_branch
      %12 = sbr.rel (%p10) target = $region8
    $region5: #{net_forward.4} parent=1 // loop_body
      %s14 = ssub.s32 %s9, 1
      %s15 = ssub.s32 %s9, 2
      %s16 = sadd.s32 %s9, 1
      %s17 = ssub.s32 %s9, %s16
      %p18 = scmp.eq.s32.totalorder %s17, 0
      %s20 = sadd.s32 %s19, 1
      %s21 = scalar_select %p18, %s19, %s20
      %p24 = pneg %p18
      %p25 = scmp.eq.s32.totalorder %s9, 1
      %p26 = por %p24, %p25
      %p27 = scmp.ne.s32.totalorder %s19, %s22
      %p28 = scmp.eq.s32.totalorder %s9, 0
      %p29 = por %p27, %p28
      %p30 = scmp.ne.s32.totalorder %s19, %s22
      %p31 = scmp.eq.s32.totalorder %s14, 1
      %p32 = por %p30, %p31
      %p33 = scmp.ne.s32.totalorder %s22, %s23
      %p34 = scmp.eq.s32.totalorder %s14, 0
      %p35 = por %p33, %p34
      %p36 = scmp.ne.s32.totalorder %s22, %s23
      %p37 = scmp.eq.s32.totalorder %s15, 1
      %p38 = por %p36, %p37
      %p40 = scmp.ne.s32.totalorder %s23, %s39
      %p41 = scmp.eq.s32.totalorder %s15, 0
      %p42 = por %p40, %p41
      %s44 = sadd.s32 %s43, 1
      %p47 = scmp.eq.s32.totalorder %s9, 1
      %p48 = scmp.ne.s32.totalorder %s43, %s45
      %p49 = scmp.eq.s32.totalorder %s9, 0
      %p50 = por %p48, %p49
      %p51 = scmp.ne.s32.totalorder %s43, %s45
      %p52 = scmp.eq.s32.totalorder %s14, 1
      %p53 = por %p51, %p52
      %p54 = scmp.ne.s32.totalorder %s45, %s46
      %p55 = scmp.eq.s32.totalorder %s14, 0
      %p56 = por %p54, %p55
      %p57 = scmp.ne.s32.totalorder %s45, %s46
      %p58 = scmp.eq.s32.totalorder %s15, 1
      %p59 = por %p57, %p58
      %p61 = scmp.ne.s32.totalorder %s46, %s60
      %p62 = scmp.eq.s32.totalorder %s15, 0
      %p63 = por %p61, %p62
      %s65 = sadd.s32 %s64, 1
      %p68 = scmp.eq.s32.totalorder %s9, 1
      %p69 = scmp.ne.s32.totalorder %s64, %s66
      %p70 = scmp.eq.s32.totalorder %s9, 0
      %p71 = por %p69, %p70
      %p72 = scmp.ne.s32.totalorder %s64, %s66
      %p73 = scmp.eq.s32.totalorder %s14, 1
      %p74 = por %p72, %p73
      %p75 = scmp.ne.s32.totalorder %s66, %s67
      %p76 = scmp.eq.s32.totalorder %s14, 0
      %p77 = por %p75, %p76
      %p78 = scmp.ne.s32.totalorder %s66, %s67
      %p79 = scmp.eq.s32.totalorder %s15, 1
      %p80 = por %p78, %p79
      %p82 = scmp.ne.s32.totalorder %s67, %s81
      %p83 = scmp.eq.s32.totalorder %s15, 0
      %p84 = por %p82, %p83
      %s85 = ssub.s32 %s9, %s16
      %p86 = scmp.eq.s32.totalorder %s85, 0
      %s88 = sadd.s32 %s87, 1
      %s89 = scalar_select %p86, %s87, %s88
      %p92 = pneg %p86
      %p93 = scmp.eq.s32.totalorder %s9, 1
      %p94 = por %p92, %p93
      %p95 = scmp.ne.s32.totalorder %s87, %s90
      %p96 = scmp.eq.s32.totalorder %s9, 0
      %p97 = por %p95, %p96
      %p98 = scmp.ne.s32.totalorder %s87, %s90
      %p99 = scmp.eq.s32.totalorder %s14, 1
      %p100 = por %p98, %p99
      %p101 = scmp.ne.s32.totalorder %s90, %s91
      %p102 = scmp.eq.s32.totalorder %s14, 0
      %p103 = por %p101, %p102
      %p104 = scmp.ne.s32.totalorder %s90, %s91
      %p105 = scmp.eq.s32.totalorder %s15, 1
      %p106 = por %p104, %p105
      %p108 = scmp.ne.s32.totalorder %s91, %s107
      %p109 = scmp.eq.s32.totalorder %s15, 0
      %p110 = por %p108, %p109
      %p111 = scmp.le.s32.totalorder 1, %s9
      %p112 = scmp.lt.s32.totalorder %s9, 3
      %p113 = pnand %p111, %p112
      %p114 = pneg %p113
      // Predicated region
      $region9: #{net_forward.4} parent=5 // pred_check
        _
      $region10: #{net_forward.4} parent=5 // pred_check_branch
        %116 = sbr.rel (%p113) target = $region12
      $region11: #{net_forward.4} parent=5 // pred_region
        %s117 = ssub.s32 %s9, 1
        // Predicated region
        $region13: #{net_forward.4} parent=11 // pred_check
          %p118 = pneg %p56
        $region14: #{net_forward.4} parent=11 // pred_check_branch
          %120 = sbr.rel (%p118) target = $region16
        $region15: #{net_forward.4} parent=11 // pred_region
          _
        $region16: #{net_forward.4} parent=11 // pred_fallthru
          _
        // Predicated region
        $region17: #{net_forward.4} parent=11 // pred_check
          %p121 = pneg %p77
        $region18: #{net_forward.4} parent=11 // pred_check_branch
          %123 = sbr.rel (%p121) target = $region20
        $region19: #{net_forward.4} parent=11 // pred_region
          _
        $region20: #{net_forward.4} parent=11 // pred_fallthru
          _
      $region12: #{net_forward.4} parent=5 // pred_fallthru
        _
      %p124 = scmp.lt.s32.totalorder %s9, 2
      // Predicated region
      $region21: #{net_forward.4} parent=5 // pred_check
        %p125 = pneg %p124
      $region22: #{net_forward.4} parent=5 // pred_check_branch
        %127 = sbr.rel (%p125) target = $region24
      $region23: #{net_forward.4} parent=5 // pred_region
        // Predicated region
        $region25: #{net_forward.4} parent=23 // pred_check
          %p128 = pneg %p29
        $region26: #{net_forward.4} parent=23 // pred_check_branch
          %130 = sbr.rel (%p128) target = $region28
        $region27: #{net_forward.4} parent=23 // pred_region
          %s131 = sand.u32 %s19, 1
          %s132 = sand.u32 %s19, 1
          %s133 = smul.addr %s132, 128
          %s134 = scalar_lea.vmem [#allocation2], %s133
          %s135 = smul.u32 4, %s9
          %s136 = ssub.s32 7, %s135
          %p137 = scmp.lt.s32.totalorder %s136, 4
          %s138 = scalar_select %p137, %s136, 4
          %s139 = smul.u32 16, %s138
          %s140 = smul.u32 %s139, 2
          %p141 = scmp.ne.s32.totalorder 0, %s140
          %s142 = smul.addr %s135, 2
          %s143 = smul.addr %s142, 4
          %s144 = scalar_lea.vmem %s0, %s143
          // Predicated region
          $region29: #{net_forward.4} parent=27 // pred_check
            %p145 = pneg %p141
          $region30: #{net_forward.4} parent=27 // pred_check_branch
            %147 = sbr.rel (%p145) target = $region32
          $region31: #{net_forward.4} parent=27 // pred_region
            // Predicated region
            $region33: #{net_forward.4} parent=31 // pred_check
              _
            $region34: #{net_forward.4} parent=31 // pred_check_branch
              %149 = sbr.rel (0) target = $region36
            $region35: #{net_forward.4} parent=31 // pred_region
              // Predicated region
              $region55: #{net_forward.4} parent=35 // pred_check
                _
              $region56: #{net_forward.4} parent=35 // pred_check_branch
                %235 = sbr.rel (0) target = $region58
              $region57: #{net_forward.4} parent=35 // pred_region
                %s236 = sshrl.u32 %s138, 2
                // While loop
                $region59: #{net_forward.4} parent=57 // loop_pre_header
                  _
                $region60: #{net_forward.4} parent=57 // loop_header
                  %s238 = sphi 0, %s240
                  %p239 = scmp.ge.s32.totalorder %s238, %s236
                  %s243 = sphi 0, %s280
                  %s244 = sphi %s144, %s283
                  %s245 = sphi %s134, %s284
                $region61: #{net_forward.4} parent=57 // loop_header_branch
                  %242 = sbr.rel (%p239) target = $region65
                $region62: #{net_forward.4} parent=57 // loop_body
                  %v246 = vld [vmem:[%s244] sm:$0xff]
                  %247 = vst [vmem:[%s245] sm:$0xff] %v246
                  %v248 = vld [vmem:[%s244 + $0x8] sm:$0xff]
                  %249 = vst [vmem:[%s245 + $0x8] sm:$0xff] %v248
                  %v250 = vld [vmem:[%s244 + $0x10] sm:$0xff]
                  %251 = vst [vmem:[%s245 + $0x10] sm:$0xff] %v250
                  %v252 = vld [vmem:[%s244 + $0x18] sm:$0xff]
                  %253 = vst [vmem:[%s245 + $0x18] sm:$0xff] %v252
                  %v254 = vld [vmem:[%s244 + $0x38] sm:$0xff]
                  %255 = vst [vmem:[%s245 + $0x20] sm:$0xff] %v254
                  %v256 = vld [vmem:[%s244 + $0x40] sm:$0xff]
                  %257 = vst [vmem:[%s245 + $0x28] sm:$0xff] %v256
                  %v258 = vld [vmem:[%s244 + $0x48] sm:$0xff]
                  %259 = vst [vmem:[%s245 + $0x30] sm:$0xff] %v258
                  %v260 = vld [vmem:[%s244 + $0x50] sm:$0xff]
                  %261 = vst [vmem:[%s245 + $0x38] sm:$0xff] %v260
                  %v262 = vld [vmem:[%s244 + $0x70] sm:$0xff]
                  %263 = vst [vmem:[%s245 + $0x40] sm:$0xff] %v262
                  %v264 = vld [vmem:[%s244 + $0x78] sm:$0xff]
                  %265 = vst [vmem:[%s245 + $0x48] sm:$0xff] %v264
                  %v266 = vld [vmem:[%s244 + $0x80] sm:$0xff]
                  %267 = vst [vmem:[%s245 + $0x50] sm:$0xff] %v266
                  %v268 = vld [vmem:[%s244 + $0x88] sm:$0xff]
                  %269 = vst [vmem:[%s245 + $0x58] sm:$0xff] %v268
                  %v270 = vld [vmem:[%s244 + $0xa8] sm:$0xff]
                  %271 = vst [vmem:[%s245 + $0x60] sm:$0xff] %v270
                  %v272 = vld [vmem:[%s244 + $0xb0] sm:$0xff]
                  %273 = vst [vmem:[%s245 + $0x68] sm:$0xff] %v272
                  %v274 = vld [vmem:[%s244 + $0xb8] sm:$0xff]
                  %275 = vst [vmem:[%s245 + $0x70] sm:$0xff] %v274
                  %v276 = vld [vmem:[%s244 + $0xc0] sm:$0xff]
                  %277 = vst [vmem:[%s245 + $0x78] sm:$0xff] %v276
                  %s278 = sadd.s32 1, %s243
                  %p279 = scmp.ge.s32.totalorder %s278, %s236
                  %s280 = scalar_select %p279, 0, %s278
                  %s281 = smul.u32 %s280, 32
                  %s282 = smul.u32 %s280, 32
                  %s283 = scalar_lea.vmem %s144, %s281
                  %s284 = scalar_lea.vmem %s134, %s282 [#allocation2]
                $region63: #{net_forward.4} parent=57 // loop_footer
                  %s240 = sadd.s32 %s238, 1
                $region64: #{net_forward.4} parent=57 // loop_footer_branch
                  %237 = sbr.rel target = $region60
                $region65: #{net_forward.4} parent=57 // loop_exit
                  _
                %s285 = sshrl.u32 %s138, 2
                %s286 = sand.u32 %s138, 3
                %s287 = smul.u32 %s285, 4
                %s288 = smul.u32 8, %s287
                %s289 = scalar_lea.vmem %s144, %s288
                %s290 = smul.u32 8, %s287
                %s291 = scalar_lea.vmem %s134, %s290 [#allocation2]
                // While loop
                $region66: #{net_forward.4} parent=57 // loop_pre_header
                  _
                $region67: #{net_forward.4} parent=57 // loop_header
                  %s293 = sphi 0, %s295
                  %p294 = scmp.ge.s32.totalorder %s293, %s286
                  %s298 = sphi 0, %s311
                  %s299 = sphi %s289, %s314
                  %s300 = sphi %s291, %s315
                $region68: #{net_forward.4} parent=57 // loop_header_branch
                  %297 = sbr.rel (%p294) target = $region72
                $region69: #{net_forward.4} parent=57 // loop_body
                  %v301 = vld [vmem:[%s299] sm:$0xff]
                  %302 = vst [vmem:[%s300] sm:$0xff] %v301
                  %v303 = vld [vmem:[%s299 + $0x38] sm:$0xff]
                  %304 = vst [vmem:[%s300 + $0x20] sm:$0xff] %v303
                  %v305 = vld [vmem:[%s299 + $0x70] sm:$0xff]
                  %306 = vst [vmem:[%s300 + $0x40] sm:$0xff] %v305
                  %v307 = vld [vmem:[%s299 + $0xa8] sm:$0xff]
                  %308 = vst [vmem:[%s300 + $0x60] sm:$0xff] %v307
                  %s309 = sadd.s32 1, %s298
                  %p310 = scmp.ge.s32.totalorder %s309, %s286
                  %s311 = scalar_select %p310, 0, %s309
                  %s312 = smul.u32 %s311, 8
                  %s313 = smul.u32 %s311, 8
                  %s314 = scalar_lea.vmem %s289, %s312
                  %s315 = scalar_lea.vmem %s291, %s313 [#allocation2]
                $region70: #{net_forward.4} parent=57 // loop_footer
                  %s295 = sadd.s32 %s293, 1
                $region71: #{net_forward.4} parent=57 // loop_footer_branch
                  %292 = sbr.rel target = $region67
                $region72: #{net_forward.4} parent=57 // loop_exit
                  _
              $region58: #{net_forward.4} parent=35 // pred_fallthru
                _
              // Predicated region
              $region73: #{net_forward.4} parent=35 // pred_check
                _
              $region74: #{net_forward.4} parent=35 // pred_check_branch
                %317 = sbr.rel target = $region76
              $region75: #{net_forward.4} parent=35 // pred_region
                _
              $region76: #{net_forward.4} parent=35 // pred_fallthru
                _
            $region36: #{net_forward.4} parent=31 // pred_fallthru
              _
            // Predicated region
            $region37: #{net_forward.4} parent=31 // pred_check
              _
            $region38: #{net_forward.4} parent=31 // pred_check_branch
              %151 = sbr.rel target = $region40
            $region39: #{net_forward.4} parent=31 // pred_region
              %s153 = ssub.s32 256, 1
              %s154 = sshrl.u32 %s138, 2
              // While loop
              $region41: #{net_forward.4} parent=39 // loop_pre_header
                _
              $region42: #{net_forward.4} parent=39 // loop_header
                %s156 = sphi 0, %s158
                %p157 = scmp.ge.s32.totalorder %s156, %s154
                %s161 = sphi 0, %s198
                %s162 = sphi %s144, %s201
                %s163 = sphi %s134, %s202
              $region43: #{net_forward.4} parent=39 // loop_header_branch
                %160 = sbr.rel (%p157) target = $region47
              $region44: #{net_forward.4} parent=39 // loop_body
                %v164 = vld [vmem:[%s162] sm:%s153]
                %165 = vst [vmem:[%s163] sm:%s153] %v164
                %v166 = vld [vmem:[%s162 + $0x8] sm:%s153]
                %167 = vst [vmem:[%s163 + $0x8] sm:%s153] %v166
                %v168 = vld [vmem:[%s162 + $0x10] sm:%s153]
                %169 = vst [vmem:[%s163 + $0x10] sm:%s153] %v168
                %v170 = vld [vmem:[%s162 + $0x18] sm:%s153]
                %171 = vst [vmem:[%s163 + $0x18] sm:%s153] %v170
                %v172 = vld [vmem:[%s162 + $0x38] sm:%s153]
                %173 = vst [vmem:[%s163 + $0x20] sm:%s153] %v172
                %v174 = vld [vmem:[%s162 + $0x40] sm:%s153]
                %175 = vst [vmem:[%s163 + $0x28] sm:%s153] %v174
                %v176 = vld [vmem:[%s162 + $0x48] sm:%s153]
                %177 = vst [vmem:[%s163 + $0x30] sm:%s153] %v176
                %v178 = vld [vmem:[%s162 + $0x50] sm:%s153]
                %179 = vst [vmem:[%s163 + $0x38] sm:%s153] %v178
                %v180 = vld [vmem:[%s162 + $0x70] sm:%s153]
                %181 = vst [vmem:[%s163 + $0x40] sm:%s153] %v180
                %v182 = vld [vmem:[%s162 + $0x78] sm:%s153]
                %183 = vst [vmem:[%s163 + $0x48] sm:%s153] %v182
                %v184 = vld [vmem:[%s162 + $0x80] sm:%s153]
                %185 = vst [vmem:[%s163 + $0x50] sm:%s153] %v184
                %v186 = vld [vmem:[%s162 + $0x88] sm:%s153]
                %187 = vst [vmem:[%s163 + $0x58] sm:%s153] %v186
                %v188 = vld [vmem:[%s162 + $0xa8] sm:%s153]
                %189 = vst [vmem:[%s163 + $0x60] sm:%s153] %v188
                %v190 = vld [vmem:[%s162 + $0xb0] sm:%s153]
                %191 = vst [vmem:[%s163 + $0x68] sm:%s153] %v190
                %v192 = vld [vmem:[%s162 + $0xb8] sm:%s153]
                %193 = vst [vmem:[%s163 + $0x70] sm:%s153] %v192
                %v194 = vld [vmem:[%s162 + $0xc0] sm:%s153]
                %195 = vst [vmem:[%s163 + $0x78] sm:%s153] %v194
                %s196 = sadd.s32 1, %s161
                %p197 = scmp.ge.s32.totalorder %s196, %s154
                %s198 = scalar_select %p197, 0, %s196
                %s199 = smul.u32 %s198, 32
                %s200 = smul.u32 %s198, 32
                %s201 = scalar_lea.vmem %s144, %s199
                %s202 = scalar_lea.vmem %s134, %s200 [#allocation2]
              $region45: #{net_forward.4} parent=39 // loop_footer
                %s158 = sadd.s32 %s156, 1
              $region46: #{net_forward.4} parent=39 // loop_footer_branch
                %155 = sbr.rel target = $region42
              $region47: #{net_forward.4} parent=39 // loop_exit
                _
              %s203 = sshrl.u32 %s138, 2
              %s204 = sand.u32 %s138, 3
              %s205 = smul.u32 %s203, 4
              %s206 = smul.u32 8, %s205
              %s207 = scalar_lea.vmem %s144, %s206
              %s208 = smul.u32 8, %s205
              %s209 = scalar_lea.vmem %s134, %s208 [#allocation2]
              // While loop
              $region48: #{net_forward.4} parent=39 // loop_pre_header
                _
              $region49: #{net_forward.4} parent=39 // loop_header
                %s211 = sphi 0, %s213
                %p212 = scmp.ge.s32.totalorder %s211, %s204
                %s216 = sphi 0, %s229
                %s217 = sphi %s207, %s232
                %s218 = sphi %s209, %s233
              $region50: #{net_forward.4} parent=39 // loop_header_branch
                %215 = sbr.rel (%p212) target = $region54
              $region51: #{net_forward.4} parent=39 // loop_body
                %v219 = vld [vmem:[%s217] sm:%s153]
                %220 = vst [vmem:[%s218] sm:%s153] %v219
                %v221 = vld [vmem:[%s217 + $0x38] sm:%s153]
                %222 = vst [vmem:[%s218 + $0x20] sm:%s153] %v221
                %v223 = vld [vmem:[%s217 + $0x70] sm:%s153]
                %224 = vst [vmem:[%s218 + $0x40] sm:%s153] %v223
                %v225 = vld [vmem:[%s217 + $0xa8] sm:%s153]
                %226 = vst [vmem:[%s218 + $0x60] sm:%s153] %v225
                %s227 = sadd.s32 1, %s216
                %p228 = scmp.ge.s32.totalorder %s227, %s204
                %s229 = scalar_select %p228, 0, %s227
                %s230 = smul.u32 %s229, 8
                %s231 = smul.u32 %s229, 8
                %s232 = scalar_lea.vmem %s207, %s230
                %s233 = scalar_lea.vmem %s209, %s231 [#allocation2]
              $region52: #{net_forward.4} parent=39 // loop_footer
                %s213 = sadd.s32 %s211, 1
              $region53: #{net_forward.4} parent=39 // loop_footer_branch
                %210 = sbr.rel target = $region49
              $region54: #{net_forward.4} parent=39 // loop_exit
                _
            $region40: #{net_forward.4} parent=31 // pred_fallthru
              _
          $region32: #{net_forward.4} parent=27 // pred_fallthru
            _
          %318 = vnop
        $region28: #{net_forward.4} parent=23 // pred_fallthru
          _
      $region24: #{net_forward.4} parent=5 // pred_fallthru
        _
      %p319 = scmp.le.s32.totalorder 1, %s9
      %p320 = scmp.lt.s32.totalorder %s9, 3
      %p321 = pnand %p319, %p320
      %p322 = pneg %p321
      // Predicated region
      $region77: #{net_forward.4} parent=5 // pred_check
        _
      $region78: #{net_forward.4} parent=5 // pred_check_branch
        %324 = sbr.rel (%p321) target = $region80
      $region79: #{net_forward.4} parent=5 // pred_region
        %s325 = ssub.s32 %s9, 1
        %s326 = sand.u32 %s22, 1
        %s327 = sand.u32 %s22, 1
        %s328 = smul.addr %s327, 128
        %s329 = scalar_lea.vmem [#allocation2], %s328
        // Predicated region
        $region81: #{net_forward.4} parent=79 // pred_check
          %p330 = pneg %p35
        $region82: #{net_forward.4} parent=79 // pred_check_branch
          %332 = sbr.rel (%p330) target = $region84
        $region83: #{net_forward.4} parent=79 // pred_region
          _
        $region84: #{net_forward.4} parent=79 // pred_fallthru
          _
        %s333 = sand.u32 %s22, 1
        %s334 = sand.u32 %s22, 1
        %s335 = smul.addr %s334, 128
        %s336 = scalar_lea.vmem [#allocation2], %s335
        %p337 = pneg %p35
        %p338 = pneg %p32
        %p339 = pneg %p56
        %p340 = pneg %p53
        %p341 = pneg %p77
        %p342 = pneg %p74
        %p343 = pneg %p103
        %p344 = pneg %p100
        %s345 = sand.u32 %s90, 1
        %s346 = sand.u32 %s90, 1
        %s347 = smul.addr %s346, 16
        %s348 = scalar_lea.vmem [#allocation3], %s347
        %s349 = smul.u32 4, %s14
        %s350 = ssub.s32 7, %s349
        %p351 = scmp.lt.s32.totalorder %s350, 4
        %s352 = scalar_select %p351, %s350, 4
        %s353 = smul.u32 16, %s352
        %s354 = smul.u32 %s353, 2
        %s355 = smul.u32 4, %s14
        %s356 = ssub.s32 7, %s355
        %p357 = scmp.lt.s32.totalorder %s356, 4
        %s358 = scalar_select %p357, %s356, 4
        %s359 = smul.u32 4, %s358
        %v361 = vld [vmem:[%s1] sm:$0xf]
        %v362 = vld [vmem:[%s1 + $0x4] sm:$0xf]
        %v363 = vld [vmem:[%s1 + $0x8] sm:$0xf]
        %v364 = vld [vmem:[%s1 + $0xc] sm:$0xf]
        %v365 = vld [vmem:[%s1 + $0x10] sm:$0xf]
        %v366 = vld [vmem:[%s1 + $0x14] sm:$0xf]
        %v367 = vld [vmem:[%s1 + $0x18] sm:$0xf]
        %v368 = vld [vmem:[%s1 + $0x1c] sm:$0xf]
        %v369 = vld [vmem:[%s1 + $0x20] sm:$0xf]
        %v370 = vld [vmem:[%s1 + $0x24] sm:$0xf]
        %v371 = vld [vmem:[%s1 + $0x28] sm:$0xf]
        %v372 = vld [vmem:[%s1 + $0x2c] sm:$0xf]
        %v373 = vld [vmem:[%s1 + $0x30] sm:$0xf]
        %v374 = vld [vmem:[%s1 + $0x34] sm:$0xf]
        %v375 = vld [vmem:[%s1 + $0x38] sm:$0xf]
        %v376 = vld [vmem:[%s1 + $0x3c] sm:$0xf]
        %v377 = vld [vmem:[%s1 + $0x40] sm:$0xf]
        %v378 = vld [vmem:[%s1 + $0x44] sm:$0xf]
        %v379 = vld [vmem:[%s1 + $0x48] sm:$0x7]
        %v380 = vld [vmem:[%s329] sm:$0xff]
        %v381 = vld [vmem:[%s329 + $0x8] sm:$0xff]
        %v382 = vld [vmem:[%s329 + $0x10] sm:$0xff]
        %v383 = vld [vmem:[%s329 + $0x18] sm:$0xff]
        %v388 = vunpack.c.l.b16 %v380
        %v389 = vunpack.c.h.b16 %v380
        %v390 = vunpack.c.l.b16 %v381
        %v391 = vunpack.c.h.b16 %v381
        %v392 = vunpack.c.l.b16 %v382
        %v393 = vunpack.c.h.b16 %v382
        %v394 = vunpack.c.l.b16 %v383
        %v395 = vunpack.c.h.b16 %v383
        %v396 = vpack.c.b16 %v390, %v388
        %v397 = vpack.c.b16 %v391, %v389
        %v398 = vpack.c.b16 %v394, %v392
        %v399 = vpack.c.b16 %v395, %v393
        %v421 = vunpack.c.l.b16 %v361
        %v422 = vunpack.c.l.b16 %v362
        %v423 = vunpack.c.l.b16 %v363
        %v424 = vunpack.c.l.b16 %v364
        %v425 = vunpack.c.l.b16 %v365
        %v426 = vunpack.c.l.b16 %v366
        %v427 = vunpack.c.l.b16 %v367
        %v428 = vunpack.c.l.b16 %v368
        %v429 = vunpack.c.l.b16 %v369
        %v430 = vunpack.c.l.b16 %v370
        %v431 = vunpack.c.l.b16 %v371
        %v432 = vunpack.c.l.b16 %v372
        %v433 = vunpack.c.l.b16 %v373
        %v434 = vunpack.c.l.b16 %v374
        %v435 = vunpack.c.l.b16 %v375
        %v436 = vunpack.c.l.b16 %v376
        %v437 = vunpack.c.l.b16 %v377
        %v438 = vunpack.c.l.b16 %v378
        %v439 = vunpack.c.l.b16 %v379
        %v440 = vpack.c.b16 %v422, %v421
        %v441 = vpack.c.b16 %v424, %v423
        %v442 = vpack.c.b16 %v426, %v425
        %v443 = vpack.c.b16 %v428, %v427
        %v444 = vpack.c.b16 %v430, %v429
        %v445 = vpack.c.b16 %v432, %v431
        %v446 = vpack.c.b16 %v434, %v433
        %v447 = vpack.c.b16 %v436, %v435
        %v448 = vpack.c.b16 %v438, %v437
        %v449 = vpack.c.b16 %v439, %v439
        %vm459 = vcmask 179200
        %v461 = vsel %vm459, %v397, 0
        %v464 = vsel %vm459, %v399, 0
        %vm466 = vcmask 1042432
        %v468 = vsel %vm466, %v449, 0
        %470 = vmatpush.bf16.msra.mxu0 %v447
        %471 = vmatpush.bf16.msra.mxu0 %v446
        %472 = vmatpush.bf16.msra.mxu0 %v445
        %473 = vmatpush.bf16.msra.mxu0 %v444
        %474 = vmatpush.bf16.msra.mxu0 %v443
        %475 = vmatpush.bf16.msra.mxu0 %v442
        %476 = vmatpush.bf16.msra.mxu0 %v441
        %477 = vmatpush.bf16.msra.mxu0 %v440
        %478 = vmatmul.bf16.gmra.mxu0 %v396
        %v479 = vpop.f32.mrf.mxu0
        %v480 = vadd.f32 0.0, %v479
        %v481 = vpop.f32.mrf.mxu0
        %v482 = vadd.f32 0.0, %v481
        %483 = vmatmul.bf16.gmra.mxu0 %v398
        %v484 = vpop.f32.mrf.mxu0
        %v485 = vadd.f32 0.0, %v484
        %v486 = vpop.f32.mrf.mxu0
        %v487 = vadd.f32 0.0, %v486
        %488 = vdwg.mxu0
        %489 = vmatpush.bf16.msra.mxu0 0
        %490 = vmatpush.bf16.msra.mxu0 0
        %491 = vmatpush.bf16.msra.mxu0 0
        %492 = vmatpush.bf16.msra.mxu0 0
        %493 = vmatpush.bf16.msra.mxu0 0
        %494 = vmatpush.bf16.msra.mxu0 0
        %495 = vmatpush.bf16.msra.mxu0 %v468
        %496 = vmatpush.bf16.msra.mxu0 %v448
        %497 = vmatmul.bf16.gmra.mxu0 %v461
        %v498 = vpop.f32.mrf.mxu0
        %v499 = vadd.f32 %v480, %v498
        %v500 = vpop.f32.mrf.mxu0
        %v501 = vadd.f32 %v482, %v500
        %502 = vmatmul.bf16.gmra.mxu0 %v464
        %v503 = vpop.f32.mrf.mxu0
        %v504 = vadd.f32 %v485, %v503
        %v505 = vpop.f32.mrf.mxu0
        %v506 = vadd.f32 %v487, %v505
        %507 = vdwg.mxu0
        %s508 = scalar_lea.vmem %s329, 32 [#allocation2]
        %v509 = vld [vmem:[%s508] sm:$0xff]
        %v510 = vld [vmem:[%s508 + $0x8] sm:$0xff]
        %v511 = vld [vmem:[%s508 + $0x10] sm:$0xff]
        %v512 = vld [vmem:[%s508 + $0x18] sm:$0xff]
        %v517 = vunpack.c.l.b16 %v509
        %v518 = vunpack.c.h.b16 %v509
        %v519 = vunpack.c.l.b16 %v510
        %v520 = vunpack.c.h.b16 %v510
        %v521 = vunpack.c.l.b16 %v511
        %v522 = vunpack.c.h.b16 %v511
        %v523 = vunpack.c.l.b16 %v512
        %v524 = vunpack.c.h.b16 %v512
        %v525 = vpack.c.b16 %v519, %v517
        %v526 = vpack.c.b16 %v520, %v518
        %v527 = vpack.c.b16 %v523, %v521
        %v528 = vpack.c.b16 %v524, %v522
        %v532 = vsel %vm459, %v526, 0
        %v535 = vsel %vm459, %v528, 0
        %537 = vmatpush.bf16.msra.mxu0 %v447
        %538 = vmatpush.bf16.msra.mxu0 %v446
        %539 = vmatpush.bf16.msra.mxu0 %v445
        %540 = vmatpush.bf16.msra.mxu0 %v444
        %541 = vmatpush.bf16.msra.mxu0 %v443
        %542 = vmatpush.bf16.msra.mxu0 %v442
        %543 = vmatpush.bf16.msra.mxu0 %v441
        %544 = vmatpush.bf16.msra.mxu0 %v440
        %545 = vmatmul.bf16.gmra.mxu0 %v525
        %v546 = vpop.f32.mrf.mxu0
        %v547 = vadd.f32 0.0, %v546
        %v548 = vpop.f32.mrf.mxu0
        %v549 = vadd.f32 0.0, %v548
        %550 = vmatmul.bf16.gmra.mxu0 %v527
        %v551 = vpop.f32.mrf.mxu0
        %v552 = vadd.f32 0.0, %v551
        %v553 = vpop.f32.mrf.mxu0
        %v554 = vadd.f32 0.0, %v553
        %555 = vdwg.mxu0
        %556 = vmatpush.bf16.msra.mxu0 0
        %557 = vmatpush.bf16.msra.mxu0 0
        %558 = vmatpush.bf16.msra.mxu0 0
        %559 = vmatpush.bf16.msra.mxu0 0
        %560 = vmatpush.bf16.msra.mxu0 0
        %561 = vmatpush.bf16.msra.mxu0 0
        %562 = vmatpush.bf16.msra.mxu0 %v468
        %563 = vmatpush.bf16.msra.mxu0 %v448
        %564 = vmatmul.bf16.gmra.mxu0 %v532
        %v565 = vpop.f32.mrf.mxu0
        %v566 = vadd.f32 %v547, %v565
        %v567 = vpop.f32.mrf.mxu0
        %v568 = vadd.f32 %v549, %v567
        %569 = vmatmul.bf16.gmra.mxu0 %v535
        %v570 = vpop.f32.mrf.mxu0
        %v571 = vadd.f32 %v552, %v570
        %v572 = vpop.f32.mrf.mxu0
        %v573 = vadd.f32 %v554, %v572
        %574 = vdwg.mxu0
        %s575 = scalar_lea.vmem %s329, 64 [#allocation2]
        %v576 = vld [vmem:[%s575] sm:$0xff]
        %v577 = vld [vmem:[%s575 + $0x8] sm:$0xff]
        %v578 = vld [vmem:[%s575 + $0x10] sm:$0xff]
        %v579 = vld [vmem:[%s575 + $0x18] sm:$0xff]
        %v584 = vunpack.c.l.b16 %v576
        %v585 = vunpack.c.h.b16 %v576
        %v586 = vunpack.c.l.b16 %v577
        %v587 = vunpack.c.h.b16 %v577
        %v588 = vunpack.c.l.b16 %v578
        %v589 = vunpack.c.h.b16 %v578
        %v590 = vunpack.c.l.b16 %v579
        %v591 = vunpack.c.h.b16 %v579
        %v592 = vpack.c.b16 %v586, %v584
        %v593 = vpack.c.b16 %v587, %v585
        %v594 = vpack.c.b16 %v590, %v588
        %v595 = vpack.c.b16 %v591, %v589
        %v599 = vsel %vm459, %v593, 0
        %v602 = vsel %vm459, %v595, 0
        %604 = vmatpush.bf16.msra.mxu0 %v447
        %605 = vmatpush.bf16.msra.mxu0 %v446
        %606 = vmatpush.bf16.msra.mxu0 %v445
        %607 = vmatpush.bf16.msra.mxu0 %v444
        %608 = vmatpush.bf16.msra.mxu0 %v443
        %609 = vmatpush.bf16.msra.mxu0 %v442
        %610 = vmatpush.bf16.msra.mxu0 %v441
        %611 = vmatpush.bf16.msra.mxu0 %v440
        %612 = vmatmul.bf16.gmra.mxu0 %v592
        %v613 = vpop.f32.mrf.mxu0
        %v614 = vadd.f32 0.0, %v613
        %v615 = vpop.f32.mrf.mxu0
        %v616 = vadd.f32 0.0, %v615
        %617 = vmatmul.bf16.gmra.mxu0 %v594
        %v618 = vpop.f32.mrf.mxu0
        %v619 = vadd.f32 0.0, %v618
        %v620 = vpop.f32.mrf.mxu0
        %v621 = vadd.f32 0.0, %v620
        %622 = vdwg.mxu0
        %623 = vmatpush.bf16.msra.mxu0 0
        %624 = vmatpush.bf16.msra.mxu0 0
        %625 = vmatpush.bf16.msra.mxu0 0
        %626 = vmatpush.bf16.msra.mxu0 0
        %627 = vmatpush.bf16.msra.mxu0 0
        %628 = vmatpush.bf16.msra.mxu0 0
        %629 = vmatpush.bf16.msra.mxu0 %v468
        %630 = vmatpush.bf16.msra.mxu0 %v448
        %631 = vmatmul.bf16.gmra.mxu0 %v599
        %v632 = vpop.f32.mrf.mxu0
        %v633 = vadd.f32 %v614, %v632
        %v634 = vpop.f32.mrf.mxu0
        %v635 = vadd.f32 %v616, %v634
        %636 = vmatmul.bf16.gmra.mxu0 %v602
        %v637 = vpop.f32.mrf.mxu0
        %v638 = vadd.f32 %v619, %v637
        %v639 = vpop.f32.mrf.mxu0
        %v640 = vadd.f32 %v621, %v639
        %641 = vdwg.mxu0
        %s642 = scalar_lea.vmem %s329, 96 [#allocation2]
        %v643 = vld [vmem:[%s642] sm:$0xff]
        %v644 = vld [vmem:[%s642 + $0x8] sm:$0xff]
        %v645 = vld [vmem:[%s642 + $0x10] sm:$0xff]
        %v646 = vld [vmem:[%s642 + $0x18] sm:$0xff]
        %v651 = vunpack.c.l.b16 %v643
        %v652 = vunpack.c.h.b16 %v643
        %v653 = vunpack.c.l.b16 %v644
        %v654 = vunpack.c.h.b16 %v644
        %v655 = vunpack.c.l.b16 %v645
        %v656 = vunpack.c.h.b16 %v645
        %v657 = vunpack.c.l.b16 %v646
        %v658 = vunpack.c.h.b16 %v646
        %v659 = vpack.c.b16 %v653, %v651
        %v660 = vpack.c.b16 %v654, %v652
        %v661 = vpack.c.b16 %v657, %v655
        %v662 = vpack.c.b16 %v658, %v656
        %v666 = vsel %vm459, %v660, 0
        %v669 = vsel %vm459, %v662, 0
        %671 = vmatpush.bf16.msra.mxu0 %v447
        %672 = vmatpush.bf16.msra.mxu0 %v446
        %673 = vmatpush.bf16.msra.mxu0 %v445
        %674 = vmatpush.bf16.msra.mxu0 %v444
        %675 = vmatpush.bf16.msra.mxu0 %v443
        %676 = vmatpush.bf16.msra.mxu0 %v442
        %677 = vmatpush.bf16.msra.mxu0 %v441
        %678 = vmatpush.bf16.msra.mxu0 %v440
        %679 = vmatmul.bf16.gmra.mxu0 %v659
        %v680 = vpop.f32.mrf.mxu0
        %v681 = vadd.f32 0.0, %v680
        %v682 = vpop.f32.mrf.mxu0
        %v683 = vadd.f32 0.0, %v682
        %684 = vmatmul.bf16.gmra.mxu0 %v661
        %v685 = vpop.f32.mrf.mxu0
        %v686 = vadd.f32 0.0, %v685
        %v687 = vpop.f32.mrf.mxu0
        %v688 = vadd.f32 0.0, %v687
        %689 = vdwg.mxu0
        %690 = vmatpush.bf16.msra.mxu0 0
        %691 = vmatpush.bf16.msra.mxu0 0
        %692 = vmatpush.bf16.msra.mxu0 0
        %693 = vmatpush.bf16.msra.mxu0 0
        %694 = vmatpush.bf16.msra.mxu0 0
        %695 = vmatpush.bf16.msra.mxu0 0
        %696 = vmatpush.bf16.msra.mxu0 %v468
        %697 = vmatpush.bf16.msra.mxu0 %v448
        %698 = vmatmul.bf16.gmra.mxu0 %v666
        %v699 = vpop.f32.mrf.mxu0
        %v700 = vadd.f32 %v681, %v699
        %v701 = vpop.f32.mrf.mxu0
        %v702 = vadd.f32 %v683, %v701
        %703 = vmatmul.bf16.gmra.mxu0 %v669
        %v704 = vpop.f32.mrf.mxu0
        %v705 = vadd.f32 %v686, %v704
        %v706 = vpop.f32.mrf.mxu0
        %v707 = vadd.f32 %v688, %v706
        %708 = vdwg.mxu0
        %v709 = vmax.f32 %v499, %v566
        %v710 = vmax.f32 %v501, %v568
        %v711 = vmax.f32 %v504, %v571
        %v712 = vmax.f32 %v506, %v573
        %v713 = vmax.f32 %v633, %v700
        %v714 = vmax.f32 %v635, %v702
        %v715 = vmax.f32 %v638, %v705
        %v716 = vmax.f32 %v640, %v707
        %v717 = vmax.f32 %v709, %v713
        %v718 = vmax.f32 %v710, %v714
        %v719 = vmax.f32 %v711, %v715
        %v720 = vmax.f32 %v712, %v716
        %v721 = vld [vmem:[%s2] sm:$0x1]
        %v723 = vperm.slane %v721, 0
        %v725 = vadd.f32 %v717, %v723
        %v726 = vadd.f32 %v718, %v723
        %v727 = vadd.f32 %v719, %v723
        %v728 = vadd.f32 %v720, %v723
        %v729 = vmax.f32 %v725, 0.0
        %v730 = vmax.f32 %v726, 0.0
        %v731 = vmax.f32 %v727, 0.0
        %v732 = vmax.f32 %v728, 0.0
        %v733 = vpack.c.bf16 %v729, %v729
        %v734 = vpack.c.bf16 %v730, %v730
        %v735 = vpack.c.bf16 %v731, %v731
        %v736 = vpack.c.bf16 %v732, %v732
        %vm737 = vcmask 125952
        %738 = vst.msk [vmem:[%s348] sm:$0xf] %vm737, %v733
        %739 = vst.msk [vmem:[%s348 + $0x4] sm:$0xf] %vm737, %v734
        %740 = vst.msk [vmem:[%s348 + $0x8] sm:$0xf] %vm737, %v735
        %741 = vst.msk [vmem:[%s348 + $0xc] sm:$0xf] %vm737, %v736
        %s742 = sand.u32 %s90, 1
        %s743 = sand.u32 %s90, 1
        %s744 = smul.addr %s743, 16
        %s745 = scalar_lea.vmem [#allocation3], %s744
        // Predicated region
        $region85: #{net_forward.4} parent=79 // pred_check
          %p746 = pneg %p100
        $region86: #{net_forward.4} parent=79 // pred_check_branch
          %748 = sbr.rel (%p746) target = $region88
        $region87: #{net_forward.4} parent=79 // pred_region
          %s749 = smul.u32 4, %s14
          %s750 = ssub.s32 7, %s749
          %p751 = scmp.lt.s32.totalorder %s750, 4
          %s752 = scalar_select %p751, %s750, 4
          %s753 = smul.u32 4, %s752
          %p754 = scmp.ne.s32.totalorder 0, %s753
          %s755 = smul.addr %s749, 4
          %s756 = scalar_lea.vmem %s3, %s755
          // Predicated region
          $region89: #{net_forward.4} parent=87 // pred_check
            %p757 = pneg %p754
          $region90: #{net_forward.4} parent=87 // pred_check_branch
            %759 = sbr.rel (%p757) target = $region92
          $region91: #{net_forward.4} parent=87 // pred_region
            // Predicated region
            $region93: #{net_forward.4} parent=91 // pred_check
              _
            $region94: #{net_forward.4} parent=91 // pred_check_branch
              %761 = sbr.rel target = $region96
            $region95: #{net_forward.4} parent=91 // pred_region
              // Predicated region
              $region115: #{net_forward.4} parent=95 // pred_check
                _
              $region116: #{net_forward.4} parent=95 // pred_check_branch
                %817 = sbr.rel (0) target = $region118
              $region117: #{net_forward.4} parent=95 // pred_region
                %s819 = ssub.s32 16, 1
                %s820 = sshrl.u32 %s752, 2
                // While loop
                $region119: #{net_forward.4} parent=117 // loop_pre_header
                  _
                $region120: #{net_forward.4} parent=117 // loop_header
                  %s822 = sphi 0, %s824
                  %p823 = scmp.ge.s32.totalorder %s822, %s820
                  %s827 = sphi 0, %s840
                  %s828 = sphi %s745, %s843
                  %s829 = sphi %s756, %s844
                $region121: #{net_forward.4} parent=117 // loop_header_branch
                  %826 = sbr.rel (%p823) target = $region125
                $region122: #{net_forward.4} parent=117 // loop_body
                  %v830 = vld [vmem:[%s828] sm:%s819]
                  %831 = vst [vmem:[%s829] sm:%s819] %v830
                  %v832 = vld [vmem:[%s828 + $0x4] sm:%s819]
                  %833 = vst [vmem:[%s829 + $0x4] sm:%s819] %v832
                  %v834 = vld [vmem:[%s828 + $0x8] sm:%s819]
                  %835 = vst [vmem:[%s829 + $0x8] sm:%s819] %v834
                  %v836 = vld [vmem:[%s828 + $0xc] sm:%s819]
                  %837 = vst [vmem:[%s829 + $0xc] sm:%s819] %v836
                  %s838 = sadd.s32 1, %s827
                  %p839 = scmp.ge.s32.totalorder %s838, %s820
                  %s840 = scalar_select %p839, 0, %s838
                  %s841 = smul.u32 %s840, 16
                  %s842 = smul.u32 %s840, 16
                  %s843 = scalar_lea.vmem %s745, %s841 [#allocation3]
                  %s844 = scalar_lea.vmem %s756, %s842
                $region123: #{net_forward.4} parent=117 // loop_footer
                  %s824 = sadd.s32 %s822, 1
                $region124: #{net_forward.4} parent=117 // loop_footer_branch
                  %821 = sbr.rel target = $region120
                $region125: #{net_forward.4} parent=117 // loop_exit
                  _
                %s845 = sshrl.u32 %s752, 2
                %s846 = sand.u32 %s752, 3
                %s847 = smul.u32 %s845, 4
                %s848 = smul.u32 4, %s847
                %s849 = scalar_lea.vmem %s745, %s848 [#allocation3]
                %s850 = smul.u32 4, %s847
                %s851 = scalar_lea.vmem %s756, %s850
                // While loop
                $region126: #{net_forward.4} parent=117 // loop_pre_header
                  _
                $region127: #{net_forward.4} parent=117 // loop_header
                  %s853 = sphi 0, %s855
                  %p854 = scmp.ge.s32.totalorder %s853, %s846
                  %s858 = sphi 0, %s865
                  %s859 = sphi %s849, %s868
                  %s860 = sphi %s851, %s869
                $region128: #{net_forward.4} parent=117 // loop_header_branch
                  %857 = sbr.rel (%p854) target = $region132
                $region129: #{net_forward.4} parent=117 // loop_body
                  %v861 = vld [vmem:[%s859] sm:%s819]
                  %862 = vst [vmem:[%s860] sm:%s819] %v861
                  %s863 = sadd.s32 1, %s858
                  %p864 = scmp.ge.s32.totalorder %s863, %s846
                  %s865 = scalar_select %p864, 0, %s863
                  %s866 = smul.u32 %s865, 4
                  %s867 = smul.u32 %s865, 4
                  %s868 = scalar_lea.vmem %s849, %s866 [#allocation3]
                  %s869 = scalar_lea.vmem %s851, %s867
                $region130: #{net_forward.4} parent=117 // loop_footer
                  %s855 = sadd.s32 %s853, 1
                $region131: #{net_forward.4} parent=117 // loop_footer_branch
                  %852 = sbr.rel target = $region127
                $region132: #{net_forward.4} parent=117 // loop_exit
                  _
              $region118: #{net_forward.4} parent=95 // pred_fallthru
                _
            $region96: #{net_forward.4} parent=91 // pred_fallthru
              _
            // Predicated region
            $region97: #{net_forward.4} parent=91 // pred_check
              _
            $region98: #{net_forward.4} parent=91 // pred_check_branch
              %763 = sbr.rel (0) target = $region100
            $region99: #{net_forward.4} parent=91 // pred_region
              %s765 = ssub.s32 16, 1
              %s766 = sshrl.u32 %s752, 2
              // While loop
              $region101: #{net_forward.4} parent=99 // loop_pre_header
                _
              $region102: #{net_forward.4} parent=99 // loop_header
                %s768 = sphi 0, %s770
                %p769 = scmp.ge.s32.totalorder %s768, %s766
                %s773 = sphi 0, %s786
                %s774 = sphi %s745, %s789
                %s775 = sphi %s756, %s790
              $region103: #{net_forward.4} parent=99 // loop_header_branch
                %772 = sbr.rel (%p769) target = $region107
              $region104: #{net_forward.4} parent=99 // loop_body
                %v776 = vld [vmem:[%s774] sm:%s765]
                %777 = vst [vmem:[%s775] sm:%s765] %v776
                %v778 = vld [vmem:[%s774 + $0x4] sm:%s765]
                %779 = vst [vmem:[%s775 + $0x4] sm:%s765] %v778
                %v780 = vld [vmem:[%s774 + $0x8] sm:%s765]
                %781 = vst [vmem:[%s775 + $0x8] sm:%s765] %v780
                %v782 = vld [vmem:[%s774 + $0xc] sm:%s765]
                %783 = vst [vmem:[%s775 + $0xc] sm:%s765] %v782
                %s784 = sadd.s32 1, %s773
                %p785 = scmp.ge.s32.totalorder %s784, %s766
                %s786 = scalar_select %p785, 0, %s784
                %s787 = smul.u32 %s786, 16
                %s788 = smul.u32 %s786, 16
                %s789 = scalar_lea.vmem %s745, %s787 [#allocation3]
                %s790 = scalar_lea.vmem %s756, %s788
              $region105: #{net_forward.4} parent=99 // loop_footer
                %s770 = sadd.s32 %s768, 1
              $region106: #{net_forward.4} parent=99 // loop_footer_branch
                %767 = sbr.rel target = $region102
              $region107: #{net_forward.4} parent=99 // loop_exit
                _
              %s791 = sshrl.u32 %s752, 2
              %s792 = sand.u32 %s752, 3
              %s793 = smul.u32 %s791, 4
              %s794 = smul.u32 4, %s793
              %s795 = scalar_lea.vmem %s745, %s794 [#allocation3]
              %s796 = smul.u32 4, %s793
              %s797 = scalar_lea.vmem %s756, %s796
              // While loop
              $region108: #{net_forward.4} parent=99 // loop_pre_header
                _
              $region109: #{net_forward.4} parent=99 // loop_header
                %s799 = sphi 0, %s801
                %p800 = scmp.ge.s32.totalorder %s799, %s792
                %s804 = sphi 0, %s811
                %s805 = sphi %s795, %s814
                %s806 = sphi %s797, %s815
              $region110: #{net_forward.4} parent=99 // loop_header_branch
                %803 = sbr.rel (%p800) target = $region114
              $region111: #{net_forward.4} parent=99 // loop_body
                %v807 = vld [vmem:[%s805] sm:%s765]
                %808 = vst [vmem:[%s806] sm:%s765] %v807
                %s809 = sadd.s32 1, %s804
                %p810 = scmp.ge.s32.totalorder %s809, %s792
                %s811 = scalar_select %p810, 0, %s809
                %s812 = smul.u32 %s811, 4
                %s813 = smul.u32 %s811, 4
                %s814 = scalar_lea.vmem %s795, %s812 [#allocation3]
                %s815 = scalar_lea.vmem %s797, %s813
              $region112: #{net_forward.4} parent=99 // loop_footer
                %s801 = sadd.s32 %s799, 1
              $region113: #{net_forward.4} parent=99 // loop_footer_branch
                %798 = sbr.rel target = $region109
              $region114: #{net_forward.4} parent=99 // loop_exit
                _
            $region100: #{net_forward.4} parent=91 // pred_fallthru
              _
          $region92: #{net_forward.4} parent=87 // pred_fallthru
            _
          %870 = vnop
        $region88: #{net_forward.4} parent=79 // pred_fallthru
          _
      $region80: #{net_forward.4} parent=5 // pred_fallthru
        _
      %p871 = scmp.le.s32.totalorder 2, %s9
      // Predicated region
      $region133: #{net_forward.4} parent=5 // pred_check
        %p872 = pneg %p871
      $region134: #{net_forward.4} parent=5 // pred_check_branch
        %874 = sbr.rel (%p872) target = $region136
      $region135: #{net_forward.4} parent=5 // pred_region
        %s875 = ssub.s32 %s9, 2
        // Predicated region
        $region137: #{net_forward.4} parent=135 // pred_check
          %p876 = pneg %p106
        $region138: #{net_forward.4} parent=135 // pred_check_branch
          %878 = sbr.rel (%p876) target = $region140
        $region139: #{net_forward.4} parent=135 // pred_region
          %s879 = sand.u32 %s91, 1
          %s880 = sand.u32 %s91, 1
          %s881 = smul.addr %s880, 16
          %s882 = scalar_lea.vmem [#allocation3], %s881
        $region140: #{net_forward.4} parent=135 // pred_fallthru
          _
      $region136: #{net_forward.4} parent=5 // pred_fallthru
        _
    $region6: #{net_forward.4} parent=1 // loop_footer
      %s13 = sadd.s32 1, %s9
    $region7: #{net_forward.4} parent=1 // loop_footer_branch
      %8 = sbr.rel target = $region3
    $region8: #{net_forward.4} parent=1 // loop_exit
      _

// kernel: net_forward.5
$region0: #{net_forward.5}
  #allocation0 [shape = 'u32[]', space=smem, size = 0x4, offset = 0x4, fixed_abs, tag = 'smem constant byte address 0x4 - core index']
  #allocation1 [shape = 'u32[72,128]{1,0:T(1,128)}', space=vmem, size = 0x9000, scoped, tag = 'internal scratch']
  %s0 = inlined_call_operand.vmem [shape: bf16[2,400], index: 0, kind: input, shape index: {}]
  %s1 = inlined_call_operand.vmem [shape: bf16[400,128], index: 1, kind: input, shape index: {}]
  %s2 = inlined_call_operand.vmem [shape: f32[1,128], index: 2, kind: input, shape index: {}]
  %s3 = inlined_call_operand.vmem [shape: bf16[128,128], index: 3, kind: input, shape index: {}]
  %s4 = inlined_call_operand.vmem [shape: f32[1,128], index: 4, kind: input, shape index: {}]
  %s5 = inlined_call_operand.vmem [shape: bf16[128,10], index: 5, kind: input, shape index: {}]
  %s6 = inlined_call_operand.vmem [shape: f32[1,10], index: 6, kind: input, shape index: {}]
  %s7 = inlined_call_operand.hbm [shape: f32[2,10], index: 7, kind: output, shape index: {}]
  %s8 = sld [smem:[#allocation0]]
  $region38: #{net_forward.5} parent=0
    _
  %s10 = ssub.s32 1, %s8
  %s11 = scalar_select 0, %s10, %s8
  $region1: #{net_forward.5} parent=0
    #allocation2 [shape = 'u8[1024]{0}', space=vmem, size = 0x400, scoped, tag = 'output window, operand 0, single buffered']
    #allocation3 [shape = 's32[1]{0}', space=sflag, size = 0x4, scoped, tag = 'scoped memory for net_forward.5']
    %12 = vsyncpa [#allocation3], 0
    // Predicated region
    $region2: #{net_forward.5} parent=1 // pred_check
      _
    $region3: #{net_forward.5} parent=1 // pred_check_branch
      %14 = sbr.rel (0) target = $region5
    $region4: #{net_forward.5} parent=1 // pred_region
      _
    $region5: #{net_forward.5} parent=1 // pred_fallthru
      _
    // Predicated region
    $region6: #{net_forward.5} parent=1 // pred_check
      _
    $region7: #{net_forward.5} parent=1 // pred_check_branch
      %16 = sbr.rel (0) target = $region9
    $region8: #{net_forward.5} parent=1 // pred_region
      _
    $region9: #{net_forward.5} parent=1 // pred_fallthru
      _
    // Predicated region
    $region10: #{net_forward.5} parent=1 // pred_check
      _
    $region11: #{net_forward.5} parent=1 // pred_check_branch
      %18 = sbr.rel (0) target = $region13
    $region12: #{net_forward.5} parent=1 // pred_region
      _
    $region13: #{net_forward.5} parent=1 // pred_fallthru
      _
    // Predicated region
    $region14: #{net_forward.5} parent=1 // pred_check
      _
    $region15: #{net_forward.5} parent=1 // pred_check_branch
      %20 = sbr.rel (0) target = $region17
    $region16: #{net_forward.5} parent=1 // pred_region
      _
    $region17: #{net_forward.5} parent=1 // pred_fallthru
      _
    // Predicated region
    $region18: #{net_forward.5} parent=1 // pred_check
      _
    $region19: #{net_forward.5} parent=1 // pred_check_branch
      %22 = sbr.rel (0) target = $region21
    $region20: #{net_forward.5} parent=1 // pred_region
      _
    $region21: #{net_forward.5} parent=1 // pred_fallthru
      _
    // Predicated region
    $region22: #{net_forward.5} parent=1 // pred_check
      _
    $region23: #{net_forward.5} parent=1 // pred_check_branch
      %24 = sbr.rel (0) target = $region25
    $region24: #{net_forward.5} parent=1 // pred_region
      _
    $region25: #{net_forward.5} parent=1 // pred_fallthru
      _
    // Predicated region
    $region26: #{net_forward.5} parent=1 // pred_check
      _
    $region27: #{net_forward.5} parent=1 // pred_check_branch
      %26 = sbr.rel (0) target = $region29
    $region28: #{net_forward.5} parent=1 // pred_region
      _
    $region29: #{net_forward.5} parent=1 // pred_fallthru
      _
    %v28 = vld [vmem:[%s0] sm:$0xf]
    %v29 = vld [vmem:[%s1] sm:$0xf]
    %v30 = vld [vmem:[%s1 + $0x4] sm:$0xf]
    %v31 = vld [vmem:[%s1 + $0x8] sm:$0xf]
    %v32 = vld [vmem:[%s1 + $0xc] sm:$0xf]
    %v33 = vld [vmem:[%s1 + $0x10] sm:$0xf]
    %v34 = vld [vmem:[%s1 + $0x14] sm:$0xf]
    %v35 = vld [vmem:[%s1 + $0x18] sm:$0xf]
    %v36 = vld [vmem:[%s1 + $0x1c] sm:$0xf]
    %v37 = vld [vmem:[%s1 + $0x20] sm:$0xf]
    %v38 = vld [vmem:[%s1 + $0x24] sm:$0xf]
    %v39 = vld [vmem:[%s1 + $0x28] sm:$0xf]
    %v40 = vld [vmem:[%s1 + $0x2c] sm:$0xf]
    %v41 = vld [vmem:[%s1 + $0x30] sm:$0xf]
    %v42 = vld [vmem:[%s1 + $0x34] sm:$0xf]
    %v43 = vld [vmem:[%s1 + $0x38] sm:$0xf]
    %v44 = vld [vmem:[%s1 + $0x3c] sm:$0xf]
    %v45 = vld [vmem:[%s1 + $0x40] sm:$0xf]
    %v46 = vld [vmem:[%s1 + $0x44] sm:$0xf]
    %v47 = vld [vmem:[%s1 + $0x48] sm:$0xf]
    %v48 = vld [vmem:[%s1 + $0x4c] sm:$0xf]
    %v49 = vld [vmem:[%s1 + $0x50] sm:$0xf]
    %v50 = vld [vmem:[%s1 + $0x54] sm:$0xf]
    %v51 = vld [vmem:[%s1 + $0x58] sm:$0xf]
    %v52 = vld [vmem:[%s1 + $0x5c] sm:$0xf]
    %v53 = vld [vmem:[%s1 + $0x60] sm:$0xf]
    %v54 = vld [vmem:[%s1 + $0x64] sm:$0xf]
    %v55 = vld [vmem:[%s1 + $0x68] sm:$0xf]
    %v56 = vld [vmem:[%s1 + $0x6c] sm:$0xf]
    %v57 = vld [vmem:[%s1 + $0x70] sm:$0xf]
    %v58 = vld [vmem:[%s1 + $0x74] sm:$0xf]
    %v59 = vld [vmem:[%s1 + $0x78] sm:$0xf]
    %v60 = vld [vmem:[%s1 + $0x7c] sm:$0xf]
    %v61 = vld [vmem:[%s1 + $0x80] sm:$0xf]
    %v62 = vld [vmem:[%s1 + $0x84] sm:$0xf]
    %v63 = vld [vmem:[%s1 + $0x88] sm:$0xf]
    %v64 = vld [vmem:[%s1 + $0x8c] sm:$0xf]
    %v65 = vld [vmem:[%s1 + $0x90] sm:$0xf]
    %v66 = vld [vmem:[%s1 + $0x94] sm:$0xf]
    %v67 = vld [vmem:[%s1 + $0x98] sm:$0xf]
    %v68 = vld [vmem:[%s1 + $0x9c] sm:$0xf]
    %v69 = vld [vmem:[%s1 + $0xa0] sm:$0xf]
    %v70 = vld [vmem:[%s1 + $0xa4] sm:$0xf]
    %v71 = vld [vmem:[%s1 + $0xa8] sm:$0xf]
    %v72 = vld [vmem:[%s1 + $0xac] sm:$0xf]
    %v73 = vld [vmem:[%s1 + $0xb0] sm:$0xf]
    %v74 = vld [vmem:[%s1 + $0xb4] sm:$0xf]
    %v75 = vld [vmem:[%s1 + $0xb8] sm:$0xf]
    %v76 = vld [vmem:[%s1 + $0xbc] sm:$0xf]
    %v77 = vld [vmem:[%s1 + $0xc0] sm:$0xf]
    %v78 = vld [vmem:[%s1 + $0xc4] sm:$0xf]
    %v79 = vld [vmem:[%s2] sm:$0x1]
    %v81 = vperm.slane %v79, 0
    %84 = vst [vmem:[#allocation1] ss:$9 sm:$0xff] %v28
    %v85 = vld [vmem:[#allocation1] sm:$0xff]
    %v86 = vld [vmem:[#allocation1 + $0x9] sm:$0xff]
    %v87 = vld [vmem:[#allocation1 + $0x12] sm:$0xff]
    %v88 = vld [vmem:[#allocation1 + $0x1b] sm:$0xff]
    %v142 = vunpack.c.l.b16 %v29
    %v143 = vunpack.c.l.b16 %v30
    %v144 = vunpack.c.l.b16 %v31
    %v145 = vunpack.c.l.b16 %v32
    %v146 = vunpack.c.l.b16 %v33
    %v147 = vunpack.c.l.b16 %v34
    %v148 = vunpack.c.l.b16 %v35
    %v149 = vunpack.c.l.b16 %v36
    %v150 = vunpack.c.l.b16 %v37
    %v151 = vunpack.c.l.b16 %v38
    %v152 = vunpack.c.l.b16 %v39
    %v153 = vunpack.c.l.b16 %v40
    %v154 = vunpack.c.l.b16 %v41
    %v155 = vunpack.c.l.b16 %v42
    %v156 = vunpack.c.l.b16 %v43
    %v157 = vunpack.c.l.b16 %v44
    %v158 = vunpack.c.l.b16 %v45
    %v159 = vunpack.c.l.b16 %v46
    %v160 = vunpack.c.l.b16 %v47
    %v161 = vunpack.c.l.b16 %v48
    %v162 = vunpack.c.l.b16 %v49
    %v163 = vunpack.c.l.b16 %v50
    %v164 = vunpack.c.l.b16 %v51
    %v165 = vunpack.c.l.b16 %v52
    %v166 = vunpack.c.l.b16 %v53
    %v167 = vunpack.c.l.b16 %v54
    %v168 = vunpack.c.l.b16 %v55
    %v169 = vunpack.c.l.b16 %v56
    %v170 = vunpack.c.l.b16 %v57
    %v171 = vunpack.c.l.b16 %v58
    %v172 = vunpack.c.l.b16 %v59
    %v173 = vunpack.c.l.b16 %v60
    %v174 = vunpack.c.l.b16 %v61
    %v175 = vunpack.c.l.b16 %v62
    %v176 = vunpack.c.l.b16 %v63
    %v177 = vunpack.c.l.b16 %v64
    %v178 = vunpack.c.l.b16 %v65
    %v179 = vunpack.c.l.b16 %v66
    %v180 = vunpack.c.l.b16 %v67
    %v181 = vunpack.c.l.b16 %v68
    %v182 = vunpack.c.l.b16 %v69
    %v183 = vunpack.c.l.b16 %v70
    %v184 = vunpack.c.l.b16 %v71
    %v185 = vunpack.c.l.b16 %v72
    %v186 = vunpack.c.l.b16 %v73
    %v187 = vunpack.c.l.b16 %v74
    %v188 = vunpack.c.l.b16 %v75
    %v189 = vunpack.c.l.b16 %v76
    %v190 = vunpack.c.l.b16 %v77
    %v191 = vunpack.c.l.b16 %v78
    %v192 = vpack.c.b16 %v143, %v142
    %v193 = vpack.c.b16 %v145, %v144
    %v194 = vpack.c.b16 %v147, %v146
    %v195 = vpack.c.b16 %v149, %v148
    %v196 = vpack.c.b16 %v151, %v150
    %v197 = vpack.c.b16 %v153, %v152
    %v198 = vpack.c.b16 %v155, %v154
    %v199 = vpack.c.b16 %v157, %v156
    %v200 = vpack.c.b16 %v159, %v158
    %v201 = vpack.c.b16 %v161, %v160
    %v202 = vpack.c.b16 %v163, %v162
    %v203 = vpack.c.b16 %v165, %v164
    %v204 = vpack.c.b16 %v167, %v166
    %v205 = vpack.c.b16 %v169, %v168
    %v206 = vpack.c.b16 %v171, %v170
    %v207 = vpack.c.b16 %v173, %v172
    %v208 = vpack.c.b16 %v175, %v174
    %v209 = vpack.c.b16 %v177, %v176
    %v210 = vpack.c.b16 %v179, %v178
    %v211 = vpack.c.b16 %v181, %v180
    %v212 = vpack.c.b16 %v183, %v182
    %v213 = vpack.c.b16 %v185, %v184
    %v214 = vpack.c.b16 %v187, %v186
    %v215 = vpack.c.b16 %v189, %v188
    %v216 = vpack.c.b16 %v191, %v190
    %vm242 = vcmask 130048
    %v243 = vsel %vm242, %v88, 0
    %245 = vmatpush.bf16.msra.mxu0 %v199
    %246 = vmatpush.bf16.msra.mxu0 %v198
    %247 = vmatpush.bf16.msra.mxu0 %v197
    %248 = vmatpush.bf16.msra.mxu0 %v196
    %249 = vmatpush.bf16.msra.mxu0 %v195
    %250 = vmatpush.bf16.msra.mxu0 %v194
    %251 = vmatpush.bf16.msra.mxu0 %v193
    %252 = vmatpush.bf16.msra.mxu0 %v192
    %253 = vmatmul.bf16.gmra.mxu0 %v85
    %v254 = vpop.f32.mrf.mxu0
    %v255 = vadd.f32 %v81, %v254
    %v256 = vpop.f32.mrf.mxu0
    %257 = vdwg.mxu0
    %258 = vmatpush.bf16.msra.mxu0 %v207
    %259 = vmatpush.bf16.msra.mxu0 %v206
    %260 = vmatpush.bf16.msra.mxu0 %v205
    %261 = vmatpush.bf16.msra.mxu0 %v204
    %262 = vmatpush.bf16.msra.mxu0 %v203
    %263 = vmatpush.bf16.msra.mxu0 %v202
    %264 = vmatpush.bf16.msra.mxu0 %v201
    %265 = vmatpush.bf16.msra.mxu0 %v200
    %266 = vmatmul.bf16.gmra.mxu0 %v86
    %v267 = vpop.f32.mrf.mxu0
    %v268 = vadd.f32 %v255, %v267
    %v269 = vpop.f32.mrf.mxu0
    %270 = vdwg.mxu0
    %271 = vmatpush.bf16.msra.mxu0 %v215
    %272 = vmatpush.bf16.msra.mxu0 %v214
    %273 = vmatpush.bf16.msra.mxu0 %v213
    %274 = vmatpush.bf16.msra.mxu0 %v212
    %275 = vmatpush.bf16.msra.mxu0 %v211
    %276 = vmatpush.bf16.msra.mxu0 %v210
    %277 = vmatpush.bf16.msra.mxu0 %v209
    %278 = vmatpush.bf16.msra.mxu0 %v208
    %279 = vmatmul.bf16.gmra.mxu0 %v87
    %v280 = vpop.f32.mrf.mxu0
    %v281 = vadd.f32 %v268, %v280
    %v282 = vpop.f32.mrf.mxu0
    %283 = vdwg.mxu0
    %284 = vmatpush.bf16.msra.mxu0 0
    %285 = vmatpush.bf16.msra.mxu0 0
    %286 = vmatpush.bf16.msra.mxu0 0
    %287 = vmatpush.bf16.msra.mxu0 0
    %288 = vmatpush.bf16.msra.mxu0 0
    %289 = vmatpush.bf16.msra.mxu0 0
    %290 = vmatpush.bf16.msra.mxu0 0
    %291 = vmatpush.bf16.msra.mxu0 %v216
    %292 = vmatmul.bf16.gmra.mxu0 %v243
    %v293 = vpop.f32.mrf.mxu0
    %v294 = vadd.f32 %v281, %v293
    %v295 = vpop.f32.mrf.mxu0
    %296 = vdwg.mxu0
    %v297 = vmax.f32 %v294, 0.0
    %v298 = vpack.c.bf16 %v297, %v297
    %v299 = vld [vmem:[%s3] sm:$0xf]
    %v300 = vld [vmem:[%s3 + $0x4] sm:$0xf]
    %v301 = vld [vmem:[%s3 + $0x8] sm:$0xf]
    %v302 = vld [vmem:[%s3 + $0xc] sm:$0xf]
    %v303 = vld [vmem:[%s3 + $0x10] sm:$0xf]
    %v304 = vld [vmem:[%s3 + $0x14] sm:$0xf]
    %v305 = vld [vmem:[%s3 + $0x18] sm:$0xf]
    %v306 = vld [vmem:[%s3 + $0x1c] sm:$0xf]
    %v307 = vld [vmem:[%s3 + $0x20] sm:$0xf]
    %v308 = vld [vmem:[%s3 + $0x24] sm:$0xf]
    %v309 = vld [vmem:[%s3 + $0x28] sm:$0xf]
    %v310 = vld [vmem:[%s3 + $0x2c] sm:$0xf]
    %v311 = vld [vmem:[%s3 + $0x30] sm:$0xf]
    %v312 = vld [vmem:[%s3 + $0x34] sm:$0xf]
    %v313 = vld [vmem:[%s3 + $0x38] sm:$0xf]
    %v314 = vld [vmem:[%s3 + $0x3c] sm:$0xf]
    %v315 = vld [vmem:[%s4] sm:$0x1]
    %v317 = vperm.slane %v315, 0
    %v335 = vunpack.c.l.b16 %v299
    %v336 = vunpack.c.l.b16 %v300
    %v337 = vunpack.c.l.b16 %v301
    %v338 = vunpack.c.l.b16 %v302
    %v339 = vunpack.c.l.b16 %v303
    %v340 = vunpack.c.l.b16 %v304
    %v341 = vunpack.c.l.b16 %v305
    %v342 = vunpack.c.l.b16 %v306
    %v343 = vunpack.c.l.b16 %v307
    %v344 = vunpack.c.l.b16 %v308
    %v345 = vunpack.c.l.b16 %v309
    %v346 = vunpack.c.l.b16 %v310
    %v347 = vunpack.c.l.b16 %v311
    %v348 = vunpack.c.l.b16 %v312
    %v349 = vunpack.c.l.b16 %v313
    %v350 = vunpack.c.l.b16 %v314
    %v351 = vpack.c.b16 %v336, %v335
    %v352 = vpack.c.b16 %v338, %v337
    %v353 = vpack.c.b16 %v340, %v339
    %v354 = vpack.c.b16 %v342, %v341
    %v355 = vpack.c.b16 %v344, %v343
    %v356 = vpack.c.b16 %v346, %v345
    %v357 = vpack.c.b16 %v348, %v347
    %v358 = vpack.c.b16 %v350, %v349
    %367 = vmatpush.bf16.msra.mxu0 %v358
    %368 = vmatpush.bf16.msra.mxu0 %v357
    %369 = vmatpush.bf16.msra.mxu0 %v356
    %370 = vmatpush.bf16.msra.mxu0 %v355
    %371 = vmatpush.bf16.msra.mxu0 %v354
    %372 = vmatpush.bf16.msra.mxu0 %v353
    %373 = vmatpush.bf16.msra.mxu0 %v352
    %374 = vmatpush.bf16.msra.mxu0 %v351
    %375 = vmatmul.bf16.gmra.mxu0 %v298
    %v376 = vpop.f32.mrf.mxu0
    %v377 = vadd.f32 %v317, %v376
    %v378 = vpop.f32.mrf.mxu0
    %379 = vdwg.mxu0
    %v380 = vmax.f32 %v377, 0.0
    %v381 = vpack.c.bf16 %v380, %v380
    %v382 = vld [vmem:[%s5] sm:$0xf]
    %v383 = vld [vmem:[%s5 + $0x4] sm:$0xf]
    %v384 = vld [vmem:[%s5 + $0x8] sm:$0xf]
    %v385 = vld [vmem:[%s5 + $0xc] sm:$0xf]
    %v386 = vld [vmem:[%s5 + $0x10] sm:$0xf]
    %v387 = vld [vmem:[%s5 + $0x14] sm:$0xf]
    %v388 = vld [vmem:[%s5 + $0x18] sm:$0xf]
    %v389 = vld [vmem:[%s5 + $0x1c] sm:$0xf]
    %v390 = vld [vmem:[%s5 + $0x20] sm:$0xf]
    %v391 = vld [vmem:[%s5 + $0x24] sm:$0xf]
    %v392 = vld [vmem:[%s5 + $0x28] sm:$0xf]
    %v393 = vld [vmem:[%s5 + $0x2c] sm:$0xf]
    %v394 = vld [vmem:[%s5 + $0x30] sm:$0xf]
    %v395 = vld [vmem:[%s5 + $0x34] sm:$0xf]
    %v396 = vld [vmem:[%s5 + $0x38] sm:$0xf]
    %v397 = vld [vmem:[%s5 + $0x3c] sm:$0xf]
    %v398 = vld [vmem:[%s6] sm:$0x1]
    %v400 = vperm.slane %v398, 0
    %v418 = vunpack.c.l.b16 %v382
    %v419 = vunpack.c.l.b16 %v383
    %v420 = vunpack.c.l.b16 %v384
    %v421 = vunpack.c.l.b16 %v385
    %v422 = vunpack.c.l.b16 %v386
    %v423 = vunpack.c.l.b16 %v387
    %v424 = vunpack.c.l.b16 %v388
    %v425 = vunpack.c.l.b16 %v389
    %v426 = vunpack.c.l.b16 %v390
    %v427 = vunpack.c.l.b16 %v391
    %v428 = vunpack.c.l.b16 %v392
    %v429 = vunpack.c.l.b16 %v393
    %v430 = vunpack.c.l.b16 %v394
    %v431 = vunpack.c.l.b16 %v395
    %v432 = vunpack.c.l.b16 %v396
    %v433 = vunpack.c.l.b16 %v397
    %v434 = vpack.c.b16 %v419, %v418
    %v435 = vpack.c.b16 %v421, %v420
    %v436 = vpack.c.b16 %v423, %v422
    %v437 = vpack.c.b16 %v425, %v424
    %v438 = vpack.c.b16 %v427, %v426
    %v439 = vpack.c.b16 %v429, %v428
    %v440 = vpack.c.b16 %v431, %v430
    %v441 = vpack.c.b16 %v433, %v432
    %450 = vmatpush.bf16.msra.mxu0 %v441
    %451 = vmatpush.bf16.msra.mxu0 %v440
    %452 = vmatpush.bf16.msra.mxu0 %v439
    %453 = vmatpush.bf16.msra.mxu0 %v438
    %454 = vmatpush.bf16.msra.mxu0 %v437
    %455 = vmatpush.bf16.msra.mxu0 %v436
    %456 = vmatpush.bf16.msra.mxu0 %v435
    %457 = vmatpush.bf16.msra.mxu0 %v434
    %458 = vmatmul.bf16.gmra.mxu0 %v381
    %v459 = vpop.f32.mrf.mxu0
    %v460 = vadd.f32 %v400, %v459
    %v461 = vpop.f32.mrf.mxu0
    %462 = vdwg.mxu0
    %vm463 = vcmask 74752
    %464 = vst.msk [vmem:[#allocation2] sm:$0x3] %vm463, %v460
    // Predicated region
    $region30: #{net_forward.5} parent=1 // pred_check
      _
    $region31: #{net_forward.5} parent=1 // pred_check_branch
      %466 = sbr.rel (0) target = $region33
    $region32: #{net_forward.5} parent=1 // pred_region
      %468 = vsyncadd [#allocation3], 0
      %s470 = sshll.u32 [#allocation2], 4
      %s471 = int_to_ptr.vmem [resolvable:$true] %s470
      %s472 = sshll.u32 %s7, 4
      %s473 = int_to_ptr.hbm [resolvable:$true] %s472
      %475 = dma.vmem_to_hbm [thread:$0]  %s471, 32, %s473, [#allocation3]
    $region33: #{net_forward.5} parent=1 // pred_fallthru
      _
    // Predicated region
    $region34: #{net_forward.5} parent=1 // pred_check
      _
    $region35: #{net_forward.5} parent=1 // pred_check_branch
      %477 = sbr.rel (0) target = $region37
    $region36: #{net_forward.5} parent=1 // pred_region
      %479 = dma.done [#allocation3], 32
    $region37: #{net_forward.5} parent=1 // pred_fallthru
      _
    %480 = vsyncpa [#allocation3], 1

</llo_original>
